<compile_context>
chip_gen: v7x
topology: tpu7x:2x2x1
jax: 0.10.0
libtpu: 0.0.40
codegen_flags: <defaults>
</compile_context>

<pallas_src>
import functools
import inspect

import jax
import jax.numpy as jnp
import numpy as np
from jax.experimental import pallas as pl
from jax.experimental.pallas import tpu as pltpu

EPS = 1e-5
LANES = 128

# pipeline_mode=pl.Buffered(1) (single-buffer resident operands) if available.
try:
    _BUFFERED_KW = (
        {"pipeline_mode": pl.Buffered(1)}
        if "pipeline_mode" in inspect.signature(pl.BlockSpec).parameters
        else {})
except Exception:  # pragma: no cover
    _BUFFERED_KW = {}


def _round_up(v, m):
    return ((v + m - 1) // m) * m


def _vmem_limit_bytes():
    """Generation-aware VMEM budget (~3/4 of physical, capped at 96 MiB)."""
    try:
        cap = int(pltpu.get_tpu_info().vmem_capacity_bytes)
    except Exception:
        cap = 64 * 1024 * 1024
    return int(min(cap * 3 // 4, 96 * 1024 * 1024))


def _resident_spec(shape):
    """Constant-index operand (weights / folded BN affine): DMA'd once, and
    single-buffered when the running JAX supports pipeline_mode."""
    return pl.BlockSpec(shape, lambda n, t: (0,) * len(shape), **_BUFFERED_KW)


def _conv_kernel(x_top_ref, x_mid_ref, x_bot_ref, w_ref, sc_ref, sh_ref,
                 y_ref, stats_ref, *, th, w_img, h_real, h_pad, apply_relu,
                 cdtype):
    """One (batch, row-strip) grid step:
       input affine(+ReLU) -> implicit zero padding (masks + output shifts) ->
       3x3 conv as ONE MXU matmul -> raw (pre-BN) output + BN partial stats."""
    t = pl.program_id(1)
    cin = x_mid_ref.shape[-1]
    cout = y_ref.shape[-1]
    m = th * w_img

    def prep(v):
        # fold the previous layer's BatchNorm (scale/shift) + ReLU into the
        # input path of this conv (f32 math on the VPU)
        v = v.astype(jnp.float32) * sc_ref[...] + sh_ref[...]
        return jnp.maximum(v, 0.0) if apply_relu else v

    # halo rows are clamped at the (padded) array border by the index_map;
    # zero them when they fall outside the real image (zero padding in H).
    top = prep(x_top_ref[...]) * jnp.where(t == 0, 0.0, 1.0)
    mid = prep(x_mid_ref[...])
    bot = prep(x_bot_ref[...]) * jnp.where((t + 1) * th >= h_real, 0.0, 1.0)

    rmask = None
    if h_pad != h_real:
        # mask the H-pad rows of the strip (keeps the last real row and the
        # BN statistics exact).
        rows = jax.lax.broadcasted_iota(jnp.int32, (th, 1, 1), 0) + t * th
        rmask = (rows < h_real).astype(jnp.float32)        # (th, 1, 1)
        mid = mid * rmask[None]

    x = jnp.concatenate([top, mid, bot], axis=1)[0].astype(cdtype)  # (th+2,W,Cin)

    # ky taps: lane-axis concat (leading-dim slices are free, lanes stay dense)
    xk = jnp.concatenate([x[0:th], x[1:th + 1], x[2:th + 2]], axis=-1)

    # ONE MXU matmul: (th*W, 3*Cin) x (3*Cin, 3*Cout), f32 accumulation.
    p = jnp.dot(xk.reshape(m, 3 * cin), w_ref[...],
                preferred_element_type=jnp.float32)
    p = p.reshape(th, w_img, 3 * cout)
    p0 = p[:, :, :cout]            # kx = 0 tap (needs input column w-1)
    p1 = p[:, :, cout:2 * cout]    # kx = 1 tap (center)
    p2 = p[:, :, 2 * cout:]        # kx = 2 tap (needs input column w+1)

    # out[:, w] = p0[:, w-1] + p1[:, w] + p2[:, w+1]  (zero-padded in W).
    # TODO(synk): the two +/-1 column shifts could be pltpu.roll (XLU slot)
    # instead of concat-relayouts once sublane rolls are guaranteed everywhere.
    zc = jnp.zeros((th, 1, cout), jnp.float32)
    out = (p1
           + jnp.concatenate([zc, p0[:, :w_img - 1, :]], axis=1)
           + jnp.concatenate([p2[:, 1:, :], zc], axis=1))            # (th,W,Cout)

    y_ref[...] = out.reshape(1, th, w_img, cout).astype(y_ref.dtype)

    # single-pass BN partial statistics (sum, sum of squares) over real rows
    out_stat = out if rmask is None else out * rmask
    out_stat = out_stat.reshape(m, cout)
    s1 = jnp.sum(out_stat, axis=0, keepdims=True)                    # (1, Cout)
    s2 = jnp.sum(out_stat * out_stat, axis=0, keepdims=True)         # (1, Cout)
    stats_ref[...] = jnp.concatenate([s1, s2], axis=0).reshape(1, 1, 2, cout)


def _conv_pass(x_nhwc, w_all, scale, shift, *, th, h_real, apply_relu, cdtype):
    """3x3 'same' conv over channel-padded NHWC input, gridded over (N, Hp//th).
    Returns the raw (pre-BN) output in `cdtype` and per-tile f32 BN stats."""
    N, Hp, W, Cin = x_nhwc.shape
    Cout = w_all.shape[-1] // 3
    nt = Hp // th

    kernel = functools.partial(_conv_kernel, th=th, w_img=W, h_real=h_real,
                               h_pad=Hp, apply_relu=apply_relu, cdtype=cdtype)
    raw, stats = pl.pallas_call(
        kernel,
        grid=(N, nt),
        in_specs=[
            # 1-row halo above / the strip itself / 1-row halo below
            # TODO(synk): fold the halos into one overlapping pl.Element window
            # to drop two of the three input DMAs per step.
            pl.BlockSpec((1, 1, W, Cin),
                         lambda n, t: (n, jnp.maximum(t * th - 1, 0), 0, 0)),
            pl.BlockSpec((1, th, W, Cin), lambda n, t: (n, t, 0, 0)),
            pl.BlockSpec((1, 1, W, Cin),
                         lambda n, t: (n, jnp.minimum((t + 1) * th, Hp - 1), 0, 0)),
            # resident operands (constant index_map, single-buffered if possible)
            _resident_spec((3 * Cin, 3 * Cout)),
            _resident_spec((1, Cin)),
            _resident_spec((1, Cin)),
        ],
        out_specs=(
            pl.BlockSpec((1, th, W, Cout), lambda n, t: (n, t, 0, 0)),
            pl.BlockSpec((1, 1, 2, Cout), lambda n, t: (n, t, 0, 0)),
        ),
        out_shape=(
            jax.ShapeDtypeStruct((N, Hp, W, Cout), cdtype),     # raw conv (pre-BN)
            jax.ShapeDtypeStruct((N, nt, 2, Cout), jnp.float32),  # per-tile stats
        ),
        compiler_params=pltpu.CompilerParams(
            dimension_semantics=("parallel", "parallel"),
            vmem_limit_bytes=_vmem_limit_bytes()),
    )(x_nhwc, x_nhwc, x_nhwc, w_all, scale, shift)
    return raw, stats


def _bn_affine(stats, gamma_p, beta_p, count):
    """Per-tile (sum, sum_sq) -> per-channel train-mode BN scale/shift."""
    tot = jnp.sum(stats, axis=(0, 1))                      # (2, Cp)
    mean = tot[0] / count
    var = jnp.maximum(tot[1] / count - mean * mean, 0.0)   # biased variance
    scale = gamma_p * jax.lax.rsqrt(var + EPS)
    shift = beta_p - mean * scale
    return scale.reshape(1, -1), shift.reshape(1, -1)


def _pack_w(w_hwio, cin_p, cout_p, dtype):
    """HWIO 3x3 weights -> (3*Cp_in, 3*Cp_out) so that the ky taps lie along K
    (matching the lane-concat) and the kx taps along N (3 lane blocks)."""
    _, _, cin, cout = w_hwio.shape
    w = jnp.pad(w_hwio, ((0, 0), (0, 0), (0, cin_p - cin), (0, cout_p - cout)))
    return jnp.transpose(w, (0, 2, 1, 3)).reshape(3 * cin_p, 3 * cout_p).astype(dtype)


@functools.partial(jax.jit, static_argnames=("compute_dtype", "row_tile"))
def double_conv_block(x_nchw, w1, b1, g1, be1, w2, b2, g2, be2, *,
                      compute_dtype=jnp.bfloat16, row_tile=None):
    """x_nchw: (N, Cin, H, W) f32; conv weights HWIO. Returns (N, Cout, H, W).
    b1/b2 are accepted for parity with the PyTorch module but cancel exactly
    under the train-mode BatchNorm mean subtraction, so they are unused."""
    del b1, b2
    N, Cin, H, W = x_nchw.shape
    Cout = w1.shape[-1]
    # TODO(synk): for the tiny-Cin UNet stem, pack the im2col K dim (9*Cin->128)
    # instead of padding Cin to 128 (saves ~9x MXU K on the first conv).
    Cpi = _round_up(Cin, LANES)        # lane-dense channel padding
    Cpo = _round_up(Cout, LANES)

    # Row-strip height: aim for a matmul M dimension (th*W) around 1024.
    if row_tile is None:
        row_tile = max(8, min(64, -(-1024 // max(W, 1))))
    th = min(int(row_tile), H)
    nt = (H + th - 1) // th
    Hp = nt * th                       # H padded; pad rows masked in-kernel
    count = N * H * W

    # TODO(synk): the NCHW<->NHWC boundary transposes could be absorbed by the
    # caller's native layout in a full UNet pipeline.
    x = jnp.transpose(x_nchw, (0, 2, 3, 1))
    x = jnp.pad(x, ((0, 0), (0, Hp - H), (0, 0), (0, Cpi - Cin)))
    x = x.astype(compute_dtype)

    w1f = _pack_w(w1, Cpi, Cpo, compute_dtype)
    w2f = _pack_w(w2, Cpo, Cpo, compute_dtype)

    g1p = jnp.pad(g1, (0, Cpo - Cout))
    be1p = jnp.pad(be1, (0, Cpo - Cout))
    g2p = jnp.pad(g2, (0, Cpo - Cout))
    be2p = jnp.pad(be2, (0, Cpo - Cout))

    ident_s = jnp.ones((1, Cpi), jnp.float32)
    ident_b = jnp.zeros((1, Cpi), jnp.float32)

    # conv1: raw (pre-BN) output (compute dtype) + per-tile f32 stats
    raw1, st1 = _conv_pass(x, w1f, ident_s, ident_b,
                           th=th, h_real=H, apply_relu=False, cdtype=compute_dtype)
    sc1, sh1 = _bn_affine(st1, g1p, be1p, count)

    # conv2 with BN1 + ReLU folded into its input path
    raw2, st2 = _conv_pass(raw1, w2f, sc1, sh1,
                           th=th, h_real=H, apply_relu=True, cdtype=compute_dtype)
    sc2, sh2 = _bn_affine(st2, g2p, be2p, count)

    # final BN2 + ReLU: elementwise, fuses in XLA with the slices / transpose
    y = jnp.maximum(
        raw2[:, :H].astype(jnp.float32) * sc2.reshape(1, 1, 1, Cpo)
        + sh2.reshape(1, 1, 1, Cpo), 0.0)
    return jnp.transpose(y[..., :Cout], (0, 3, 1, 2))


# ---------------- pure-JAX reference (mirrors PyTorch forward) ----------------
def _ref_double_conv(x_nchw, w1, b1, g1, be1, w2, b2, g2, be2):
    def conv(x, w_hwio, b):
        w_oihw = jnp.transpose(w_hwio, (3, 2, 0, 1))
        y = jax.lax.conv_general_dilated(
            x, w_oihw, window_strides=(1, 1), padding=((1, 1), (1, 1)),
            dimension_numbers=('NCHW', 'OIHW', 'NCHW'))
        return y + b[None, :, None, None]

    def bn_relu(y, g, be):
        mean = jnp.mean(y, axis=(0, 2, 3), keepdims=True)
        var = jnp.mean(jnp.square(y - mean), axis=(0, 2, 3), keepdims=True)
        yn = (y - mean) / jnp.sqrt(var + EPS)
        return jnp.maximum(yn * g[None, :, None, None] + be[None, :, None, None],
                           0.0)

    h = bn_relu(conv(x_nchw, w1, b1), g1, be1)
    return bn_relu(conv(h, w2, b2), g2, be2)


if __name__ == "__main__":
    # Small shapes: batch=2, ch_in=4, ch_out=8, spatial=16x16
    N, Cin, Cout, H, W = 2, 4, 8, 16, 16

    key = jax.random.PRNGKey(0)
    ks = jax.random.split(key, 9)
    x = jax.random.normal(ks[0], (N, Cin, H, W), jnp.float32)

    w1 = 0.2 * jax.random.normal(ks[1], (3, 3, Cin, Cout), jnp.float32)
    b1 = 0.1 * jax.random.normal(ks[2], (Cout,), jnp.float32)
    g1 = 1.0 + 0.1 * jax.random.normal(ks[3], (Cout,), jnp.float32)
    be1 = 0.1 * jax.random.normal(ks[4], (Cout,), jnp.float32)
    w2 = 0.2 * jax.random.normal(ks[5], (3, 3, Cout, Cout), jnp.float32)
    b2 = 0.1 * jax.random.normal(ks[6], (Cout,), jnp.float32)
    g2 = 1.0 + 0.1 * jax.random.normal(ks[7], (Cout,), jnp.float32)
    be2 = 0.1 * jax.random.normal(ks[8], (Cout,), jnp.float32)

    ref = _ref_double_conv(x, w1, b1, g1, be1, w2, b2, g2, be2)

    # f32 MXU operands + f32 intermediates: tight check against the reference.
    out_f32 = double_conv_block(x, w1, b1, g1, be1, w2, b2, g2, be2,
                                compute_dtype=jnp.float32)
    out_f32 = jax.block_until_ready(out_f32)
    np.testing.assert_allclose(np.asarray(out_f32), np.asarray(ref),
                               rtol=2e-3, atol=2e-3)

    # bf16 fast path (bf16 MXU operands and bf16 inter-pass intermediates,
    # f32 accumulation / statistics): looser tolerance.
    out_bf16 = double_conv_block(x, w1, b1, g1, be1, w2, b2, g2, be2,
                                 compute_dtype=jnp.bfloat16)
    out_bf16 = jax.block_until_ready(out_bf16)
    np.testing.assert_allclose(np.asarray(out_bf16), np.asarray(ref),
                               rtol=7e-2, atol=7e-2)

    assert out_f32.shape == (N, Cout, H, W)
    print("KERNEL_OK")
</pallas_src>

<mosaic_0001>
module attributes {stable_mosaic.version = 11 : i64} {
  func.func @_conv_kernel(%arg0: i32, %arg1: i32, %arg2: memref<1x1x16x128xf32, #tpu.memory_space<vmem>>, %arg3: memref<1x16x16x128xf32, #tpu.memory_space<vmem>>, %arg4: memref<1x1x16x128xf32, #tpu.memory_space<vmem>>, %arg5: memref<384x384xf32, #tpu.memory_space<vmem>>, %arg6: memref<1x128xf32, #tpu.memory_space<vmem>>, %arg7: memref<1x128xf32, #tpu.memory_space<vmem>>, %arg8: memref<1x16x16x128xf32, #tpu.memory_space<vmem>>, %arg9: memref<1x1x2x128xf32, #tpu.memory_space<vmem>>) attributes {dimension_semantics = [#tpu.dimension_semantics<parallel>, #tpu.dimension_semantics<parallel>], iteration_bounds = array<i64: 2, 1>, scalar_prefetch = 0 : i64, scratch_operands = 0 : i64, tpu.core_type = #tpu.core_type<tc>, window_params = [{transform_indices = @transform_0, window_bounds = array<i64: 1, 1, 16, 128>}, {transform_indices = @transform_1, window_bounds = array<i64: 1, 16, 16, 128>}, {transform_indices = @transform_2, window_bounds = array<i64: 1, 1, 16, 128>}, {pipeline_mode = #tpu.pipeline_mode<synchronous>, transform_indices = @transform_3, window_bounds = array<i64: 384, 384>}, {pipeline_mode = #tpu.pipeline_mode<synchronous>, transform_indices = @transform_4, window_bounds = array<i64: 1, 128>}, {pipeline_mode = #tpu.pipeline_mode<synchronous>, transform_indices = @transform_5, window_bounds = array<i64: 1, 128>}, {transform_indices = @transform_6, window_bounds = array<i64: 1, 16, 16, 128>}, {transform_indices = @transform_7, window_bounds = array<i64: 1, 1, 2, 128>}]} {
    %c0 = arith.constant 0 : index
    %c0_0 = arith.constant 0 : index
    %c0_1 = arith.constant 0 : index
    %c0_2 = arith.constant 0 : index
    %0 = vector.load %arg2[%c0, %c0_0, %c0_1, %c0_2] : memref<1x1x16x128xf32, #tpu.memory_space<vmem>>, vector<1x1x16x128xf32>
    %c0_3 = arith.constant 0 : index
    %c0_4 = arith.constant 0 : index
    %1 = vector.load %arg6[%c0_3, %c0_4] : memref<1x128xf32, #tpu.memory_space<vmem>>, vector<1x128xf32>
    %2 = vector.shape_cast %1 : vector<1x128xf32> to vector<1x1x1x128xf32>
    %3 = vector.broadcast %2 : vector<1x1x1x128xf32> to vector<1x1x16x128xf32>
    %4 = arith.mulf %0, %3 : vector<1x1x16x128xf32>
    %c0_5 = arith.constant 0 : index
    %c0_6 = arith.constant 0 : index
    %5 = vector.load %arg7[%c0_5, %c0_6] : memref<1x128xf32, #tpu.memory_space<vmem>>, vector<1x128xf32>
    %6 = vector.shape_cast %5 : vector<1x128xf32> to vector<1x1x1x128xf32>
    %7 = vector.broadcast %6 : vector<1x1x1x128xf32> to vector<1x1x16x128xf32>
    %8 = arith.addf %4, %7 : vector<1x1x16x128xf32>
    %c0_i32 = arith.constant 0 : i32
    %9 = arith.cmpi eq, %arg1, %c0_i32 : i32
    %cst = arith.constant 0.000000e+00 : f32
    %cst_7 = arith.constant 1.000000e+00 : f32
    %10 = arith.select %9, %cst, %cst_7 : f32
    %11 = vector.broadcast %10 : f32 to vector<1x1x16x128xf32>
    %12 = arith.mulf %8, %11 : vector<1x1x16x128xf32>
    %c0_8 = arith.constant 0 : index
    %c0_9 = arith.constant 0 : index
    %c0_10 = arith.constant 0 : index
    %c0_11 = arith.constant 0 : index
    %13 = vector.load %arg3[%c0_8, %c0_9, %c0_10, %c0_11] : memref<1x16x16x128xf32, #tpu.memory_space<vmem>>, vector<1x16x16x128xf32>
    %c0_12 = arith.constant 0 : index
    %c0_13 = arith.constant 0 : index
    %14 = vector.load %arg6[%c0_12, %c0_13] : memref<1x128xf32, #tpu.memory_space<vmem>>, vector<1x128xf32>
    %15 = vector.shape_cast %14 : vector<1x128xf32> to vector<1x1x1x128xf32>
    %16 = vector.broadcast %15 : vector<1x1x1x128xf32> to vector<1x16x16x128xf32>
    %17 = arith.mulf %13, %16 : vector<1x16x16x128xf32>
    %c0_14 = arith.constant 0 : index
    %c0_15 = arith.constant 0 : index
    %18 = vector.load %arg7[%c0_14, %c0_15] : memref<1x128xf32, #tpu.memory_space<vmem>>, vector<1x128xf32>
    %19 = vector.shape_cast %18 : vector<1x128xf32> to vector<1x1x1x128xf32>
    %20 = vector.broadcast %19 : vector<1x1x1x128xf32> to vector<1x16x16x128xf32>
    %21 = arith.addf %17, %20 : vector<1x16x16x128xf32>
    %c0_16 = arith.constant 0 : index
    %c0_17 = arith.constant 0 : index
    %c0_18 = arith.constant 0 : index
    %c0_19 = arith.constant 0 : index
    %22 = vector.load %arg4[%c0_16, %c0_17, %c0_18, %c0_19] : memref<1x1x16x128xf32, #tpu.memory_space<vmem>>, vector<1x1x16x128xf32>
    %c0_20 = arith.constant 0 : index
    %c0_21 = arith.constant 0 : index
    %23 = vector.load %arg6[%c0_20, %c0_21] : memref<1x128xf32, #tpu.memory_space<vmem>>, vector<1x128xf32>
    %24 = vector.shape_cast %23 : vector<1x128xf32> to vector<1x1x1x128xf32>
    %25 = vector.broadcast %24 : vector<1x1x1x128xf32> to vector<1x1x16x128xf32>
    %26 = arith.mulf %22, %25 : vector<1x1x16x128xf32>
    %c0_22 = arith.constant 0 : index
    %c0_23 = arith.constant 0 : index
    %27 = vector.load %arg7[%c0_22, %c0_23] : memref<1x128xf32, #tpu.memory_space<vmem>>, vector<1x128xf32>
    %28 = vector.shape_cast %27 : vector<1x128xf32> to vector<1x1x1x128xf32>
    %29 = vector.broadcast %28 : vector<1x1x1x128xf32> to vector<1x1x16x128xf32>
    %30 = arith.addf %26, %29 : vector<1x1x16x128xf32>
    %c1_i32 = arith.constant 1 : i32
    %31 = arith.addi %arg1, %c1_i32 : i32
    %c16_i32 = arith.constant 16 : i32
    %32 = arith.muli %31, %c16_i32 : i32
    %c16_i32_24 = arith.constant 16 : i32
    %33 = arith.cmpi sge, %32, %c16_i32_24 : i32
    %cst_25 = arith.constant 0.000000e+00 : f32
    %cst_26 = arith.constant 1.000000e+00 : f32
    %34 = arith.select %33, %cst_25, %cst_26 : f32
    %35 = vector.broadcast %34 : f32 to vector<1x1x16x128xf32>
    %36 = arith.mulf %30, %35 : vector<1x1x16x128xf32>
    %37 = tpu.concatenate %12, %21, %36 in 1 : vector<1x1x16x128xf32>, vector<1x16x16x128xf32>, vector<1x1x16x128xf32> -> vector<1x18x16x128xf32>
    %38 = vector.shape_cast %37 : vector<1x18x16x128xf32> to vector<18x16x128xf32>
    %39 = vector.extract_strided_slice %38 {offsets = [0, 0, 0], sizes = [16, 16, 128], strides = [1, 1, 1]} : vector<18x16x128xf32> to vector<16x16x128xf32>
    %40 = vector.extract_strided_slice %38 {offsets = [1, 0, 0], sizes = [16, 16, 128], strides = [1, 1, 1]} : vector<18x16x128xf32> to vector<16x16x128xf32>
    %41 = vector.extract_strided_slice %38 {offsets = [2, 0, 0], sizes = [16, 16, 128], strides = [1, 1, 1]} : vector<18x16x128xf32> to vector<16x16x128xf32>
    %42 = tpu.concatenate %39, %40, %41 in 2 : vector<16x16x128xf32>, vector<16x16x128xf32>, vector<16x16x128xf32> -> vector<16x16x384xf32>
    %43 = vector.shape_cast %42 : vector<16x16x384xf32> to vector<256x384xf32>
    %c0_27 = arith.constant 0 : index
    %c0_28 = arith.constant 0 : index
    %44 = vector.load %arg5[%c0_27, %c0_28] : memref<384x384xf32, #tpu.memory_space<vmem>>, vector<384x384xf32>
    %cst_29 = arith.constant dense<0.000000e+00> : vector<256x384xf32>
    %45 = tpu.matmul %43, %44, %cst_29 {dimension_numbers = #tpu.dot_dimension_numbers<[1], [0], [0], [1], [0, 0, 1, 1], [], []>} : vector<256x384xf32>, vector<384x384xf32>, vector<256x384xf32> -> vector<256x384xf32>
    %46 = vector.shape_cast %45 : vector<256x384xf32> to vector<16x16x384xf32>
    %47 = vector.extract_strided_slice %46 {offsets = [0, 0, 0], sizes = [16, 16, 128], strides = [1, 1, 1]} : vector<16x16x384xf32> to vector<16x16x128xf32>
    %48 = vector.extract_strided_slice %46 {offsets = [0, 0, 128], sizes = [16, 16, 128], strides = [1, 1, 1]} : vector<16x16x384xf32> to vector<16x16x128xf32>
    %49 = vector.extract_strided_slice %46 {offsets = [0, 0, 256], sizes = [16, 16, 128], strides = [1, 1, 1]} : vector<16x16x384xf32> to vector<16x16x128xf32>
    %cst_30 = arith.constant 0.000000e+00 : f32
    %50 = vector.broadcast %cst_30 : f32 to vector<16x1x128xf32>
    %51 = vector.extract_strided_slice %47 {offsets = [0, 0, 0], sizes = [16, 15, 128], strides = [1, 1, 1]} : vector<16x16x128xf32> to vector<16x15x128xf32>
    %52 = tpu.concatenate %50, %51 in 1 : vector<16x1x128xf32>, vector<16x15x128xf32> -> vector<16x16x128xf32>
    %53 = arith.addf %48, %52 : vector<16x16x128xf32>
    %54 = vector.extract_strided_slice %49 {offsets = [0, 1, 0], sizes = [16, 15, 128], strides = [1, 1, 1]} : vector<16x16x128xf32> to vector<16x15x128xf32>
    %55 = tpu.concatenate %54, %50 in 1 : vector<16x15x128xf32>, vector<16x1x128xf32> -> vector<16x16x128xf32>
    %56 = arith.addf %53, %55 : vector<16x16x128xf32>
    %57 = vector.shape_cast %56 : vector<16x16x128xf32> to vector<1x16x16x128xf32>
    %c0_31 = arith.constant 0 : index
    %c0_32 = arith.constant 0 : index
    %c0_33 = arith.constant 0 : index
    %c0_34 = arith.constant 0 : index
    %58 = vector.load %arg8[%c0_31, %c0_32, %c0_33, %c0_34] : memref<1x16x16x128xf32, #tpu.memory_space<vmem>>, vector<1x16x16x128xf32>
    tpu.vector_store %arg8[%c0_31, %c0_32, %c0_33, %c0_34], %57 {strides = array<i32>} : memref<1x16x16x128xf32, #tpu.memory_space<vmem>>, vector<1x16x16x128xf32>,
    %59 = vector.shape_cast %56 : vector<16x16x128xf32> to vector<256x128xf32>
    %cst_35 = arith.constant dense<0.000000e+00> : vector<128xf32>
    %60 = vector.multi_reduction <add>, %59, %cst_35 [0] : vector<256x128xf32> to vector<128xf32>
    %61 = vector.shape_cast %60 : vector<128xf32> to vector<1x128xf32>
    %62 = arith.mulf %59, %59 : vector<256x128xf32>
    %cst_36 = arith.constant dense<0.000000e+00> : vector<128xf32>
    %63 = vector.multi_reduction <add>, %62, %cst_36 [0] : vector<256x128xf32> to vector<128xf32>
    %64 = vector.shape_cast %63 : vector<128xf32> to vector<1x128xf32>
    %65 = tpu.concatenate %61, %64 in 0 : vector<1x128xf32>, vector<1x128xf32> -> vector<2x128xf32>
    %66 = vector.shape_cast %65 : vector<2x128xf32> to vector<1x1x2x128xf32>
    %c0_37 = arith.constant 0 : index
    %c0_38 = arith.constant 0 : index
    %c0_39 = arith.constant 0 : index
    %c0_40 = arith.constant 0 : index
    %67 = vector.load %arg9[%c0_37, %c0_38, %c0_39, %c0_40] : memref<1x1x2x128xf32, #tpu.memory_space<vmem>>, vector<1x1x2x128xf32>
    tpu.vector_store %arg9[%c0_37, %c0_38, %c0_39, %c0_40], %66 {strides = array<i32>} : memref<1x1x2x128xf32, #tpu.memory_space<vmem>>, vector<1x1x2x128xf32>,
    return
  }
  func.func @transform_0(%arg0: i32, %arg1: i32) -> (i32, i32, i32, i32) {
    %c16_i32 = arith.constant 16 : i32
    %0 = arith.muli %arg1, %c16_i32 : i32
    %c1_i32 = arith.constant 1 : i32
    %1 = arith.subi %0, %c1_i32 : i32
    %c0_i32 = arith.constant 0 : i32
    %2 = arith.maxsi %1, %c0_i32 : i32
    %c0_i32_0 = arith.constant 0 : i32
    %c0_i32_1 = arith.constant 0 : i32
    %c0_i32_2 = arith.constant 0 : i32
    return %arg0, %2, %c0_i32_0, %c0_i32_1 : i32, i32, i32, i32
  }
  func.func @transform_1(%arg0: i32, %arg1: i32) -> (i32, i32, i32, i32) {
    %c0_i32 = arith.constant 0 : i32
    %c0_i32_0 = arith.constant 0 : i32
    %c0_i32_1 = arith.constant 0 : i32
    return %arg0, %arg1, %c0_i32, %c0_i32_0 : i32, i32, i32, i32
  }
  func.func @transform_2(%arg0: i32, %arg1: i32) -> (i32, i32, i32, i32) {
    %c1_i32 = arith.constant 1 : i32
    %0 = arith.addi %arg1, %c1_i32 : i32
    %c16_i32 = arith.constant 16 : i32
    %1 = arith.muli %0, %c16_i32 : i32
    %c15_i32 = arith.constant 15 : i32
    %2 = arith.minsi %1, %c15_i32 : i32
    %c0_i32 = arith.constant 0 : i32
    %c0_i32_0 = arith.constant 0 : i32
    %c0_i32_1 = arith.constant 0 : i32
    return %arg0, %2, %c0_i32, %c0_i32_0 : i32, i32, i32, i32
  }
  func.func @transform_3(%arg0: i32, %arg1: i32) -> (i32, i32) {
    %c0_i32 = arith.constant 0 : i32
    %c0_i32_0 = arith.constant 0 : i32
    %c0_i32_1 = arith.constant 0 : i32
    return %c0_i32, %c0_i32_0 : i32, i32
  }
  func.func @transform_4(%arg0: i32, %arg1: i32) -> (i32, i32) {
    %c0_i32 = arith.constant 0 : i32
    %c0_i32_0 = arith.constant 0 : i32
    %c0_i32_1 = arith.constant 0 : i32
    return %c0_i32, %c0_i32_0 : i32, i32
  }
  func.func @transform_5(%arg0: i32, %arg1: i32) -> (i32, i32) {
    %c0_i32 = arith.constant 0 : i32
    %c0_i32_0 = arith.constant 0 : i32
    %c0_i32_1 = arith.constant 0 : i32
    return %c0_i32, %c0_i32_0 : i32, i32
  }
  func.func @transform_6(%arg0: i32, %arg1: i32) -> (i32, i32, i32, i32) {
    %c0_i32 = arith.constant 0 : i32
    %c0_i32_0 = arith.constant 0 : i32
    %c0_i32_1 = arith.constant 0 : i32
    return %arg0, %arg1, %c0_i32, %c0_i32_0 : i32, i32, i32, i32
  }
  func.func @transform_7(%arg0: i32, %arg1: i32) -> (i32, i32, i32, i32) {
    %c0_i32 = arith.constant 0 : i32
    %c0_i32_0 = arith.constant 0 : i32
    %c0_i32_1 = arith.constant 0 : i32
    return %arg0, %arg1, %c0_i32, %c0_i32_0 : i32, i32, i32, i32
  }
}

module attributes {stable_mosaic.version = 11 : i64} {
  func.func @_conv_kernel(%arg0: i32, %arg1: i32, %arg2: memref<1x1x16x128xf32, #tpu.memory_space<vmem>>, %arg3: memref<1x16x16x128xf32, #tpu.memory_space<vmem>>, %arg4: memref<1x1x16x128xf32, #tpu.memory_space<vmem>>, %arg5: memref<384x384xf32, #tpu.memory_space<vmem>>, %arg6: memref<1x128xf32, #tpu.memory_space<vmem>>, %arg7: memref<1x128xf32, #tpu.memory_space<vmem>>, %arg8: memref<1x16x16x128xf32, #tpu.memory_space<vmem>>, %arg9: memref<1x1x2x128xf32, #tpu.memory_space<vmem>>) attributes {dimension_semantics = [#tpu.dimension_semantics<parallel>, #tpu.dimension_semantics<parallel>], iteration_bounds = array<i64: 2, 1>, scalar_prefetch = 0 : i64, scratch_operands = 0 : i64, tpu.core_type = #tpu.core_type<tc>, window_params = [{transform_indices = @transform_0, window_bounds = array<i64: 1, 1, 16, 128>}, {transform_indices = @transform_1, window_bounds = array<i64: 1, 16, 16, 128>}, {transform_indices = @transform_2, window_bounds = array<i64: 1, 1, 16, 128>}, {pipeline_mode = #tpu.pipeline_mode<synchronous>, transform_indices = @transform_3, window_bounds = array<i64: 384, 384>}, {pipeline_mode = #tpu.pipeline_mode<synchronous>, transform_indices = @transform_4, window_bounds = array<i64: 1, 128>}, {pipeline_mode = #tpu.pipeline_mode<synchronous>, transform_indices = @transform_5, window_bounds = array<i64: 1, 128>}, {transform_indices = @transform_6, window_bounds = array<i64: 1, 16, 16, 128>}, {transform_indices = @transform_7, window_bounds = array<i64: 1, 1, 2, 128>}]} {
    %c0 = arith.constant 0 : index
    %c0_0 = arith.constant 0 : index
    %c0_1 = arith.constant 0 : index
    %c0_2 = arith.constant 0 : index
    %0 = vector.load %arg2[%c0, %c0_0, %c0_1, %c0_2] : memref<1x1x16x128xf32, #tpu.memory_space<vmem>>, vector<1x1x16x128xf32>
    %c0_3 = arith.constant 0 : index
    %c0_4 = arith.constant 0 : index
    %1 = vector.load %arg6[%c0_3, %c0_4] : memref<1x128xf32, #tpu.memory_space<vmem>>, vector<1x128xf32>
    %2 = vector.shape_cast %1 : vector<1x128xf32> to vector<1x1x1x128xf32>
    %3 = vector.broadcast %2 : vector<1x1x1x128xf32> to vector<1x1x16x128xf32>
    %4 = arith.mulf %0, %3 : vector<1x1x16x128xf32>
    %c0_5 = arith.constant 0 : index
    %c0_6 = arith.constant 0 : index
    %5 = vector.load %arg7[%c0_5, %c0_6] : memref<1x128xf32, #tpu.memory_space<vmem>>, vector<1x128xf32>
    %6 = vector.shape_cast %5 : vector<1x128xf32> to vector<1x1x1x128xf32>
    %7 = vector.broadcast %6 : vector<1x1x1x128xf32> to vector<1x1x16x128xf32>
    %8 = arith.addf %4, %7 : vector<1x1x16x128xf32>
    %cst = arith.constant 0.000000e+00 : f32
    %9 = vector.broadcast %cst : f32 to vector<1x1x16x128xf32>
    %10 = arith.maximumf %8, %9 : vector<1x1x16x128xf32>
    %c0_i32 = arith.constant 0 : i32
    %11 = arith.cmpi eq, %arg1, %c0_i32 : i32
    %cst_7 = arith.constant 0.000000e+00 : f32
    %cst_8 = arith.constant 1.000000e+00 : f32
    %12 = arith.select %11, %cst_7, %cst_8 : f32
    %13 = vector.broadcast %12 : f32 to vector<1x1x16x128xf32>
    %14 = arith.mulf %10, %13 : vector<1x1x16x128xf32>
    %c0_9 = arith.constant 0 : index
    %c0_10 = arith.constant 0 : index
    %c0_11 = arith.constant 0 : index
    %c0_12 = arith.constant 0 : index
    %15 = vector.load %arg3[%c0_9, %c0_10, %c0_11, %c0_12] : memref<1x16x16x128xf32, #tpu.memory_space<vmem>>, vector<1x16x16x128xf32>
    %c0_13 = arith.constant 0 : index
    %c0_14 = arith.constant 0 : index
    %16 = vector.load %arg6[%c0_13, %c0_14] : memref<1x128xf32, #tpu.memory_space<vmem>>, vector<1x128xf32>
    %17 = vector.shape_cast %16 : vector<1x128xf32> to vector<1x1x1x128xf32>
    %18 = vector.broadcast %17 : vector<1x1x1x128xf32> to vector<1x16x16x128xf32>
    %19 = arith.mulf %15, %18 : vector<1x16x16x128xf32>
    %c0_15 = arith.constant 0 : index
    %c0_16 = arith.constant 0 : index
    %20 = vector.load %arg7[%c0_15, %c0_16] : memref<1x128xf32, #tpu.memory_space<vmem>>, vector<1x128xf32>
    %21 = vector.shape_cast %20 : vector<1x128xf32> to vector<1x1x1x128xf32>
    %22 = vector.broadcast %21 : vector<1x1x1x128xf32> to vector<1x16x16x128xf32>
    %23 = arith.addf %19, %22 : vector<1x16x16x128xf32>
    %cst_17 = arith.constant 0.000000e+00 : f32
    %24 = vector.broadcast %cst_17 : f32 to vector<1x16x16x128xf32>
    %25 = arith.maximumf %23, %24 : vector<1x16x16x128xf32>
    %c0_18 = arith.constant 0 : index
    %c0_19 = arith.constant 0 : index
    %c0_20 = arith.constant 0 : index
    %c0_21 = arith.constant 0 : index
    %26 = vector.load %arg4[%c0_18, %c0_19, %c0_20, %c0_21] : memref<1x1x16x128xf32, #tpu.memory_space<vmem>>, vector<1x1x16x128xf32>
    %c0_22 = arith.constant 0 : index
    %c0_23 = arith.constant 0 : index
    %27 = vector.load %arg6[%c0_22, %c0_23] : memref<1x128xf32, #tpu.memory_space<vmem>>, vector<1x128xf32>
    %28 = vector.shape_cast %27 : vector<1x128xf32> to vector<1x1x1x128xf32>
    %29 = vector.broadcast %28 : vector<1x1x1x128xf32> to vector<1x1x16x128xf32>
    %30 = arith.mulf %26, %29 : vector<1x1x16x128xf32>
    %c0_24 = arith.constant 0 : index
    %c0_25 = arith.constant 0 : index
    %31 = vector.load %arg7[%c0_24, %c0_25] : memref<1x128xf32, #tpu.memory_space<vmem>>, vector<1x128xf32>
    %32 = vector.shape_cast %31 : vector<1x128xf32> to vector<1x1x1x128xf32>
    %33 = vector.broadcast %32 : vector<1x1x1x128xf32> to vector<1x1x16x128xf32>
    %34 = arith.addf %30, %33 : vector<1x1x16x128xf32>
    %cst_26 = arith.constant 0.000000e+00 : f32
    %35 = vector.broadcast %cst_26 : f32 to vector<1x1x16x128xf32>
    %36 = arith.maximumf %34, %35 : vector<1x1x16x128xf32>
    %c1_i32 = arith.constant 1 : i32
    %37 = arith.addi %arg1, %c1_i32 : i32
    %c16_i32 = arith.constant 16 : i32
    %38 = arith.muli %37, %c16_i32 : i32
    %c16_i32_27 = arith.constant 16 : i32
    %39 = arith.cmpi sge, %38, %c16_i32_27 : i32
    %cst_28 = arith.constant 0.000000e+00 : f32
    %cst_29 = arith.constant 1.000000e+00 : f32
    %40 = arith.select %39, %cst_28, %cst_29 : f32
    %41 = vector.broadcast %40 : f32 to vector<1x1x16x128xf32>
    %42 = arith.mulf %36, %41 : vector<1x1x16x128xf32>
    %43 = tpu.concatenate %14, %25, %42 in 1 : vector<1x1x16x128xf32>, vector<1x16x16x128xf32>, vector<1x1x16x128xf32> -> vector<1x18x16x128xf32>
    %44 = vector.shape_cast %43 : vector<1x18x16x128xf32> to vector<18x16x128xf32>
    %45 = vector.extract_strided_slice %44 {offsets = [0, 0, 0], sizes = [16, 16, 128], strides = [1, 1, 1]} : vector<18x16x128xf32> to vector<16x16x128xf32>
    %46 = vector.extract_strided_slice %44 {offsets = [1, 0, 0], sizes = [16, 16, 128], strides = [1, 1, 1]} : vector<18x16x128xf32> to vector<16x16x128xf32>
    %47 = vector.extract_strided_slice %44 {offsets = [2, 0, 0], sizes = [16, 16, 128], strides = [1, 1, 1]} : vector<18x16x128xf32> to vector<16x16x128xf32>
    %48 = tpu.concatenate %45, %46, %47 in 2 : vector<16x16x128xf32>, vector<16x16x128xf32>, vector<16x16x128xf32> -> vector<16x16x384xf32>
    %49 = vector.shape_cast %48 : vector<16x16x384xf32> to vector<256x384xf32>
    %c0_30 = arith.constant 0 : index
    %c0_31 = arith.constant 0 : index
    %50 = vector.load %arg5[%c0_30, %c0_31] : memref<384x384xf32, #tpu.memory_space<vmem>>, vector<384x384xf32>
    %cst_32 = arith.constant dense<0.000000e+00> : vector<256x384xf32>
    %51 = tpu.matmul %49, %50, %cst_32 {dimension_numbers = #tpu.dot_dimension_numbers<[1], [0], [0], [1], [0, 0, 1, 1], [], []>} : vector<256x384xf32>, vector<384x384xf32>, vector<256x384xf32> -> vector<256x384xf32>
    %52 = vector.shape_cast %51 : vector<256x384xf32> to vector<16x16x384xf32>
    %53 = vector.extract_strided_slice %52 {offsets = [0, 0, 0], sizes = [16, 16, 128], strides = [1, 1, 1]} : vector<16x16x384xf32> to vector<16x16x128xf32>
    %54 = vector.extract_strided_slice %52 {offsets = [0, 0, 128], sizes = [16, 16, 128], strides = [1, 1, 1]} : vector<16x16x384xf32> to vector<16x16x128xf32>
    %55 = vector.extract_strided_slice %52 {offsets = [0, 0, 256], sizes = [16, 16, 128], strides = [1, 1, 1]} : vector<16x16x384xf32> to vector<16x16x128xf32>
    %cst_33 = arith.constant 0.000000e+00 : f32
    %56 = vector.broadcast %cst_33 : f32 to vector<16x1x128xf32>
    %57 = vector.extract_strided_slice %53 {offsets = [0, 0, 0], sizes = [16, 15, 128], strides = [1, 1, 1]} : vector<16x16x128xf32> to vector<16x15x128xf32>
    %58 = tpu.concatenate %56, %57 in 1 : vector<16x1x128xf32>, vector<16x15x128xf32> -> vector<16x16x128xf32>
    %59 = arith.addf %54, %58 : vector<16x16x128xf32>
    %60 = vector.extract_strided_slice %55 {offsets = [0, 1, 0], sizes = [16, 15, 128], strides = [1, 1, 1]} : vector<16x16x128xf32> to vector<16x15x128xf32>
    %61 = tpu.concatenate %60, %56 in 1 : vector<16x15x128xf32>, vector<16x1x128xf32> -> vector<16x16x128xf32>
    %62 = arith.addf %59, %61 : vector<16x16x128xf32>
    %63 = vector.shape_cast %62 : vector<16x16x128xf32> to vector<1x16x16x128xf32>
    %c0_34 = arith.constant 0 : index
    %c0_35 = arith.constant 0 : index
    %c0_36 = arith.constant 0 : index
    %c0_37 = arith.constant 0 : index
    %64 = vector.load %arg8[%c0_34, %c0_35, %c0_36, %c0_37] : memref<1x16x16x128xf32, #tpu.memory_space<vmem>>, vector<1x16x16x128xf32>
    tpu.vector_store %arg8[%c0_34, %c0_35, %c0_36, %c0_37], %63 {strides = array<i32>} : memref<1x16x16x128xf32, #tpu.memory_space<vmem>>, vector<1x16x16x128xf32>,
    %65 = vector.shape_cast %62 : vector<16x16x128xf32> to vector<256x128xf32>
    %cst_38 = arith.constant dense<0.000000e+00> : vector<128xf32>
    %66 = vector.multi_reduction <add>, %65, %cst_38 [0] : vector<256x128xf32> to vector<128xf32>
    %67 = vector.shape_cast %66 : vector<128xf32> to vector<1x128xf32>
    %68 = arith.mulf %65, %65 : vector<256x128xf32>
    %cst_39 = arith.constant dense<0.000000e+00> : vector<128xf32>
    %69 = vector.multi_reduction <add>, %68, %cst_39 [0] : vector<256x128xf32> to vector<128xf32>
    %70 = vector.shape_cast %69 : vector<128xf32> to vector<1x128xf32>
    %71 = tpu.concatenate %67, %70 in 0 : vector<1x128xf32>, vector<1x128xf32> -> vector<2x128xf32>
    %72 = vector.shape_cast %71 : vector<2x128xf32> to vector<1x1x2x128xf32>
    %c0_40 = arith.constant 0 : index
    %c0_41 = arith.constant 0 : index
    %c0_42 = arith.constant 0 : index
    %c0_43 = arith.constant 0 : index
    %73 = vector.load %arg9[%c0_40, %c0_41, %c0_42, %c0_43] : memref<1x1x2x128xf32, #tpu.memory_space<vmem>>, vector<1x1x2x128xf32>
    tpu.vector_store %arg9[%c0_40, %c0_41, %c0_42, %c0_43], %72 {strides = array<i32>} : memref<1x1x2x128xf32, #tpu.memory_space<vmem>>, vector<1x1x2x128xf32>,
    return
  }
  func.func @transform_0(%arg0: i32, %arg1: i32) -> (i32, i32, i32, i32) {
    %c16_i32 = arith.constant 16 : i32
    %0 = arith.muli %arg1, %c16_i32 : i32
    %c1_i32 = arith.constant 1 : i32
    %1 = arith.subi %0, %c1_i32 : i32
    %c0_i32 = arith.constant 0 : i32
    %2 = arith.maxsi %1, %c0_i32 : i32
    %c0_i32_0 = arith.constant 0 : i32
    %c0_i32_1 = arith.constant 0 : i32
    %c0_i32_2 = arith.constant 0 : i32
    return %arg0, %2, %c0_i32_0, %c0_i32_1 : i32, i32, i32, i32
  }
  func.func @transform_1(%arg0: i32, %arg1: i32) -> (i32, i32, i32, i32) {
    %c0_i32 = arith.constant 0 : i32
    %c0_i32_0 = arith.constant 0 : i32
    %c0_i32_1 = arith.constant 0 : i32
    return %arg0, %arg1, %c0_i32, %c0_i32_0 : i32, i32, i32, i32
  }
  func.func @transform_2(%arg0: i32, %arg1: i32) -> (i32, i32, i32, i32) {
    %c1_i32 = arith.constant 1 : i32
    %0 = arith.addi %arg1, %c1_i32 : i32
    %c16_i32 = arith.constant 16 : i32
    %1 = arith.muli %0, %c16_i32 : i32
    %c15_i32 = arith.constant 15 : i32
    %2 = arith.minsi %1, %c15_i32 : i32
    %c0_i32 = arith.constant 0 : i32
    %c0_i32_0 = arith.constant 0 : i32
    %c0_i32_1 = arith.constant 0 : i32
    return %arg0, %2, %c0_i32, %c0_i32_0 : i32, i32, i32, i32
  }
  func.func @transform_3(%arg0: i32, %arg1: i32) -> (i32, i32) {
    %c0_i32 = arith.constant 0 : i32
    %c0_i32_0 = arith.constant 0 : i32
    %c0_i32_1 = arith.constant 0 : i32
    return %c0_i32, %c0_i32_0 : i32, i32
  }
  func.func @transform_4(%arg0: i32, %arg1: i32) -> (i32, i32) {
    %c0_i32 = arith.constant 0 : i32
    %c0_i32_0 = arith.constant 0 : i32
    %c0_i32_1 = arith.constant 0 : i32
    return %c0_i32, %c0_i32_0 : i32, i32
  }
  func.func @transform_5(%arg0: i32, %arg1: i32) -> (i32, i32) {
    %c0_i32 = arith.constant 0 : i32
    %c0_i32_0 = arith.constant 0 : i32
    %c0_i32_1 = arith.constant 0 : i32
    return %c0_i32, %c0_i32_0 : i32, i32
  }
  func.func @transform_6(%arg0: i32, %arg1: i32) -> (i32, i32, i32, i32) {
    %c0_i32 = arith.constant 0 : i32
    %c0_i32_0 = arith.constant 0 : i32
    %c0_i32_1 = arith.constant 0 : i32
    return %arg0, %arg1, %c0_i32, %c0_i32_0 : i32, i32, i32, i32
  }
  func.func @transform_7(%arg0: i32, %arg1: i32) -> (i32, i32, i32, i32) {
    %c0_i32 = arith.constant 0 : i32
    %c0_i32_0 = arith.constant 0 : i32
    %c0_i32_1 = arith.constant 0 : i32
    return %arg0, %arg1, %c0_i32, %c0_i32_0 : i32, i32, i32, i32
  }
}

</mosaic_0001>

<llo_original>
// kernel: double_conv_block.2
$region0: #{double_conv_block.2}
  #allocation0 [shape = 'u32[]', space=smem, size = 0x4, offset = 0x4, fixed_abs, tag = 'smem constant byte address 0x4 - core index']
  #allocation1 [shape = 'u32[144,128]{1,0:T(1,128)}', space=vmem, size = 0x12000, scoped, tag = 'internal scratch']
  %s0 = inlined_call_operand.vmem [shape: f32[2,16,16,128], index: 0, kind: input, shape index: {}, may-alias: {0,1,2}]
  %s1 = inlined_call_operand.vmem [shape: f32[2,16,16,128], index: 1, kind: input, shape index: {}, may-alias: {0,1,2}]
  %s2 = inlined_call_operand.vmem [shape: f32[2,16,16,128], index: 2, kind: input, shape index: {}, may-alias: {0,1,2}]
  %s3 = inlined_call_operand.vmem [shape: f32[384,384], index: 3, kind: input, shape index: {}]
  %s4 = inlined_call_operand.vmem [shape: f32[1,128], index: 4, kind: input, shape index: {}]
  %s5 = inlined_call_operand.vmem [shape: f32[1,128], index: 5, kind: input, shape index: {}]
  %s6 = inlined_call_operand.vmem [shape: f32[2,16,16,128], index: 6, kind: output, shape index: {0}]
  %s7 = inlined_call_operand.vmem [shape: f32[2,1,2,128], index: 7, kind: output, shape index: {1}]
  %8 = xla_tuple %s6, %s7
  %s9 = sld [smem:[#allocation0]]
  $region65: #{double_conv_block.2} parent=0
    _
  %s11 = ssub.s32 1, %s9
  %s12 = scalar_select 0, %s11, %s9
  loop: start=0, step=1, limit=4
  $region2: #{double_conv_block.2} parent=0 // loop_pre_header
    _
  $region3: #{double_conv_block.2} parent=0 // loop_header
    %s14 = sphi 0, %s18
    %p15 = scmp.ge.s32.totalorder %s14, 4
    %s21 = sphi 0, %s33
    %s22 = sphi 0, %s29
    %s23 = sphi 0, %s21
    %s24 = sphi 0, %s22
    %s25 = sphi 0, %s23
    %s26 = sphi 0, %s24
    %s46 = sphi 0, %s48
    %s49 = sphi 0, %s46
    %s50 = sphi 0, %s49
    %s66 = sphi 0, %s50
    %s74 = sphi 0, %s76
    %s77 = sphi 0, %s74
    %s78 = sphi 0, %s77
    %s94 = sphi 0, %s78
    %s110 = sphi 0, %s112
    %s113 = sphi 0, %s110
    %s114 = sphi 0, %s113
    %s130 = sphi 0, %s114
    %s134 = sphi 0, %s134
    %s136 = sphi 0, %s134
    %s137 = sphi 0, %s136
    %s151 = sphi 0, %s137
    %s155 = sphi 0, %s155
    %s157 = sphi 0, %s155
    %s158 = sphi 0, %s157
    %s172 = sphi 0, %s158
    %s176 = sphi 0, %s176
    %s178 = sphi 0, %s176
    %s179 = sphi 0, %s178
    %s193 = sphi 0, %s179
    %s201 = sphi 0, %s203
    %s204 = sphi 0, %s201
    %s205 = sphi 0, %s204
    %s221 = sphi 0, %s205
    %s229 = sphi 0, %s231
    %s232 = sphi 0, %s229
    %s233 = sphi 0, %s232
    %s249 = sphi 0, %s233
  $region4: #{double_conv_block.2} parent=0 // loop_header_branch
    %17 = sbr.rel (%p15) target = $region8
  $region5: #{double_conv_block.2} parent=0 // loop_body
    %s19 = ssub.s32 %s14, 1
    %s20 = ssub.s32 %s14, 2
    %s27 = sadd.s32 1, %s22
    %p28 = scmp.ge.s32.totalorder %s27, 1
    %s29 = scalar_select %p28, 0, %s27
    %s30 = sadd.s32 1, %s21
    %s31 = scalar_select %p28, %s30, %s21
    %p32 = scmp.ge.s32.totalorder %s31, 2
    %s33 = scalar_select %p32, 0, %s31
    %s34 = smul.u32 %s22, 16
    %s35 = ssub.s32 %s34, 1
    %p36 = scmp.gt.s32.totalorder %s35, 0
    %s37 = scalar_select %p36, %s35, 0
    %s38 = smul.u32 %s29, 16
    %s39 = ssub.s32 %s38, 1
    %p40 = scmp.gt.s32.totalorder %s39, 0
    %s41 = scalar_select %p40, %s39, 0
    %s42 = ssub.s32 %s21, %s33
    %s43 = ssub.s32 %s37, %s41
    %s44 = sor.u32 %s42, %s43
    %p45 = scmp.eq.s32.totalorder %s44, 0
    %s47 = sadd.s32 %s46, 1
    %s48 = scalar_select %p45, %s46, %s47
    %p51 = pneg %p45
    %p52 = scmp.eq.s32.totalorder %s14, 1
    %p53 = por %p51, %p52
    %p54 = scmp.ne.s32.totalorder %s46, %s49
    %p55 = scmp.eq.s32.totalorder %s14, 0
    %p56 = por %p54, %p55
    %p57 = scmp.ne.s32.totalorder %s46, %s49
    %p58 = scmp.eq.s32.totalorder %s19, 1
    %p59 = por %p57, %p58
    %p60 = scmp.ne.s32.totalorder %s49, %s50
    %p61 = scmp.eq.s32.totalorder %s19, 0
    %p62 = por %p60, %p61
    %p63 = scmp.ne.s32.totalorder %s49, %s50
    %p64 = scmp.eq.s32.totalorder %s20, 1
    %p65 = por %p63, %p64
    %p67 = scmp.ne.s32.totalorder %s50, %s66
    %p68 = scmp.eq.s32.totalorder %s20, 0
    %p69 = por %p67, %p68
    %s70 = ssub.s32 %s21, %s33
    %s71 = ssub.s32 %s22, %s29
    %s72 = sor.u32 %s70, %s71
    %p73 = scmp.eq.s32.totalorder %s72, 0
    %s75 = sadd.s32 %s74, 1
    %s76 = scalar_select %p73, %s74, %s75
    %p79 = pneg %p73
    %p80 = scmp.eq.s32.totalorder %s14, 1
    %p81 = por %p79, %p80
    %p82 = scmp.ne.s32.totalorder %s74, %s77
    %p83 = scmp.eq.s32.totalorder %s14, 0
    %p84 = por %p82, %p83
    %p85 = scmp.ne.s32.totalorder %s74, %s77
    %p86 = scmp.eq.s32.totalorder %s19, 1
    %p87 = por %p85, %p86
    %p88 = scmp.ne.s32.totalorder %s77, %s78
    %p89 = scmp.eq.s32.totalorder %s19, 0
    %p90 = por %p88, %p89
    %p91 = scmp.ne.s32.totalorder %s77, %s78
    %p92 = scmp.eq.s32.totalorder %s20, 1
    %p93 = por %p91, %p92
    %p95 = scmp.ne.s32.totalorder %s78, %s94
    %p96 = scmp.eq.s32.totalorder %s20, 0
    %p97 = por %p95, %p96
    %s98 = sadd.s32 %s22, 1
    %s99 = smul.u32 %s98, 16
    %p100 = scmp.lt.s32.totalorder %s99, 15
    %s101 = scalar_select %p100, %s99, 15
    %s102 = sadd.s32 %s29, 1
    %s103 = smul.u32 %s102, 16
    %p104 = scmp.lt.s32.totalorder %s103, 15
    %s105 = scalar_select %p104, %s103, 15
    %s106 = ssub.s32 %s21, %s33
    %s107 = ssub.s32 %s101, %s105
    %s108 = sor.u32 %s106, %s107
    %p109 = scmp.eq.s32.totalorder %s108, 0
    %s111 = sadd.s32 %s110, 1
    %s112 = scalar_select %p109, %s110, %s111
    %p115 = pneg %p109
    %p116 = scmp.eq.s32.totalorder %s14, 1
    %p117 = por %p115, %p116
    %p118 = scmp.ne.s32.totalorder %s110, %s113
    %p119 = scmp.eq.s32.totalorder %s14, 0
    %p120 = por %p118, %p119
    %p121 = scmp.ne.s32.totalorder %s110, %s113
    %p122 = scmp.eq.s32.totalorder %s19, 1
    %p123 = por %p121, %p122
    %p124 = scmp.ne.s32.totalorder %s113, %s114
    %p125 = scmp.eq.s32.totalorder %s19, 0
    %p126 = por %p124, %p125
    %p127 = scmp.ne.s32.totalorder %s113, %s114
    %p128 = scmp.eq.s32.totalorder %s20, 1
    %p129 = por %p127, %p128
    %p131 = scmp.ne.s32.totalorder %s114, %s130
    %p132 = scmp.eq.s32.totalorder %s20, 0
    %p133 = por %p131, %p132
    %s135 = sadd.s32 %s134, 1
    %p138 = scmp.eq.s32.totalorder %s14, 1
    %p139 = scmp.ne.s32.totalorder %s134, %s136
    %p140 = scmp.eq.s32.totalorder %s14, 0
    %p141 = por %p139, %p140
    %p142 = scmp.ne.s32.totalorder %s134, %s136
    %p143 = scmp.eq.s32.totalorder %s19, 1
    %p144 = por %p142, %p143
    %p145 = scmp.ne.s32.totalorder %s136, %s137
    %p146 = scmp.eq.s32.totalorder %s19, 0
    %p147 = por %p145, %p146
    %p148 = scmp.ne.s32.totalorder %s136, %s137
    %p149 = scmp.eq.s32.totalorder %s20, 1
    %p150 = por %p148, %p149
    %p152 = scmp.ne.s32.totalorder %s137, %s151
    %p153 = scmp.eq.s32.totalorder %s20, 0
    %p154 = por %p152, %p153
    %s156 = sadd.s32 %s155, 1
    %p159 = scmp.eq.s32.totalorder %s14, 1
    %p160 = scmp.ne.s32.totalorder %s155, %s157
    %p161 = scmp.eq.s32.totalorder %s14, 0
    %p162 = por %p160, %p161
    %p163 = scmp.ne.s32.totalorder %s155, %s157
    %p164 = scmp.eq.s32.totalorder %s19, 1
    %p165 = por %p163, %p164
    %p166 = scmp.ne.s32.totalorder %s157, %s158
    %p167 = scmp.eq.s32.totalorder %s19, 0
    %p168 = por %p166, %p167
    %p169 = scmp.ne.s32.totalorder %s157, %s158
    %p170 = scmp.eq.s32.totalorder %s20, 1
    %p171 = por %p169, %p170
    %p173 = scmp.ne.s32.totalorder %s158, %s172
    %p174 = scmp.eq.s32.totalorder %s20, 0
    %p175 = por %p173, %p174
    %s177 = sadd.s32 %s176, 1
    %p180 = scmp.eq.s32.totalorder %s14, 1
    %p181 = scmp.ne.s32.totalorder %s176, %s178
    %p182 = scmp.eq.s32.totalorder %s14, 0
    %p183 = por %p181, %p182
    %p184 = scmp.ne.s32.totalorder %s176, %s178
    %p185 = scmp.eq.s32.totalorder %s19, 1
    %p186 = por %p184, %p185
    %p187 = scmp.ne.s32.totalorder %s178, %s179
    %p188 = scmp.eq.s32.totalorder %s19, 0
    %p189 = por %p187, %p188
    %p190 = scmp.ne.s32.totalorder %s178, %s179
    %p191 = scmp.eq.s32.totalorder %s20, 1
    %p192 = por %p190, %p191
    %p194 = scmp.ne.s32.totalorder %s179, %s193
    %p195 = scmp.eq.s32.totalorder %s20, 0
    %p196 = por %p194, %p195
    %s197 = ssub.s32 %s21, %s33
    %s198 = ssub.s32 %s22, %s29
    %s199 = sor.u32 %s197, %s198
    %p200 = scmp.eq.s32.totalorder %s199, 0
    %s202 = sadd.s32 %s201, 1
    %s203 = scalar_select %p200, %s201, %s202
    %p206 = pneg %p200
    %p207 = scmp.eq.s32.totalorder %s14, 1
    %p208 = por %p206, %p207
    %p209 = scmp.ne.s32.totalorder %s201, %s204
    %p210 = scmp.eq.s32.totalorder %s14, 0
    %p211 = por %p209, %p210
    %p212 = scmp.ne.s32.totalorder %s201, %s204
    %p213 = scmp.eq.s32.totalorder %s19, 1
    %p214 = por %p212, %p213
    %p215 = scmp.ne.s32.totalorder %s204, %s205
    %p216 = scmp.eq.s32.totalorder %s19, 0
    %p217 = por %p215, %p216
    %p218 = scmp.ne.s32.totalorder %s204, %s205
    %p219 = scmp.eq.s32.totalorder %s20, 1
    %p220 = por %p218, %p219
    %p222 = scmp.ne.s32.totalorder %s205, %s221
    %p223 = scmp.eq.s32.totalorder %s20, 0
    %p224 = por %p222, %p223
    %s225 = ssub.s32 %s21, %s33
    %s226 = ssub.s32 %s22, %s29
    %s227 = sor.u32 %s225, %s226
    %p228 = scmp.eq.s32.totalorder %s227, 0
    %s230 = sadd.s32 %s229, 1
    %s231 = scalar_select %p228, %s229, %s230
    %p234 = pneg %p228
    %p235 = scmp.eq.s32.totalorder %s14, 1
    %p236 = por %p234, %p235
    %p237 = scmp.ne.s32.totalorder %s229, %s232
    %p238 = scmp.eq.s32.totalorder %s14, 0
    %p239 = por %p237, %p238
    %p240 = scmp.ne.s32.totalorder %s229, %s232
    %p241 = scmp.eq.s32.totalorder %s19, 1
    %p242 = por %p240, %p241
    %p243 = scmp.ne.s32.totalorder %s232, %s233
    %p244 = scmp.eq.s32.totalorder %s19, 0
    %p245 = por %p243, %p244
    %p246 = scmp.ne.s32.totalorder %s232, %s233
    %p247 = scmp.eq.s32.totalorder %s20, 1
    %p248 = por %p246, %p247
    %p250 = scmp.ne.s32.totalorder %s233, %s249
    %p251 = scmp.eq.s32.totalorder %s20, 0
    %p252 = por %p250, %p251
    %p253 = scmp.le.s32.totalorder 1, %s14
    %p254 = scmp.lt.s32.totalorder %s14, 3
    %p255 = pnand %p253, %p254
    %p256 = pneg %p255
    // Predicated region
    $region9: #{double_conv_block.2} parent=5 // pred_check
      _
    $region10: #{double_conv_block.2} parent=5 // pred_check_branch
      %258 = sbr.rel (%p255) target = $region12
    $region11: #{double_conv_block.2} parent=5 // pred_region
      %s259 = ssub.s32 %s14, 1
      // Predicated region
      $region13: #{double_conv_block.2} parent=11 // pred_check
        %p260 = pneg %p147
      $region14: #{double_conv_block.2} parent=11 // pred_check_branch
        %262 = sbr.rel (%p260) target = $region16
      $region15: #{double_conv_block.2} parent=11 // pred_region
        _
      $region16: #{double_conv_block.2} parent=11 // pred_fallthru
        _
      // Predicated region
      $region17: #{double_conv_block.2} parent=11 // pred_check
        %p263 = pneg %p168
      $region18: #{double_conv_block.2} parent=11 // pred_check_branch
        %265 = sbr.rel (%p263) target = $region20
      $region19: #{double_conv_block.2} parent=11 // pred_region
        _
      $region20: #{double_conv_block.2} parent=11 // pred_fallthru
        _
      // Predicated region
      $region21: #{double_conv_block.2} parent=11 // pred_check
        %p266 = pneg %p189
      $region22: #{double_conv_block.2} parent=11 // pred_check_branch
        %268 = sbr.rel (%p266) target = $region24
      $region23: #{double_conv_block.2} parent=11 // pred_region
        _
      $region24: #{double_conv_block.2} parent=11 // pred_fallthru
        _
    $region12: #{double_conv_block.2} parent=5 // pred_fallthru
      _
    %p269 = scmp.lt.s32.totalorder %s14, 2
    // Predicated region
    $region25: #{double_conv_block.2} parent=5 // pred_check
      %p270 = pneg %p269
    $region26: #{double_conv_block.2} parent=5 // pred_check_branch
      %272 = sbr.rel (%p270) target = $region28
    $region27: #{double_conv_block.2} parent=5 // pred_region
      // Predicated region
      $region29: #{double_conv_block.2} parent=27 // pred_check
        %p273 = pneg %p56
      $region30: #{double_conv_block.2} parent=27 // pred_check_branch
        %275 = sbr.rel (%p273) target = $region32
      $region31: #{double_conv_block.2} parent=27 // pred_region
        %s276 = smul.u32 %s22, 16
        %s277 = ssub.s32 %s276, 1
        %p278 = scmp.gt.s32.totalorder %s277, 0
        %s279 = scalar_select %p278, %s277, 0
        %p280 = scmp.lt.s32.totalorder %s21, 1
        %s281 = scalar_select %p280, %s21, 1
        %p282 = scmp.lt.s32.totalorder %s279, 15
        %s283 = scalar_select %p282, %s279, 15
        %s284 = smul.addr %s283, 2
        %s285 = smul.addr %s281, 32
        %s286 = sadd.s32 %s284, %s285
        %s287 = smul.addr %s286, 8
        %s288 = scalar_lea.vmem %s0, %s287
        %s289 = smul.u32 %s22, 16
        %s290 = ssub.s32 %s289, 1
        %p291 = scmp.gt.s32.totalorder %s290, 0
        %s292 = scalar_select %p291, %s290, 0
      $region32: #{double_conv_block.2} parent=27 // pred_fallthru
        _
      // Predicated region
      $region33: #{double_conv_block.2} parent=27 // pred_check
        %p293 = pneg %p84
      $region34: #{double_conv_block.2} parent=27 // pred_check_branch
        %295 = sbr.rel (%p293) target = $region36
      $region35: #{double_conv_block.2} parent=27 // pred_region
        %s296 = smul.u32 16, %s22
        %p297 = scmp.lt.s32.totalorder %s21, 1
        %s298 = scalar_select %p297, %s21, 1
        %p299 = scmp.lt.s32.totalorder %s296, 15
        %s300 = scalar_select %p299, %s296, 15
        %s301 = smul.addr %s300, 2
        %s302 = smul.addr %s298, 32
        %s303 = sadd.s32 %s301, %s302
        %s304 = smul.addr %s303, 8
        %s305 = scalar_lea.vmem %s1, %s304
        %s306 = smul.u32 16, %s22
      $region36: #{double_conv_block.2} parent=27 // pred_fallthru
        _
      // Predicated region
      $region37: #{double_conv_block.2} parent=27 // pred_check
        %p307 = pneg %p120
      $region38: #{double_conv_block.2} parent=27 // pred_check_branch
        %309 = sbr.rel (%p307) target = $region40
      $region39: #{double_conv_block.2} parent=27 // pred_region
        %s310 = sadd.s32 %s22, 1
        %s311 = smul.u32 %s310, 16
        %p312 = scmp.lt.s32.totalorder %s311, 15
        %s313 = scalar_select %p312, %s311, 15
        %p314 = scmp.lt.s32.totalorder %s21, 1
        %s315 = scalar_select %p314, %s21, 1
        %p316 = scmp.lt.s32.totalorder %s313, 15
        %s317 = scalar_select %p316, %s313, 15
        %s318 = smul.addr %s317, 2
        %s319 = smul.addr %s315, 32
        %s320 = sadd.s32 %s318, %s319
        %s321 = smul.addr %s320, 8
        %s322 = scalar_lea.vmem %s2, %s321
        %s323 = sadd.s32 %s22, 1
        %s324 = smul.u32 %s323, 16
        %p325 = scmp.lt.s32.totalorder %s324, 15
        %s326 = scalar_select %p325, %s324, 15
      $region40: #{double_conv_block.2} parent=27 // pred_fallthru
        _
    $region28: #{double_conv_block.2} parent=5 // pred_fallthru
      _
    %p327 = scmp.le.s32.totalorder 1, %s14
    %p328 = scmp.lt.s32.totalorder %s14, 3
    %p329 = pnand %p327, %p328
    %p330 = pneg %p329
    // Predicated region
    $region41: #{double_conv_block.2} parent=5 // pred_check
      _
    $region42: #{double_conv_block.2} parent=5 // pred_check_branch
      %332 = sbr.rel (%p329) target = $region44
    $region43: #{double_conv_block.2} parent=5 // pred_region
      %s333 = ssub.s32 %s14, 1
      %s334 = smul.u32 %s24, 16
      %s335 = ssub.s32 %s334, 1
      %p336 = scmp.gt.s32.totalorder %s335, 0
      %s337 = scalar_select %p336, %s335, 0
      %p338 = scmp.lt.s32.totalorder %s23, 1
      %s339 = scalar_select %p338, %s23, 1
      %p340 = scmp.lt.s32.totalorder %s337, 15
      %s341 = scalar_select %p340, %s337, 15
      %s342 = smul.addr %s341, 2
      %s343 = smul.addr %s339, 32
      %s344 = sadd.s32 %s342, %s343
      %s345 = smul.addr %s344, 8
      %s346 = scalar_lea.vmem %s0, %s345
      %p347 = pneg %p62
      %p348 = pneg %p59
      %s349 = smul.u32 16, %s24
      %p350 = scmp.lt.s32.totalorder %s23, 1
      %s351 = scalar_select %p350, %s23, 1
      %p352 = scmp.lt.s32.totalorder %s349, 15
      %s353 = scalar_select %p352, %s349, 15
      %s354 = smul.addr %s353, 2
      %s355 = smul.addr %s351, 32
      %s356 = sadd.s32 %s354, %s355
      %s357 = smul.addr %s356, 8
      %s358 = scalar_lea.vmem %s1, %s357
      %p359 = pneg %p90
      %p360 = pneg %p87
      %s361 = sadd.s32 %s24, 1
      %s362 = smul.u32 %s361, 16
      %p363 = scmp.lt.s32.totalorder %s362, 15
      %s364 = scalar_select %p363, %s362, 15
      %p365 = scmp.lt.s32.totalorder %s23, 1
      %s366 = scalar_select %p365, %s23, 1
      %p367 = scmp.lt.s32.totalorder %s364, 15
      %s368 = scalar_select %p367, %s364, 15
      %s369 = smul.addr %s368, 2
      %s370 = smul.addr %s366, 32
      %s371 = sadd.s32 %s369, %s370
      %s372 = smul.addr %s371, 8
      %s373 = scalar_lea.vmem %s2, %s372
      %p374 = pneg %p126
      %p375 = pneg %p123
      %p376 = pneg %p147
      %p377 = pneg %p144
      %p378 = pneg %p168
      %p379 = pneg %p165
      %p380 = pneg %p189
      %p381 = pneg %p186
      %p382 = pneg %p217
      %p383 = pneg %p214
      %s384 = smul.u32 16, %s24
      %p385 = scmp.lt.s32.totalorder %s23, 1
      %s386 = scalar_select %p385, %s23, 1
      %p387 = scmp.lt.s32.totalorder %s384, 15
      %s388 = scalar_select %p387, %s384, 15
      %s389 = smul.addr %s388, 2
      %s390 = smul.addr %s386, 32
      %s391 = sadd.s32 %s389, %s390
      %s392 = smul.addr %s391, 8
      %s393 = scalar_lea.vmem %s6, %s392
      %p394 = pneg %p245
      %p395 = pneg %p242
      %p396 = scmp.lt.s32.totalorder %s23, 1
      %s397 = scalar_select %p396, %s23, 1
      %p398 = scmp.lt.s32.totalorder %s24, 0
      %s399 = scalar_select %p398, %s24, 0
      %s400 = sadd.s32 %s399, %s397
      %s401 = smul.addr %s400, 2
      %s402 = scalar_lea.vmem %s7, %s401
      %s403 = smul.u32 %s24, 16
      %s404 = ssub.s32 %s403, 1
      %p405 = scmp.gt.s32.totalorder %s404, 0
      %s406 = scalar_select %p405, %s404, 0
      %p407 = scmp.lt.s32.totalorder %s23, 1
      %s408 = scalar_select %p407, %s23, 1
      %p409 = scmp.lt.s32.totalorder %s406, 15
      %s410 = scalar_select %p409, %s406, 15
      %s411 = smul.addr %s410, 2
      %s412 = smul.addr %s408, 32
      %s413 = sadd.s32 %s411, %s412
      %s414 = smul.addr %s413, 8
      %s415 = scalar_lea.vmem %s0, %s414
      %s416 = smul.u32 %s24, 16
      %s417 = ssub.s32 %s416, 1
      %p418 = scmp.gt.s32.totalorder %s417, 0
      %s419 = scalar_select %p418, %s417, 0
      %s420 = smul.u32 16, %s24
      %p421 = scmp.lt.s32.totalorder %s23, 1
      %s422 = scalar_select %p421, %s23, 1
      %p423 = scmp.lt.s32.totalorder %s420, 15
      %s424 = scalar_select %p423, %s420, 15
      %s425 = smul.addr %s424, 2
      %s426 = smul.addr %s422, 32
      %s427 = sadd.s32 %s425, %s426
      %s428 = smul.addr %s427, 8
      %s429 = scalar_lea.vmem %s1, %s428
      %s430 = smul.u32 16, %s24
      %s431 = sadd.s32 %s24, 1
      %s432 = smul.u32 %s431, 16
      %p433 = scmp.lt.s32.totalorder %s432, 15
      %s434 = scalar_select %p433, %s432, 15
      %p435 = scmp.lt.s32.totalorder %s23, 1
      %s436 = scalar_select %p435, %s23, 1
      %p437 = scmp.lt.s32.totalorder %s434, 15
      %s438 = scalar_select %p437, %s434, 15
      %s439 = smul.addr %s438, 2
      %s440 = smul.addr %s436, 32
      %s441 = sadd.s32 %s439, %s440
      %s442 = smul.addr %s441, 8
      %s443 = scalar_lea.vmem %s2, %s442
      %s444 = sadd.s32 %s24, 1
      %s445 = smul.u32 %s444, 16
      %p446 = scmp.lt.s32.totalorder %s445, 15
      %s447 = scalar_select %p446, %s445, 15
      %s448 = smul.u32 16, %s24
      %p449 = scmp.lt.s32.totalorder %s23, 1
      %s450 = scalar_select %p449, %s23, 1
      %p451 = scmp.lt.s32.totalorder %s448, 15
      %s452 = scalar_select %p451, %s448, 15
      %s453 = smul.addr %s452, 2
      %s454 = smul.addr %s450, 32
      %s455 = sadd.s32 %s453, %s454
      %s456 = smul.addr %s455, 8
      %s457 = scalar_lea.vmem %s6, %s456
      %s458 = smul.u32 16, %s24
      %p459 = scmp.lt.s32.totalorder %s23, 1
      %s460 = scalar_select %p459, %s23, 1
      %p461 = scmp.lt.s32.totalorder %s24, 0
      %s462 = scalar_select %p461, %s24, 0
      %s463 = sadd.s32 %s462, %s460
      %s464 = smul.addr %s463, 2
      %s465 = scalar_lea.vmem %s7, %s464
      %v466 = vld [vmem:[%s415] sm:$0xff]
      %v467 = vld [vmem:[%s415 + $0x8] sm:$0xff]
      %v468 = vld [vmem:[%s4] sm:$0x1]
      %v470 = vlaneseq
      %v471 = vshrl.u32 %v470, 7
      %v472 = vsub.s32 0, %v471
      %v473 = vrot.slane %v468, %v472
      %v475 = vmul.f32 %v466, %v473
      %v476 = vmul.f32 %v467, %v473
      %v477 = vld [vmem:[%s5] sm:$0x1]
      %v479 = vlaneseq
      %v480 = vshrl.u32 %v479, 7
      %v481 = vsub.s32 0, %v480
      %v482 = vrot.slane %v477, %v481
      %v484 = vadd.f32 %v475, %v482
      %v485 = vadd.f32 %v476, %v482
      %p486 = scmp.eq.s32.totalorder %s24, 0
      %s487 = scalar_select %p486, 0.0, 1.0
      %v488 = vstv %s487
      %v489 = vmul.f32 %v484, %v488
      %v490 = vmul.f32 %v485, %v488
      %v491 = vld [vmem:[%s429] sm:$0xff]
      %v492 = vld [vmem:[%s429 + $0x8] sm:$0xff]
      %v493 = vld [vmem:[%s429 + $0x10] sm:$0xff]
      %v494 = vld [vmem:[%s429 + $0x18] sm:$0xff]
      %v495 = vld [vmem:[%s429 + $0x20] sm:$0xff]
      %v496 = vld [vmem:[%s429 + $0x28] sm:$0xff]
      %v497 = vld [vmem:[%s429 + $0x30] sm:$0xff]
      %v498 = vld [vmem:[%s429 + $0x38] sm:$0xff]
      %v499 = vld [vmem:[%s429 + $0x40] sm:$0xff]
      %v500 = vld [vmem:[%s429 + $0x48] sm:$0xff]
      %v501 = vld [vmem:[%s429 + $0x50] sm:$0xff]
      %v502 = vld [vmem:[%s429 + $0x58] sm:$0xff]
      %v503 = vld [vmem:[%s429 + $0x60] sm:$0xff]
      %v504 = vld [vmem:[%s429 + $0x68] sm:$0xff]
      %v505 = vld [vmem:[%s429 + $0x70] sm:$0xff]
      %v506 = vld [vmem:[%s429 + $0x78] sm:$0xff]
      %v507 = vld [vmem:[%s429 + $0x80] sm:$0xff]
      %v508 = vld [vmem:[%s429 + $0x88] sm:$0xff]
      %v509 = vld [vmem:[%s429 + $0x90] sm:$0xff]
      %v510 = vld [vmem:[%s429 + $0x98] sm:$0xff]
      %v511 = vld [vmem:[%s429 + $0xa0] sm:$0xff]
      %v512 = vld [vmem:[%s429 + $0xa8] sm:$0xff]
      %v513 = vld [vmem:[%s429 + $0xb0] sm:$0xff]
      %v514 = vld [vmem:[%s429 + $0xb8] sm:$0xff]
      %v515 = vld [vmem:[%s429 + $0xc0] sm:$0xff]
      %v516 = vld [vmem:[%s429 + $0xc8] sm:$0xff]
      %v517 = vld [vmem:[%s429 + $0xd0] sm:$0xff]
      %v518 = vld [vmem:[%s429 + $0xd8] sm:$0xff]
      %v519 = vld [vmem:[%s429 + $0xe0] sm:$0xff]
      %v520 = vld [vmem:[%s429 + $0xe8] sm:$0xff]
      %v521 = vld [vmem:[%s429 + $0xf0] sm:$0xff]
      %v522 = vld [vmem:[%s429 + $0xf8] sm:$0xff]
      %v523 = vmul.f32 %v491, %v473
      %v524 = vmul.f32 %v492, %v473
      %v525 = vmul.f32 %v493, %v473
      %v526 = vmul.f32 %v494, %v473
      %v527 = vmul.f32 %v495, %v473
      %v528 = vmul.f32 %v496, %v473
      %v529 = vmul.f32 %v497, %v473
      %v530 = vmul.f32 %v498, %v473
      %v531 = vmul.f32 %v499, %v473
      %v532 = vmul.f32 %v500, %v473
      %v533 = vmul.f32 %v501, %v473
      %v534 = vmul.f32 %v502, %v473
      %v535 = vmul.f32 %v503, %v473
      %v536 = vmul.f32 %v504, %v473
      %v537 = vmul.f32 %v505, %v473
      %v538 = vmul.f32 %v506, %v473
      %v539 = vmul.f32 %v507, %v473
      %v540 = vmul.f32 %v508, %v473
      %v541 = vmul.f32 %v509, %v473
      %v542 = vmul.f32 %v510, %v473
      %v543 = vmul.f32 %v511, %v473
      %v544 = vmul.f32 %v512, %v473
      %v545 = vmul.f32 %v513, %v473
      %v546 = vmul.f32 %v514, %v473
      %v547 = vmul.f32 %v515, %v473
      %v548 = vmul.f32 %v516, %v473
      %v549 = vmul.f32 %v517, %v473
      %v550 = vmul.f32 %v518, %v473
      %v551 = vmul.f32 %v519, %v473
      %v552 = vmul.f32 %v520, %v473
      %v553 = vmul.f32 %v521, %v473
      %v554 = vmul.f32 %v522, %v473
      %v555 = vadd.f32 %v523, %v482
      %v556 = vadd.f32 %v524, %v482
      %v557 = vadd.f32 %v525, %v482
      %v558 = vadd.f32 %v526, %v482
      %v559 = vadd.f32 %v527, %v482
      %v560 = vadd.f32 %v528, %v482
      %v561 = vadd.f32 %v529, %v482
      %v562 = vadd.f32 %v530, %v482
      %v563 = vadd.f32 %v531, %v482
      %v564 = vadd.f32 %v532, %v482
      %v565 = vadd.f32 %v533, %v482
      %v566 = vadd.f32 %v534, %v482
      %v567 = vadd.f32 %v535, %v482
      %v568 = vadd.f32 %v536, %v482
      %v569 = vadd.f32 %v537, %v482
      %v570 = vadd.f32 %v538, %v482
      %v571 = vadd.f32 %v539, %v482
      %v572 = vadd.f32 %v540, %v482
      %v573 = vadd.f32 %v541, %v482
      %v574 = vadd.f32 %v542, %v482
      %v575 = vadd.f32 %v543, %v482
      %v576 = vadd.f32 %v544, %v482
      %v577 = vadd.f32 %v545, %v482
      %v578 = vadd.f32 %v546, %v482
      %v579 = vadd.f32 %v547, %v482
      %v580 = vadd.f32 %v548, %v482
      %v581 = vadd.f32 %v549, %v482
      %v582 = vadd.f32 %v550, %v482
      %v583 = vadd.f32 %v551, %v482
      %v584 = vadd.f32 %v552, %v482
      %v585 = vadd.f32 %v553, %v482
      %v586 = vadd.f32 %v554, %v482
      %v587 = vld [vmem:[%s443] sm:$0xff]
      %v588 = vld [vmem:[%s443 + $0x8] sm:$0xff]
      %v589 = vmul.f32 %v587, %v473
      %v590 = vmul.f32 %v588, %v473
      %v591 = vadd.f32 %v589, %v482
      %v592 = vadd.f32 %v590, %v482
      %s593 = sadd.s32 %s24, 1
      %s594 = smul.u32 %s593, 16
      %p595 = scmp.ge.s32.totalorder %s594, 16
      %s596 = scalar_select %p595, 0.0, 1.0
      %v597 = vstv %s596
      %v598 = vmul.f32 %v591, %v597
      %v599 = vmul.f32 %v592, %v597
      %v600 = vld [vmem:[%s3] sm:$0xff]
      %v601 = vld [vmem:[%s3 + $0x8] sm:$0xff]
      %v602 = vld [vmem:[%s3 + $0x10] sm:$0xff]
      %v603 = vld [vmem:[%s3 + $0x18] sm:$0xff]
      %v604 = vld [vmem:[%s3 + $0x20] sm:$0xff]
      %v605 = vld [vmem:[%s3 + $0x28] sm:$0xff]
      %v606 = vld [vmem:[%s3 + $0x30] sm:$0xff]
      %v607 = vld [vmem:[%s3 + $0x38] sm:$0xff]
      %v608 = vld [vmem:[%s3 + $0x40] sm:$0xff]
      %v609 = vld [vmem:[%s3 + $0x48] sm:$0xff]
      %v610 = vld [vmem:[%s3 + $0x50] sm:$0xff]
      %v611 = vld [vmem:[%s3 + $0x58] sm:$0xff]
      %v612 = vld [vmem:[%s3 + $0x60] sm:$0xff]
      %v613 = vld [vmem:[%s3 + $0x68] sm:$0xff]
      %v614 = vld [vmem:[%s3 + $0x70] sm:$0xff]
      %v615 = vld [vmem:[%s3 + $0x78] sm:$0xff]
      %v616 = vld [vmem:[%s3 + $0x80] sm:$0xff]
      %v617 = vld [vmem:[%s3 + $0x88] sm:$0xff]
      %v618 = vld [vmem:[%s3 + $0x90] sm:$0xff]
      %v619 = vld [vmem:[%s3 + $0x98] sm:$0xff]
      %v620 = vld [vmem:[%s3 + $0xa0] sm:$0xff]
      %v621 = vld [vmem:[%s3 + $0xa8] sm:$0xff]
      %v622 = vld [vmem:[%s3 + $0xb0] sm:$0xff]
      %v623 = vld [vmem:[%s3 + $0xb8] sm:$0xff]
      %v624 = vld [vmem:[%s3 + $0xc0] sm:$0xff]
      %v625 = vld [vmem:[%s3 + $0xc8] sm:$0xff]
      %v626 = vld [vmem:[%s3 + $0xd0] sm:$0xff]
      %v627 = vld [vmem:[%s3 + $0xd8] sm:$0xff]
      %v628 = vld [vmem:[%s3 + $0xe0] sm:$0xff]
      %v629 = vld [vmem:[%s3 + $0xe8] sm:$0xff]
      %v630 = vld [vmem:[%s3 + $0xf0] sm:$0xff]
      %v631 = vld [vmem:[%s3 + $0xf8] sm:$0xff]
      %v632 = vld [vmem:[%s3 + $0x100] sm:$0xff]
      %v633 = vld [vmem:[%s3 + $0x108] sm:$0xff]
      %v634 = vld [vmem:[%s3 + $0x110] sm:$0xff]
      %v635 = vld [vmem:[%s3 + $0x118] sm:$0xff]
      %v636 = vld [vmem:[%s3 + $0x120] sm:$0xff]
      %v637 = vld [vmem:[%s3 + $0x128] sm:$0xff]
      %v638 = vld [vmem:[%s3 + $0x130] sm:$0xff]
      %v639 = vld [vmem:[%s3 + $0x138] sm:$0xff]
      %v640 = vld [vmem:[%s3 + $0x140] sm:$0xff]
      %v641 = vld [vmem:[%s3 + $0x148] sm:$0xff]
      %v642 = vld [vmem:[%s3 + $0x150] sm:$0xff]
      %v643 = vld [vmem:[%s3 + $0x158] sm:$0xff]
      %v644 = vld [vmem:[%s3 + $0x160] sm:$0xff]
      %v645 = vld [vmem:[%s3 + $0x168] sm:$0xff]
      %v646 = vld [vmem:[%s3 + $0x170] sm:$0xff]
      %v647 = vld [vmem:[%s3 + $0x178] sm:$0xff]
      %v648 = vld [vmem:[%s3 + $0x180] sm:$0xff]
      %v649 = vld [vmem:[%s3 + $0x188] sm:$0xff]
      %v650 = vld [vmem:[%s3 + $0x190] sm:$0xff]
      %v651 = vld [vmem:[%s3 + $0x198] sm:$0xff]
      %v652 = vld [vmem:[%s3 + $0x1a0] sm:$0xff]
      %v653 = vld [vmem:[%s3 + $0x1a8] sm:$0xff]
      %v654 = vld [vmem:[%s3 + $0x1b0] sm:$0xff]
      %v655 = vld [vmem:[%s3 + $0x1b8] sm:$0xff]
      %v656 = vld [vmem:[%s3 + $0x1c0] sm:$0xff]
      %v657 = vld [vmem:[%s3 + $0x1c8] sm:$0xff]
      %v658 = vld [vmem:[%s3 + $0x1d0] sm:$0xff]
      %v659 = vld [vmem:[%s3 + $0x1d8] sm:$0xff]
      %v660 = vld [vmem:[%s3 + $0x1e0] sm:$0xff]
      %v661 = vld [vmem:[%s3 + $0x1e8] sm:$0xff]
      %v662 = vld [vmem:[%s3 + $0x1f0] sm:$0xff]
      %v663 = vld [vmem:[%s3 + $0x1f8] sm:$0xff]
      %v664 = vld [vmem:[%s3 + $0x200] sm:$0xff]
      %v665 = vld [vmem:[%s3 + $0x208] sm:$0xff]
      %v666 = vld [vmem:[%s3 + $0x210] sm:$0xff]
      %v667 = vld [vmem:[%s3 + $0x218] sm:$0xff]
      %v668 = vld [vmem:[%s3 + $0x220] sm:$0xff]
      %v669 = vld [vmem:[%s3 + $0x228] sm:$0xff]
      %v670 = vld [vmem:[%s3 + $0x230] sm:$0xff]
      %v671 = vld [vmem:[%s3 + $0x238] sm:$0xff]
      %v672 = vld [vmem:[%s3 + $0x240] sm:$0xff]
      %v673 = vld [vmem:[%s3 + $0x248] sm:$0xff]
      %v674 = vld [vmem:[%s3 + $0x250] sm:$0xff]
      %v675 = vld [vmem:[%s3 + $0x258] sm:$0xff]
      %v676 = vld [vmem:[%s3 + $0x260] sm:$0xff]
      %v677 = vld [vmem:[%s3 + $0x268] sm:$0xff]
      %v678 = vld [vmem:[%s3 + $0x270] sm:$0xff]
      %v679 = vld [vmem:[%s3 + $0x278] sm:$0xff]
      %v680 = vld [vmem:[%s3 + $0x280] sm:$0xff]
      %v681 = vld [vmem:[%s3 + $0x288] sm:$0xff]
      %v682 = vld [vmem:[%s3 + $0x290] sm:$0xff]
      %v683 = vld [vmem:[%s3 + $0x298] sm:$0xff]
      %v684 = vld [vmem:[%s3 + $0x2a0] sm:$0xff]
      %v685 = vld [vmem:[%s3 + $0x2a8] sm:$0xff]
      %v686 = vld [vmem:[%s3 + $0x2b0] sm:$0xff]
      %v687 = vld [vmem:[%s3 + $0x2b8] sm:$0xff]
      %v688 = vld [vmem:[%s3 + $0x2c0] sm:$0xff]
      %v689 = vld [vmem:[%s3 + $0x2c8] sm:$0xff]
      %v690 = vld [vmem:[%s3 + $0x2d0] sm:$0xff]
      %v691 = vld [vmem:[%s3 + $0x2d8] sm:$0xff]
      %v692 = vld [vmem:[%s3 + $0x2e0] sm:$0xff]
      %v693 = vld [vmem:[%s3 + $0x2e8] sm:$0xff]
      %v694 = vld [vmem:[%s3 + $0x2f0] sm:$0xff]
      %v695 = vld [vmem:[%s3 + $0x2f8] sm:$0xff]
      %v696 = vld [vmem:[%s3 + $0x300] sm:$0xff]
      %v697 = vld [vmem:[%s3 + $0x308] sm:$0xff]
      %v698 = vld [vmem:[%s3 + $0x310] sm:$0xff]
      %v699 = vld [vmem:[%s3 + $0x318] sm:$0xff]
      %v700 = vld [vmem:[%s3 + $0x320] sm:$0xff]
      %v701 = vld [vmem:[%s3 + $0x328] sm:$0xff]
      %v702 = vld [vmem:[%s3 + $0x330] sm:$0xff]
      %v703 = vld [vmem:[%s3 + $0x338] sm:$0xff]
      %v704 = vld [vmem:[%s3 + $0x340] sm:$0xff]
      %v705 = vld [vmem:[%s3 + $0x348] sm:$0xff]
      %v706 = vld [vmem:[%s3 + $0x350] sm:$0xff]
      %v707 = vld [vmem:[%s3 + $0x358] sm:$0xff]
      %v708 = vld [vmem:[%s3 + $0x360] sm:$0xff]
      %v709 = vld [vmem:[%s3 + $0x368] sm:$0xff]
      %v710 = vld [vmem:[%s3 + $0x370] sm:$0xff]
      %v711 = vld [vmem:[%s3 + $0x378] sm:$0xff]
      %v712 = vld [vmem:[%s3 + $0x380] sm:$0xff]
      %v713 = vld [vmem:[%s3 + $0x388] sm:$0xff]
      %v714 = vld [vmem:[%s3 + $0x390] sm:$0xff]
      %v715 = vld [vmem:[%s3 + $0x398] sm:$0xff]
      %v716 = vld [vmem:[%s3 + $0x3a0] sm:$0xff]
      %v717 = vld [vmem:[%s3 + $0x3a8] sm:$0xff]
      %v718 = vld [vmem:[%s3 + $0x3b0] sm:$0xff]
      %v719 = vld [vmem:[%s3 + $0x3b8] sm:$0xff]
      %v720 = vld [vmem:[%s3 + $0x3c0] sm:$0xff]
      %v721 = vld [vmem:[%s3 + $0x3c8] sm:$0xff]
      %v722 = vld [vmem:[%s3 + $0x3d0] sm:$0xff]
      %v723 = vld [vmem:[%s3 + $0x3d8] sm:$0xff]
      %v724 = vld [vmem:[%s3 + $0x3e0] sm:$0xff]
      %v725 = vld [vmem:[%s3 + $0x3e8] sm:$0xff]
      %v726 = vld [vmem:[%s3 + $0x3f0] sm:$0xff]
      %v727 = vld [vmem:[%s3 + $0x3f8] sm:$0xff]
      %v728 = vld [vmem:[%s3 + $0x400] sm:$0xff]
      %v729 = vld [vmem:[%s3 + $0x408] sm:$0xff]
      %v730 = vld [vmem:[%s3 + $0x410] sm:$0xff]
      %v731 = vld [vmem:[%s3 + $0x418] sm:$0xff]
      %v732 = vld [vmem:[%s3 + $0x420] sm:$0xff]
      %v733 = vld [vmem:[%s3 + $0x428] sm:$0xff]
      %v734 = vld [vmem:[%s3 + $0x430] sm:$0xff]
      %v735 = vld [vmem:[%s3 + $0x438] sm:$0xff]
      %v736 = vld [vmem:[%s3 + $0x440] sm:$0xff]
      %v737 = vld [vmem:[%s3 + $0x448] sm:$0xff]
      %v738 = vld [vmem:[%s3 + $0x450] sm:$0xff]
      %v739 = vld [vmem:[%s3 + $0x458] sm:$0xff]
      %v740 = vld [vmem:[%s3 + $0x460] sm:$0xff]
      %v741 = vld [vmem:[%s3 + $0x468] sm:$0xff]
      %v742 = vld [vmem:[%s3 + $0x470] sm:$0xff]
      %v743 = vld [vmem:[%s3 + $0x478] sm:$0xff]
      %744 = vmatprep.subr.mxu0 %v601
      %745 = vmatpush1.msra.mxu0 %v600
      %746 = vmatprep.subr.mxu0 %v604
      %747 = vmatpush1.msra.mxu0 %v603
      %748 = vmatprep.subr.mxu0 %v607
      %749 = vmatpush1.msra.mxu0 %v606
      %750 = vmatprep.subr.mxu0 %v610
      %751 = vmatpush1.msra.mxu0 %v609
      %752 = vmatprep.subr.mxu0 %v613
      %753 = vmatpush1.msra.mxu0 %v612
      %754 = vmatprep.subr.mxu0 %v616
      %755 = vmatpush1.msra.mxu0 %v615
      %756 = vmatprep.subr.mxu0 %v619
      %757 = vmatpush1.msra.mxu0 %v618
      %758 = vmatprep.subr.mxu0 %v622
      %759 = vmatpush1.msra.mxu0 %v621
      %760 = vmatprep.subr.mxu0 %v625
      %761 = vmatpush1.msra.mxu0 %v624
      %762 = vmatprep.subr.mxu0 %v628
      %763 = vmatpush1.msra.mxu0 %v627
      %764 = vmatprep.subr.mxu0 %v631
      %765 = vmatpush1.msra.mxu0 %v630
      %766 = vmatprep.subr.mxu0 %v634
      %767 = vmatpush1.msra.mxu0 %v633
      %768 = vmatprep.subr.mxu0 %v637
      %769 = vmatpush1.msra.mxu0 %v636
      %770 = vmatprep.subr.mxu0 %v640
      %771 = vmatpush1.msra.mxu0 %v639
      %772 = vmatprep.subr.mxu0 %v643
      %773 = vmatpush1.msra.mxu0 %v642
      %774 = vmatprep.subr.mxu0 %v646
      %775 = vmatpush1.msra.mxu0 %v645
      %776 = vmatprep.subr.mxu0 %v649
      %777 = vmatpush1.msra.mxu0 %v648
      %778 = vmatprep.subr.mxu0 %v652
      %779 = vmatpush1.msra.mxu0 %v651
      %780 = vmatprep.subr.mxu0 %v655
      %781 = vmatpush1.msra.mxu0 %v654
      %782 = vmatprep.subr.mxu0 %v658
      %783 = vmatpush1.msra.mxu0 %v657
      %784 = vmatprep.subr.mxu0 %v661
      %785 = vmatpush1.msra.mxu0 %v660
      %786 = vmatprep.subr.mxu0 %v664
      %787 = vmatpush1.msra.mxu0 %v663
      %788 = vmatprep.subr.mxu0 %v667
      %789 = vmatpush1.msra.mxu0 %v666
      %790 = vmatprep.subr.mxu0 %v670
      %791 = vmatpush1.msra.mxu0 %v669
      %792 = vmatprep.subr.mxu0 %v673
      %793 = vmatpush1.msra.mxu0 %v672
      %794 = vmatprep.subr.mxu0 %v676
      %795 = vmatpush1.msra.mxu0 %v675
      %796 = vmatprep.subr.mxu0 %v679
      %797 = vmatpush1.msra.mxu0 %v678
      %798 = vmatprep.subr.mxu0 %v682
      %799 = vmatpush1.msra.mxu0 %v681
      %800 = vmatprep.subr.mxu0 %v685
      %801 = vmatpush1.msra.mxu0 %v684
      %802 = vmatprep.subr.mxu0 %v688
      %803 = vmatpush1.msra.mxu0 %v687
      %804 = vmatprep.subr.mxu0 %v691
      %805 = vmatpush1.msra.mxu0 %v690
      %806 = vmatprep.subr.mxu0 %v694
      %807 = vmatpush1.msra.mxu0 %v693
      %808 = vmatprep.mubr.f32.mxu0 %v555
      %809 = vmatmul.mubr.f32.gmra.mrb[0].mxu0 %v489
      %v810 = vpop.f32.mrb[0].mxu0
      %v811 = vadd.f32 0.0, %v810
      %v812 = vpop.f32.mrb[0].mxu0
      %v813 = vadd.f32 0.0, %v812
      %814 = vmatprep.mubr.f32.mxu0 %v556
      %815 = vmatmul.mubr.f32.gmra.mrb[0].mxu0 %v490
      %v816 = vpop.f32.mrb[0].mxu0
      %v817 = vadd.f32 0.0, %v816
      %v818 = vpop.f32.mrb[0].mxu0
      %v819 = vadd.f32 0.0, %v818
      %820 = vmatprep.mubr.f32.mxu0 %v557
      %821 = vmatmul.mubr.f32.gmra.mrb[0].mxu0 %v555
      %v822 = vpop.f32.mrb[0].mxu0
      %v823 = vadd.f32 0.0, %v822
      %v824 = vpop.f32.mrb[0].mxu0
      %v825 = vadd.f32 0.0, %v824
      %826 = vmatprep.mubr.f32.mxu0 %v558
      %827 = vmatmul.mubr.f32.gmra.mrb[0].mxu0 %v556
      %v828 = vpop.f32.mrb[0].mxu0
      %v829 = vadd.f32 0.0, %v828
      %v830 = vpop.f32.mrb[0].mxu0
      %v831 = vadd.f32 0.0, %v830
      %832 = vmatprep.mubr.f32.mxu0 %v559
      %833 = vmatmul.mubr.f32.gmra.mrb[0].mxu0 %v557
      %v834 = vpop.f32.mrb[0].mxu0
      %v835 = vadd.f32 0.0, %v834
      %v836 = vpop.f32.mrb[0].mxu0
      %v837 = vadd.f32 0.0, %v836
      %838 = vmatprep.mubr.f32.mxu0 %v560
      %839 = vmatmul.mubr.f32.gmra.mrb[0].mxu0 %v558
      %v840 = vpop.f32.mrb[0].mxu0
      %v841 = vadd.f32 0.0, %v840
      %v842 = vpop.f32.mrb[0].mxu0
      %v843 = vadd.f32 0.0, %v842
      %844 = vmatprep.mubr.f32.mxu0 %v561
      %845 = vmatmul.mubr.f32.gmra.mrb[0].mxu0 %v559
      %v846 = vpop.f32.mrb[0].mxu0
      %v847 = vadd.f32 0.0, %v846
      %v848 = vpop.f32.mrb[0].mxu0
      %v849 = vadd.f32 0.0, %v848
      %850 = vmatprep.mubr.f32.mxu0 %v562
      %851 = vmatmul.mubr.f32.gmra.mrb[0].mxu0 %v560
      %v852 = vpop.f32.mrb[0].mxu0
      %v853 = vadd.f32 0.0, %v852
      %v854 = vpop.f32.mrb[0].mxu0
      %v855 = vadd.f32 0.0, %v854
      %856 = vmatprep.mubr.f32.mxu0 %v563
      %857 = vmatmul.mubr.f32.gmra.mrb[0].mxu0 %v561
      %v858 = vpop.f32.mrb[0].mxu0
      %v859 = vadd.f32 0.0, %v858
      %v860 = vpop.f32.mrb[0].mxu0
      %v861 = vadd.f32 0.0, %v860
      %862 = vmatprep.mubr.f32.mxu0 %v564
      %863 = vmatmul.mubr.f32.gmra.mrb[0].mxu0 %v562
      %v864 = vpop.f32.mrb[0].mxu0
      %v865 = vadd.f32 0.0, %v864
      %v866 = vpop.f32.mrb[0].mxu0
      %v867 = vadd.f32 0.0, %v866
      %868 = vmatprep.mubr.f32.mxu0 %v565
      %869 = vmatmul.mubr.f32.gmra.mrb[0].mxu0 %v563
      %v870 = vpop.f32.mrb[0].mxu0
      %v871 = vadd.f32 0.0, %v870
      %v872 = vpop.f32.mrb[0].mxu0
      %v873 = vadd.f32 0.0, %v872
      %874 = vmatprep.mubr.f32.mxu0 %v566
      %875 = vmatmul.mubr.f32.gmra.mrb[0].mxu0 %v564
      %v876 = vpop.f32.mrb[0].mxu0
      %v877 = vadd.f32 0.0, %v876
      %v878 = vpop.f32.mrb[0].mxu0
      %v879 = vadd.f32 0.0, %v878
      %880 = vmatprep.mubr.f32.mxu0 %v567
      %881 = vmatmul.mubr.f32.gmra.mrb[0].mxu0 %v565
      %v882 = vpop.f32.mrb[0].mxu0
      %v883 = vadd.f32 0.0, %v882
      %v884 = vpop.f32.mrb[0].mxu0
      %v885 = vadd.f32 0.0, %v884
      %886 = vmatprep.mubr.f32.mxu0 %v568
      %887 = vmatmul.mubr.f32.gmra.mrb[0].mxu0 %v566
      %v888 = vpop.f32.mrb[0].mxu0
      %v889 = vadd.f32 0.0, %v888
      %v890 = vpop.f32.mrb[0].mxu0
      %v891 = vadd.f32 0.0, %v890
      %892 = vmatprep.mubr.f32.mxu0 %v569
      %893 = vmatmul.mubr.f32.gmra.mrb[0].mxu0 %v567
      %v894 = vpop.f32.mrb[0].mxu0
      %v895 = vadd.f32 0.0, %v894
      %v896 = vpop.f32.mrb[0].mxu0
      %v897 = vadd.f32 0.0, %v896
      %898 = vmatprep.mubr.f32.mxu0 %v570
      %899 = vmatmul.mubr.f32.gmra.mrb[0].mxu0 %v568
      %v900 = vpop.f32.mrb[0].mxu0
      %v901 = vadd.f32 0.0, %v900
      %v902 = vpop.f32.mrb[0].mxu0
      %v903 = vadd.f32 0.0, %v902
      %904 = vmatprep.mubr.f32.mxu0 %v571
      %905 = vmatmul.mubr.f32.gmra.mrb[0].mxu0 %v569
      %v906 = vpop.f32.mrb[0].mxu0
      %v907 = vadd.f32 0.0, %v906
      %v908 = vpop.f32.mrb[0].mxu0
      %v909 = vadd.f32 0.0, %v908
      %910 = vmatprep.mubr.f32.mxu0 %v572
      %911 = vmatmul.mubr.f32.gmra.mrb[0].mxu0 %v570
      %v912 = vpop.f32.mrb[0].mxu0
      %v913 = vadd.f32 0.0, %v912
      %v914 = vpop.f32.mrb[0].mxu0
      %v915 = vadd.f32 0.0, %v914
      %916 = vmatprep.mubr.f32.mxu0 %v573
      %917 = vmatmul.mubr.f32.gmra.mrb[0].mxu0 %v571
      %v918 = vpop.f32.mrb[0].mxu0
      %v919 = vadd.f32 0.0, %v918
      %v920 = vpop.f32.mrb[0].mxu0
      %v921 = vadd.f32 0.0, %v920
      %922 = vmatprep.mubr.f32.mxu0 %v574
      %923 = vmatmul.mubr.f32.gmra.mrb[0].mxu0 %v572
      %v924 = vpop.f32.mrb[0].mxu0
      %v925 = vadd.f32 0.0, %v924
      %v926 = vpop.f32.mrb[0].mxu0
      %v927 = vadd.f32 0.0, %v926
      %928 = vmatprep.mubr.f32.mxu0 %v575
      %929 = vmatmul.mubr.f32.gmra.mrb[0].mxu0 %v573
      %v930 = vpop.f32.mrb[0].mxu0
      %v931 = vadd.f32 0.0, %v930
      %v932 = vpop.f32.mrb[0].mxu0
      %v933 = vadd.f32 0.0, %v932
      %934 = vmatprep.mubr.f32.mxu0 %v576
      %935 = vmatmul.mubr.f32.gmra.mrb[0].mxu0 %v574
      %v936 = vpop.f32.mrb[0].mxu0
      %v937 = vadd.f32 0.0, %v936
      %v938 = vpop.f32.mrb[0].mxu0
      %v939 = vadd.f32 0.0, %v938
      %940 = vmatprep.mubr.f32.mxu0 %v577
      %941 = vmatmul.mubr.f32.gmra.mrb[0].mxu0 %v575
      %v942 = vpop.f32.mrb[0].mxu0
      %v943 = vadd.f32 0.0, %v942
      %v944 = vpop.f32.mrb[0].mxu0
      %v945 = vadd.f32 0.0, %v944
      %946 = vmatprep.mubr.f32.mxu0 %v578
      %947 = vmatmul.mubr.f32.gmra.mrb[0].mxu0 %v576
      %v948 = vpop.f32.mrb[0].mxu0
      %v949 = vadd.f32 0.0, %v948
      %v950 = vpop.f32.mrb[0].mxu0
      %v951 = vadd.f32 0.0, %v950
      %952 = vmatprep.mubr.f32.mxu0 %v579
      %953 = vmatmul.mubr.f32.gmra.mrb[0].mxu0 %v577
      %v954 = vpop.f32.mrb[0].mxu0
      %v955 = vadd.f32 0.0, %v954
      %v956 = vpop.f32.mrb[0].mxu0
      %v957 = vadd.f32 0.0, %v956
      %958 = vmatprep.mubr.f32.mxu0 %v580
      %959 = vmatmul.mubr.f32.gmra.mrb[0].mxu0 %v578
      %v960 = vpop.f32.mrb[0].mxu0
      %v961 = vadd.f32 0.0, %v960
      %v962 = vpop.f32.mrb[0].mxu0
      %v963 = vadd.f32 0.0, %v962
      %964 = vmatprep.mubr.f32.mxu0 %v581
      %965 = vmatmul.mubr.f32.gmra.mrb[0].mxu0 %v579
      %v966 = vpop.f32.mrb[0].mxu0
      %v967 = vadd.f32 0.0, %v966
      %v968 = vpop.f32.mrb[0].mxu0
      %v969 = vadd.f32 0.0, %v968
      %970 = vmatprep.mubr.f32.mxu0 %v582
      %971 = vmatmul.mubr.f32.gmra.mrb[0].mxu0 %v580
      %v972 = vpop.f32.mrb[0].mxu0
      %v973 = vadd.f32 0.0, %v972
      %v974 = vpop.f32.mrb[0].mxu0
      %v975 = vadd.f32 0.0, %v974
      %976 = vmatprep.mubr.f32.mxu0 %v583
      %977 = vmatmul.mubr.f32.gmra.mrb[0].mxu0 %v581
      %v978 = vpop.f32.mrb[0].mxu0
      %v979 = vadd.f32 0.0, %v978
      %v980 = vpop.f32.mrb[0].mxu0
      %v981 = vadd.f32 0.0, %v980
      %982 = vmatprep.mubr.f32.mxu0 %v584
      %983 = vmatmul.mubr.f32.gmra.mrb[0].mxu0 %v582
      %v984 = vpop.f32.mrb[0].mxu0
      %v985 = vadd.f32 0.0, %v984
      %v986 = vpop.f32.mrb[0].mxu0
      %v987 = vadd.f32 0.0, %v986
      %988 = vmatprep.mubr.f32.mxu0 %v585
      %989 = vmatmul.mubr.f32.gmra.mrb[0].mxu0 %v583
      %v990 = vpop.f32.mrb[0].mxu0
      %v991 = vadd.f32 0.0, %v990
      %v992 = vpop.f32.mrb[0].mxu0
      %v993 = vadd.f32 0.0, %v992
      %994 = vmatprep.mubr.f32.mxu0 %v586
      %995 = vmatmul.mubr.f32.gmra.mrb[0].mxu0 %v584
      %v996 = vpop.f32.mrb[0].mxu0
      %v997 = vadd.f32 0.0, %v996
      %v998 = vpop.f32.mrb[0].mxu0
      %v999 = vadd.f32 0.0, %v998
      %1000 = vdwg.mxu0
      %1001 = vmatprep.subr.mxu0 %v697
      %1002 = vmatpush1.msra.mxu0 %v696
      %1003 = vmatprep.subr.mxu0 %v700
      %1004 = vmatpush1.msra.mxu0 %v699
      %1005 = vmatprep.subr.mxu0 %v703
      %1006 = vmatpush1.msra.mxu0 %v702
      %1007 = vmatprep.subr.mxu0 %v706
      %1008 = vmatpush1.msra.mxu0 %v705
      %1009 = vmatprep.subr.mxu0 %v709
      %1010 = vmatpush1.msra.mxu0 %v708
      %1011 = vmatprep.subr.mxu0 %v712
      %1012 = vmatpush1.msra.mxu0 %v711
      %1013 = vmatprep.subr.mxu0 %v715
      %1014 = vmatpush1.msra.mxu0 %v714
      %1015 = vmatprep.subr.mxu0 %v718
      %1016 = vmatpush1.msra.mxu0 %v717
      %1017 = vmatprep.subr.mxu0 %v721
      %1018 = vmatpush1.msra.mxu0 %v720
      %1019 = vmatprep.subr.mxu0 %v724
      %1020 = vmatpush1.msra.mxu0 %v723
      %1021 = vmatprep.subr.mxu0 %v727
      %1022 = vmatpush1.msra.mxu0 %v726
      %1023 = vmatprep.subr.mxu0 %v730
      %1024 = vmatpush1.msra.mxu0 %v729
      %1025 = vmatprep.subr.mxu0 %v733
      %1026 = vmatpush1.msra.mxu0 %v732
      %1027 = vmatprep.subr.mxu0 %v736
      %1028 = vmatpush1.msra.mxu0 %v735
      %1029 = vmatprep.subr.mxu0 %v739
      %1030 = vmatpush1.msra.mxu0 %v738
      %1031 = vmatprep.subr.mxu0 %v742
      %1032 = vmatpush1.msra.mxu0 %v741
      %1033 = vmatprep.subr.mxu0 0.0
      %1034 = vmatpush1.msra.mxu0 0.0
      %1035 = vmatprep.subr.mxu0 0.0
      %1036 = vmatpush1.msra.mxu0 0.0
      %1037 = vmatprep.subr.mxu0 0.0
      %1038 = vmatpush1.msra.mxu0 0.0
      %1039 = vmatprep.subr.mxu0 0.0
      %1040 = vmatpush1.msra.mxu0 0.0
      %1041 = vmatprep.subr.mxu0 0.0
      %1042 = vmatpush1.msra.mxu0 0.0
      %1043 = vmatprep.subr.mxu0 0.0
      %1044 = vmatpush1.msra.mxu0 0.0
      %1045 = vmatprep.subr.mxu0 0.0
      %1046 = vmatpush1.msra.mxu0 0.0
      %1047 = vmatprep.subr.mxu0 0.0
      %1048 = vmatpush1.msra.mxu0 0.0
      %1049 = vmatprep.subr.mxu0 0.0
      %1050 = vmatpush1.msra.mxu0 0.0
      %1051 = vmatprep.subr.mxu0 0.0
      %1052 = vmatpush1.msra.mxu0 0.0
      %1053 = vmatprep.subr.mxu0 0.0
      %1054 = vmatpush1.msra.mxu0 0.0
      %1055 = vmatprep.subr.mxu0 0.0
      %1056 = vmatpush1.msra.mxu0 0.0
      %1057 = vmatprep.subr.mxu0 0.0
      %1058 = vmatpush1.msra.mxu0 0.0
      %1059 = vmatprep.subr.mxu0 0.0
      %1060 = vmatpush1.msra.mxu0 0.0
      %1061 = vmatprep.subr.mxu0 0.0
      %1062 = vmatpush1.msra.mxu0 0.0
      %1063 = vmatprep.subr.mxu0 0.0
      %1064 = vmatpush1.msra.mxu0 0.0
      %1065 = vmatprep.mubr.f32.mxu0 0.0
      %1066 = vmatmul.mubr.f32.gmra.mrb[0].mxu0 %v557
      %v1067 = vpop.f32.mrb[0].mxu0
      %v1068 = vadd.f32 %v811, %v1067
      %v1069 = vpop.f32.mrb[0].mxu0
      %v1070 = vadd.f32 %v813, %v1069
      %1071 = vmatprep.mubr.f32.mxu0 0.0
      %1072 = vmatmul.mubr.f32.gmra.mrb[0].mxu0 %v558
      %v1073 = vpop.f32.mrb[0].mxu0
      %v1074 = vadd.f32 %v817, %v1073
      %v1075 = vpop.f32.mrb[0].mxu0
      %v1076 = vadd.f32 %v819, %v1075
      %1077 = vmatprep.mubr.f32.mxu0 0.0
      %1078 = vmatmul.mubr.f32.gmra.mrb[0].mxu0 %v559
      %v1079 = vpop.f32.mrb[0].mxu0
      %v1080 = vadd.f32 %v823, %v1079
      %v1081 = vpop.f32.mrb[0].mxu0
      %v1082 = vadd.f32 %v825, %v1081
      %1083 = vmatprep.mubr.f32.mxu0 0.0
      %1084 = vmatmul.mubr.f32.gmra.mrb[0].mxu0 %v560
      %v1085 = vpop.f32.mrb[0].mxu0
      %v1086 = vadd.f32 %v829, %v1085
      %v1087 = vpop.f32.mrb[0].mxu0
      %v1088 = vadd.f32 %v831, %v1087
      %1089 = vmatprep.mubr.f32.mxu0 0.0
      %1090 = vmatmul.mubr.f32.gmra.mrb[0].mxu0 %v561
      %v1091 = vpop.f32.mrb[0].mxu0
      %v1092 = vadd.f32 %v835, %v1091
      %v1093 = vpop.f32.mrb[0].mxu0
      %v1094 = vadd.f32 %v837, %v1093
      %1095 = vmatprep.mubr.f32.mxu0 0.0
      %1096 = vmatmul.mubr.f32.gmra.mrb[0].mxu0 %v562
      %v1097 = vpop.f32.mrb[0].mxu0
      %v1098 = vadd.f32 %v841, %v1097
      %v1099 = vpop.f32.mrb[0].mxu0
      %v1100 = vadd.f32 %v843, %v1099
      %1101 = vmatprep.mubr.f32.mxu0 0.0
      %1102 = vmatmul.mubr.f32.gmra.mrb[0].mxu0 %v563
      %v1103 = vpop.f32.mrb[0].mxu0
      %v1104 = vadd.f32 %v847, %v1103
      %v1105 = vpop.f32.mrb[0].mxu0
      %v1106 = vadd.f32 %v849, %v1105
      %1107 = vmatprep.mubr.f32.mxu0 0.0
      %1108 = vmatmul.mubr.f32.gmra.mrb[0].mxu0 %v564
      %v1109 = vpop.f32.mrb[0].mxu0
      %v1110 = vadd.f32 %v853, %v1109
      %v1111 = vpop.f32.mrb[0].mxu0
      %v1112 = vadd.f32 %v855, %v1111
      %1113 = vmatprep.mubr.f32.mxu0 0.0
      %1114 = vmatmul.mubr.f32.gmra.mrb[0].mxu0 %v565
      %v1115 = vpop.f32.mrb[0].mxu0
      %v1116 = vadd.f32 %v859, %v1115
      %v1117 = vpop.f32.mrb[0].mxu0
      %v1118 = vadd.f32 %v861, %v1117
      %1119 = vmatprep.mubr.f32.mxu0 0.0
      %1120 = vmatmul.mubr.f32.gmra.mrb[0].mxu0 %v566
      %v1121 = vpop.f32.mrb[0].mxu0
      %v1122 = vadd.f32 %v865, %v1121
      %v1123 = vpop.f32.mrb[0].mxu0
      %v1124 = vadd.f32 %v867, %v1123
      %1125 = vmatprep.mubr.f32.mxu0 0.0
      %1126 = vmatmul.mubr.f32.gmra.mrb[0].mxu0 %v567
      %v1127 = vpop.f32.mrb[0].mxu0
      %v1128 = vadd.f32 %v871, %v1127
      %v1129 = vpop.f32.mrb[0].mxu0
      %v1130 = vadd.f32 %v873, %v1129
      %1131 = vmatprep.mubr.f32.mxu0 0.0
      %1132 = vmatmul.mubr.f32.gmra.mrb[0].mxu0 %v568
      %v1133 = vpop.f32.mrb[0].mxu0
      %v1134 = vadd.f32 %v877, %v1133
      %v1135 = vpop.f32.mrb[0].mxu0
      %v1136 = vadd.f32 %v879, %v1135
      %1137 = vmatprep.mubr.f32.mxu0 0.0
      %1138 = vmatmul.mubr.f32.gmra.mrb[0].mxu0 %v569
      %v1139 = vpop.f32.mrb[0].mxu0
      %v1140 = vadd.f32 %v883, %v1139
      %v1141 = vpop.f32.mrb[0].mxu0
      %v1142 = vadd.f32 %v885, %v1141
      %1143 = vmatprep.mubr.f32.mxu0 0.0
      %1144 = vmatmul.mubr.f32.gmra.mrb[0].mxu0 %v570
      %v1145 = vpop.f32.mrb[0].mxu0
      %v1146 = vadd.f32 %v889, %v1145
      %v1147 = vpop.f32.mrb[0].mxu0
      %v1148 = vadd.f32 %v891, %v1147
      %1149 = vmatprep.mubr.f32.mxu0 0.0
      %1150 = vmatmul.mubr.f32.gmra.mrb[0].mxu0 %v571
      %v1151 = vpop.f32.mrb[0].mxu0
      %v1152 = vadd.f32 %v895, %v1151
      %v1153 = vpop.f32.mrb[0].mxu0
      %v1154 = vadd.f32 %v897, %v1153
      %1155 = vmatprep.mubr.f32.mxu0 0.0
      %1156 = vmatmul.mubr.f32.gmra.mrb[0].mxu0 %v572
      %v1157 = vpop.f32.mrb[0].mxu0
      %v1158 = vadd.f32 %v901, %v1157
      %v1159 = vpop.f32.mrb[0].mxu0
      %v1160 = vadd.f32 %v903, %v1159
      %1161 = vmatprep.mubr.f32.mxu0 0.0
      %1162 = vmatmul.mubr.f32.gmra.mrb[0].mxu0 %v573
      %v1163 = vpop.f32.mrb[0].mxu0
      %v1164 = vadd.f32 %v907, %v1163
      %v1165 = vpop.f32.mrb[0].mxu0
      %v1166 = vadd.f32 %v909, %v1165
      %1167 = vmatprep.mubr.f32.mxu0 0.0
      %1168 = vmatmul.mubr.f32.gmra.mrb[0].mxu0 %v574
      %v1169 = vpop.f32.mrb[0].mxu0
      %v1170 = vadd.f32 %v913, %v1169
      %v1171 = vpop.f32.mrb[0].mxu0
      %v1172 = vadd.f32 %v915, %v1171
      %1173 = vmatprep.mubr.f32.mxu0 0.0
      %1174 = vmatmul.mubr.f32.gmra.mrb[0].mxu0 %v575
      %v1175 = vpop.f32.mrb[0].mxu0
      %v1176 = vadd.f32 %v919, %v1175
      %v1177 = vpop.f32.mrb[0].mxu0
      %v1178 = vadd.f32 %v921, %v1177
      %1179 = vmatprep.mubr.f32.mxu0 0.0
      %1180 = vmatmul.mubr.f32.gmra.mrb[0].mxu0 %v576
      %v1181 = vpop.f32.mrb[0].mxu0
      %v1182 = vadd.f32 %v925, %v1181
      %v1183 = vpop.f32.mrb[0].mxu0
      %v1184 = vadd.f32 %v927, %v1183
      %1185 = vmatprep.mubr.f32.mxu0 0.0
      %1186 = vmatmul.mubr.f32.gmra.mrb[0].mxu0 %v577
      %v1187 = vpop.f32.mrb[0].mxu0
      %v1188 = vadd.f32 %v931, %v1187
      %v1189 = vpop.f32.mrb[0].mxu0
      %v1190 = vadd.f32 %v933, %v1189
      %1191 = vmatprep.mubr.f32.mxu0 0.0
      %1192 = vmatmul.mubr.f32.gmra.mrb[0].mxu0 %v578
      %v1193 = vpop.f32.mrb[0].mxu0
      %v1194 = vadd.f32 %v937, %v1193
      %v1195 = vpop.f32.mrb[0].mxu0
      %v1196 = vadd.f32 %v939, %v1195
      %1197 = vmatprep.mubr.f32.mxu0 0.0
      %1198 = vmatmul.mubr.f32.gmra.mrb[0].mxu0 %v579
      %v1199 = vpop.f32.mrb[0].mxu0
      %v1200 = vadd.f32 %v943, %v1199
      %v1201 = vpop.f32.mrb[0].mxu0
      %v1202 = vadd.f32 %v945, %v1201
      %1203 = vmatprep.mubr.f32.mxu0 0.0
      %1204 = vmatmul.mubr.f32.gmra.mrb[0].mxu0 %v580
      %v1205 = vpop.f32.mrb[0].mxu0
      %v1206 = vadd.f32 %v949, %v1205
      %v1207 = vpop.f32.mrb[0].mxu0
      %v1208 = vadd.f32 %v951, %v1207
      %1209 = vmatprep.mubr.f32.mxu0 0.0
      %1210 = vmatmul.mubr.f32.gmra.mrb[0].mxu0 %v581
      %v1211 = vpop.f32.mrb[0].mxu0
      %v1212 = vadd.f32 %v955, %v1211
      %v1213 = vpop.f32.mrb[0].mxu0
      %v1214 = vadd.f32 %v957, %v1213
      %1215 = vmatprep.mubr.f32.mxu0 0.0
      %1216 = vmatmul.mubr.f32.gmra.mrb[0].mxu0 %v582
      %v1217 = vpop.f32.mrb[0].mxu0
      %v1218 = vadd.f32 %v961, %v1217
      %v1219 = vpop.f32.mrb[0].mxu0
      %v1220 = vadd.f32 %v963, %v1219
      %1221 = vmatprep.mubr.f32.mxu0 0.0
      %1222 = vmatmul.mubr.f32.gmra.mrb[0].mxu0 %v583
      %v1223 = vpop.f32.mrb[0].mxu0
      %v1224 = vadd.f32 %v967, %v1223
      %v1225 = vpop.f32.mrb[0].mxu0
      %v1226 = vadd.f32 %v969, %v1225
      %1227 = vmatprep.mubr.f32.mxu0 0.0
      %1228 = vmatmul.mubr.f32.gmra.mrb[0].mxu0 %v584
      %v1229 = vpop.f32.mrb[0].mxu0
      %v1230 = vadd.f32 %v973, %v1229
      %v1231 = vpop.f32.mrb[0].mxu0
      %v1232 = vadd.f32 %v975, %v1231
      %1233 = vmatprep.mubr.f32.mxu0 0.0
      %1234 = vmatmul.mubr.f32.gmra.mrb[0].mxu0 %v585
      %v1235 = vpop.f32.mrb[0].mxu0
      %v1236 = vadd.f32 %v979, %v1235
      %v1237 = vpop.f32.mrb[0].mxu0
      %v1238 = vadd.f32 %v981, %v1237
      %1239 = vmatprep.mubr.f32.mxu0 0.0
      %1240 = vmatmul.mubr.f32.gmra.mrb[0].mxu0 %v586
      %v1241 = vpop.f32.mrb[0].mxu0
      %v1242 = vadd.f32 %v985, %v1241
      %v1243 = vpop.f32.mrb[0].mxu0
      %v1244 = vadd.f32 %v987, %v1243
      %1245 = vmatprep.mubr.f32.mxu0 0.0
      %1246 = vmatmul.mubr.f32.gmra.mrb[0].mxu0 %v598
      %v1247 = vpop.f32.mrb[0].mxu0
      %v1248 = vadd.f32 %v991, %v1247
      %v1249 = vpop.f32.mrb[0].mxu0
      %v1250 = vadd.f32 %v993, %v1249
      %1251 = vmatprep.mubr.f32.mxu0 0.0
      %1252 = vmatmul.mubr.f32.gmra.mrb[0].mxu0 %v599
      %v1253 = vpop.f32.mrb[0].mxu0
      %v1254 = vadd.f32 %v997, %v1253
      %v1255 = vpop.f32.mrb[0].mxu0
      %v1256 = vadd.f32 %v999, %v1255
      %1257 = vdwg.mxu0
      %1258 = vmatprep.subr.mxu0 0.0
      %1259 = vmatpush1.msra.mxu0 %v602
      %1260 = vmatprep.subr.mxu0 0.0
      %1261 = vmatpush1.msra.mxu0 %v605
      %1262 = vmatprep.subr.mxu0 0.0
      %1263 = vmatpush1.msra.mxu0 %v608
      %1264 = vmatprep.subr.mxu0 0.0
      %1265 = vmatpush1.msra.mxu0 %v611
      %1266 = vmatprep.subr.mxu0 0.0
      %1267 = vmatpush1.msra.mxu0 %v614
      %1268 = vmatprep.subr.mxu0 0.0
      %1269 = vmatpush1.msra.mxu0 %v617
      %1270 = vmatprep.subr.mxu0 0.0
      %1271 = vmatpush1.msra.mxu0 %v620
      %1272 = vmatprep.subr.mxu0 0.0
      %1273 = vmatpush1.msra.mxu0 %v623
      %1274 = vmatprep.subr.mxu0 0.0
      %1275 = vmatpush1.msra.mxu0 %v626
      %1276 = vmatprep.subr.mxu0 0.0
      %1277 = vmatpush1.msra.mxu0 %v629
      %1278 = vmatprep.subr.mxu0 0.0
      %1279 = vmatpush1.msra.mxu0 %v632
      %1280 = vmatprep.subr.mxu0 0.0
      %1281 = vmatpush1.msra.mxu0 %v635
      %1282 = vmatprep.subr.mxu0 0.0
      %1283 = vmatpush1.msra.mxu0 %v638
      %1284 = vmatprep.subr.mxu0 0.0
      %1285 = vmatpush1.msra.mxu0 %v641
      %1286 = vmatprep.subr.mxu0 0.0
      %1287 = vmatpush1.msra.mxu0 %v644
      %1288 = vmatprep.subr.mxu0 0.0
      %1289 = vmatpush1.msra.mxu0 %v647
      %1290 = vmatprep.subr.mxu0 0.0
      %1291 = vmatpush1.msra.mxu0 %v650
      %1292 = vmatprep.subr.mxu0 0.0
      %1293 = vmatpush1.msra.mxu0 %v653
      %1294 = vmatprep.subr.mxu0 0.0
      %1295 = vmatpush1.msra.mxu0 %v656
      %1296 = vmatprep.subr.mxu0 0.0
      %1297 = vmatpush1.msra.mxu0 %v659
      %1298 = vmatprep.subr.mxu0 0.0
      %1299 = vmatpush1.msra.mxu0 %v662
      %1300 = vmatprep.subr.mxu0 0.0
      %1301 = vmatpush1.msra.mxu0 %v665
      %1302 = vmatprep.subr.mxu0 0.0
      %1303 = vmatpush1.msra.mxu0 %v668
      %1304 = vmatprep.subr.mxu0 0.0
      %1305 = vmatpush1.msra.mxu0 %v671
      %1306 = vmatprep.subr.mxu0 0.0
      %1307 = vmatpush1.msra.mxu0 %v674
      %1308 = vmatprep.subr.mxu0 0.0
      %1309 = vmatpush1.msra.mxu0 %v677
      %1310 = vmatprep.subr.mxu0 0.0
      %1311 = vmatpush1.msra.mxu0 %v680
      %1312 = vmatprep.subr.mxu0 0.0
      %1313 = vmatpush1.msra.mxu0 %v683
      %1314 = vmatprep.subr.mxu0 0.0
      %1315 = vmatpush1.msra.mxu0 %v686
      %1316 = vmatprep.subr.mxu0 0.0
      %1317 = vmatpush1.msra.mxu0 %v689
      %1318 = vmatprep.subr.mxu0 0.0
      %1319 = vmatpush1.msra.mxu0 %v692
      %1320 = vmatprep.subr.mxu0 0.0
      %1321 = vmatpush1.msra.mxu0 %v695
      %1322 = vmatprep.mubr.f32.mxu0 %v555
      %1323 = vmatmul.mubr.f32.gmra.mrb[0].mxu0 %v489
      %v1324 = vpop.f32.mrb[0].mxu0
      %v1325 = vadd.f32 0.0, %v1324
      %v1326 = vpop.f32.mrb[0].mxu0
      %1327 = vmatprep.mubr.f32.mxu0 %v556
      %1328 = vmatmul.mubr.f32.gmra.mrb[0].mxu0 %v490
      %v1329 = vpop.f32.mrb[0].mxu0
      %v1330 = vadd.f32 0.0, %v1329
      %v1331 = vpop.f32.mrb[0].mxu0
      %1332 = vmatprep.mubr.f32.mxu0 %v557
      %1333 = vmatmul.mubr.f32.gmra.mrb[0].mxu0 %v555
      %v1334 = vpop.f32.mrb[0].mxu0
      %v1335 = vadd.f32 0.0, %v1334
      %v1336 = vpop.f32.mrb[0].mxu0
      %1337 = vmatprep.mubr.f32.mxu0 %v558
      %1338 = vmatmul.mubr.f32.gmra.mrb[0].mxu0 %v556
      %v1339 = vpop.f32.mrb[0].mxu0
      %v1340 = vadd.f32 0.0, %v1339
      %v1341 = vpop.f32.mrb[0].mxu0
      %1342 = vmatprep.mubr.f32.mxu0 %v559
      %1343 = vmatmul.mubr.f32.gmra.mrb[0].mxu0 %v557
      %v1344 = vpop.f32.mrb[0].mxu0
      %v1345 = vadd.f32 0.0, %v1344
      %v1346 = vpop.f32.mrb[0].mxu0
      %1347 = vmatprep.mubr.f32.mxu0 %v560
      %1348 = vmatmul.mubr.f32.gmra.mrb[0].mxu0 %v558
      %v1349 = vpop.f32.mrb[0].mxu0
      %v1350 = vadd.f32 0.0, %v1349
      %v1351 = vpop.f32.mrb[0].mxu0
      %1352 = vmatprep.mubr.f32.mxu0 %v561
      %1353 = vmatmul.mubr.f32.gmra.mrb[0].mxu0 %v559
      %v1354 = vpop.f32.mrb[0].mxu0
      %v1355 = vadd.f32 0.0, %v1354
      %v1356 = vpop.f32.mrb[0].mxu0
      %1357 = vmatprep.mubr.f32.mxu0 %v562
      %1358 = vmatmul.mubr.f32.gmra.mrb[0].mxu0 %v560
      %v1359 = vpop.f32.mrb[0].mxu0
      %v1360 = vadd.f32 0.0, %v1359
      %v1361 = vpop.f32.mrb[0].mxu0
      %1362 = vmatprep.mubr.f32.mxu0 %v563
      %1363 = vmatmul.mubr.f32.gmra.mrb[0].mxu0 %v561
      %v1364 = vpop.f32.mrb[0].mxu0
      %v1365 = vadd.f32 0.0, %v1364
      %v1366 = vpop.f32.mrb[0].mxu0
      %1367 = vmatprep.mubr.f32.mxu0 %v564
      %1368 = vmatmul.mubr.f32.gmra.mrb[0].mxu0 %v562
      %v1369 = vpop.f32.mrb[0].mxu0
      %v1370 = vadd.f32 0.0, %v1369
      %v1371 = vpop.f32.mrb[0].mxu0
      %1372 = vmatprep.mubr.f32.mxu0 %v565
      %1373 = vmatmul.mubr.f32.gmra.mrb[0].mxu0 %v563
      %v1374 = vpop.f32.mrb[0].mxu0
      %v1375 = vadd.f32 0.0, %v1374
      %v1376 = vpop.f32.mrb[0].mxu0
      %1377 = vmatprep.mubr.f32.mxu0 %v566
      %1378 = vmatmul.mubr.f32.gmra.mrb[0].mxu0 %v564
      %v1379 = vpop.f32.mrb[0].mxu0
      %v1380 = vadd.f32 0.0, %v1379
      %v1381 = vpop.f32.mrb[0].mxu0
      %1382 = vmatprep.mubr.f32.mxu0 %v567
      %1383 = vmatmul.mubr.f32.gmra.mrb[0].mxu0 %v565
      %v1384 = vpop.f32.mrb[0].mxu0
      %v1385 = vadd.f32 0.0, %v1384
      %v1386 = vpop.f32.mrb[0].mxu0
      %1387 = vmatprep.mubr.f32.mxu0 %v568
      %1388 = vmatmul.mubr.f32.gmra.mrb[0].mxu0 %v566
      %v1389 = vpop.f32.mrb[0].mxu0
      %v1390 = vadd.f32 0.0, %v1389
      %v1391 = vpop.f32.mrb[0].mxu0
      %1392 = vmatprep.mubr.f32.mxu0 %v569
      %1393 = vmatmul.mubr.f32.gmra.mrb[0].mxu0 %v567
      %v1394 = vpop.f32.mrb[0].mxu0
      %v1395 = vadd.f32 0.0, %v1394
      %v1396 = vpop.f32.mrb[0].mxu0
      %1397 = vmatprep.mubr.f32.mxu0 %v570
      %1398 = vmatmul.mubr.f32.gmra.mrb[0].mxu0 %v568
      %v1399 = vpop.f32.mrb[0].mxu0
      %v1400 = vadd.f32 0.0, %v1399
      %v1401 = vpop.f32.mrb[0].mxu0
      %1402 = vmatprep.mubr.f32.mxu0 %v571
      %1403 = vmatmul.mubr.f32.gmra.mrb[0].mxu0 %v569
      %v1404 = vpop.f32.mrb[0].mxu0
      %v1405 = vadd.f32 0.0, %v1404
      %v1406 = vpop.f32.mrb[0].mxu0
      %1407 = vmatprep.mubr.f32.mxu0 %v572
      %1408 = vmatmul.mubr.f32.gmra.mrb[0].mxu0 %v570
      %v1409 = vpop.f32.mrb[0].mxu0
      %v1410 = vadd.f32 0.0, %v1409
      %v1411 = vpop.f32.mrb[0].mxu0
      %1412 = vmatprep.mubr.f32.mxu0 %v573
      %1413 = vmatmul.mubr.f32.gmra.mrb[0].mxu0 %v571
      %v1414 = vpop.f32.mrb[0].mxu0
      %v1415 = vadd.f32 0.0, %v1414
      %v1416 = vpop.f32.mrb[0].mxu0
      %1417 = vmatprep.mubr.f32.mxu0 %v574
      %1418 = vmatmul.mubr.f32.gmra.mrb[0].mxu0 %v572
      %v1419 = vpop.f32.mrb[0].mxu0
      %v1420 = vadd.f32 0.0, %v1419
      %v1421 = vpop.f32.mrb[0].mxu0
      %1422 = vmatprep.mubr.f32.mxu0 %v575
      %1423 = vmatmul.mubr.f32.gmra.mrb[0].mxu0 %v573
      %v1424 = vpop.f32.mrb[0].mxu0
      %v1425 = vadd.f32 0.0, %v1424
      %v1426 = vpop.f32.mrb[0].mxu0
      %1427 = vmatprep.mubr.f32.mxu0 %v576
      %1428 = vmatmul.mubr.f32.gmra.mrb[0].mxu0 %v574
      %v1429 = vpop.f32.mrb[0].mxu0
      %v1430 = vadd.f32 0.0, %v1429
      %v1431 = vpop.f32.mrb[0].mxu0
      %1432 = vmatprep.mubr.f32.mxu0 %v577
      %1433 = vmatmul.mubr.f32.gmra.mrb[0].mxu0 %v575
      %v1434 = vpop.f32.mrb[0].mxu0
      %v1435 = vadd.f32 0.0, %v1434
      %v1436 = vpop.f32.mrb[0].mxu0
      %1437 = vmatprep.mubr.f32.mxu0 %v578
      %1438 = vmatmul.mubr.f32.gmra.mrb[0].mxu0 %v576
      %v1439 = vpop.f32.mrb[0].mxu0
      %v1440 = vadd.f32 0.0, %v1439
      %v1441 = vpop.f32.mrb[0].mxu0
      %1442 = vmatprep.mubr.f32.mxu0 %v579
      %1443 = vmatmul.mubr.f32.gmra.mrb[0].mxu0 %v577
      %v1444 = vpop.f32.mrb[0].mxu0
      %v1445 = vadd.f32 0.0, %v1444
      %v1446 = vpop.f32.mrb[0].mxu0
      %1447 = vmatprep.mubr.f32.mxu0 %v580
      %1448 = vmatmul.mubr.f32.gmra.mrb[0].mxu0 %v578
      %v1449 = vpop.f32.mrb[0].mxu0
      %v1450 = vadd.f32 0.0, %v1449
      %v1451 = vpop.f32.mrb[0].mxu0
      %1452 = vmatprep.mubr.f32.mxu0 %v581
      %1453 = vmatmul.mubr.f32.gmra.mrb[0].mxu0 %v579
      %v1454 = vpop.f32.mrb[0].mxu0
      %v1455 = vadd.f32 0.0, %v1454
      %v1456 = vpop.f32.mrb[0].mxu0
      %1457 = vmatprep.mubr.f32.mxu0 %v582
      %1458 = vmatmul.mubr.f32.gmra.mrb[0].mxu0 %v580
      %v1459 = vpop.f32.mrb[0].mxu0
      %v1460 = vadd.f32 0.0, %v1459
      %v1461 = vpop.f32.mrb[0].mxu0
      %1462 = vmatprep.mubr.f32.mxu0 %v583
      %1463 = vmatmul.mubr.f32.gmra.mrb[0].mxu0 %v581
      %v1464 = vpop.f32.mrb[0].mxu0
      %v1465 = vadd.f32 0.0, %v1464
      %v1466 = vpop.f32.mrb[0].mxu0
      %1467 = vmatprep.mubr.f32.mxu0 %v584
      %1468 = vmatmul.mubr.f32.gmra.mrb[0].mxu0 %v582
      %v1469 = vpop.f32.mrb[0].mxu0
      %v1470 = vadd.f32 0.0, %v1469
      %v1471 = vpop.f32.mrb[0].mxu0
      %1472 = vmatprep.mubr.f32.mxu0 %v585
      %1473 = vmatmul.mubr.f32.gmra.mrb[0].mxu0 %v583
      %v1474 = vpop.f32.mrb[0].mxu0
      %v1475 = vadd.f32 0.0, %v1474
      %v1476 = vpop.f32.mrb[0].mxu0
      %1477 = vmatprep.mubr.f32.mxu0 %v586
      %1478 = vmatmul.mubr.f32.gmra.mrb[0].mxu0 %v584
      %v1479 = vpop.f32.mrb[0].mxu0
      %v1480 = vadd.f32 0.0, %v1479
      %v1481 = vpop.f32.mrb[0].mxu0
      %1482 = vdwg.mxu0
      %1483 = vmatprep.subr.mxu0 0.0
      %1484 = vmatpush1.msra.mxu0 %v698
      %1485 = vmatprep.subr.mxu0 0.0
      %1486 = vmatpush1.msra.mxu0 %v701
      %1487 = vmatprep.subr.mxu0 0.0
      %1488 = vmatpush1.msra.mxu0 %v704
      %1489 = vmatprep.subr.mxu0 0.0
      %1490 = vmatpush1.msra.mxu0 %v707
      %1491 = vmatprep.subr.mxu0 0.0
      %1492 = vmatpush1.msra.mxu0 %v710
      %1493 = vmatprep.subr.mxu0 0.0
      %1494 = vmatpush1.msra.mxu0 %v713
      %1495 = vmatprep.subr.mxu0 0.0
      %1496 = vmatpush1.msra.mxu0 %v716
      %1497 = vmatprep.subr.mxu0 0.0
      %1498 = vmatpush1.msra.mxu0 %v719
      %1499 = vmatprep.subr.mxu0 0.0
      %1500 = vmatpush1.msra.mxu0 %v722
      %1501 = vmatprep.subr.mxu0 0.0
      %1502 = vmatpush1.msra.mxu0 %v725
      %1503 = vmatprep.subr.mxu0 0.0
      %1504 = vmatpush1.msra.mxu0 %v728
      %1505 = vmatprep.subr.mxu0 0.0
      %1506 = vmatpush1.msra.mxu0 %v731
      %1507 = vmatprep.subr.mxu0 0.0
      %1508 = vmatpush1.msra.mxu0 %v734
      %1509 = vmatprep.subr.mxu0 0.0
      %1510 = vmatpush1.msra.mxu0 %v737
      %1511 = vmatprep.subr.mxu0 0.0
      %1512 = vmatpush1.msra.mxu0 %v740
      %1513 = vmatprep.subr.mxu0 0.0
      %1514 = vmatpush1.msra.mxu0 %v743
      %1515 = vmatprep.subr.mxu0 0.0
      %1516 = vmatpush1.msra.mxu0 0.0
      %1517 = vmatprep.subr.mxu0 0.0
      %1518 = vmatpush1.msra.mxu0 0.0
      %1519 = vmatprep.subr.mxu0 0.0
      %1520 = vmatpush1.msra.mxu0 0.0
      %1521 = vmatprep.subr.mxu0 0.0
      %1522 = vmatpush1.msra.mxu0 0.0
      %1523 = vmatprep.subr.mxu0 0.0
      %1524 = vmatpush1.msra.mxu0 0.0
      %1525 = vmatprep.subr.mxu0 0.0
      %1526 = vmatpush1.msra.mxu0 0.0
      %1527 = vmatprep.subr.mxu0 0.0
      %1528 = vmatpush1.msra.mxu0 0.0
      %1529 = vmatprep.subr.mxu0 0.0
      %1530 = vmatpush1.msra.mxu0 0.0
      %1531 = vmatprep.subr.mxu0 0.0
      %1532 = vmatpush1.msra.mxu0 0.0
      %1533 = vmatprep.subr.mxu0 0.0
      %1534 = vmatpush1.msra.mxu0 0.0
      %1535 = vmatprep.subr.mxu0 0.0
      %1536 = vmatpush1.msra.mxu0 0.0
      %1537 = vmatprep.subr.mxu0 0.0
      %1538 = vmatpush1.msra.mxu0 0.0
      %1539 = vmatprep.subr.mxu0 0.0
      %1540 = vmatpush1.msra.mxu0 0.0
      %1541 = vmatprep.subr.mxu0 0.0
      %1542 = vmatpush1.msra.mxu0 0.0
      %1543 = vmatprep.subr.mxu0 0.0
      %1544 = vmatpush1.msra.mxu0 0.0
      %1545 = vmatprep.subr.mxu0 0.0
      %1546 = vmatpush1.msra.mxu0 0.0
      %1547 = vmatprep.mubr.f32.mxu0 0.0
      %1548 = vmatmul.mubr.f32.gmra.mrb[0].mxu0 %v557
      %v1549 = vpop.f32.mrb[0].mxu0
      %v1550 = vadd.f32 %v1325, %v1549
      %v1551 = vpop.f32.mrb[0].mxu0
      %1552 = vmatprep.mubr.f32.mxu0 0.0
      %1553 = vmatmul.mubr.f32.gmra.mrb[0].mxu0 %v558
      %v1554 = vpop.f32.mrb[0].mxu0
      %v1555 = vadd.f32 %v1330, %v1554
      %v1556 = vpop.f32.mrb[0].mxu0
      %1557 = vmatprep.mubr.f32.mxu0 0.0
      %1558 = vmatmul.mubr.f32.gmra.mrb[0].mxu0 %v559
      %v1559 = vpop.f32.mrb[0].mxu0
      %v1560 = vadd.f32 %v1335, %v1559
      %v1561 = vpop.f32.mrb[0].mxu0
      %1562 = vmatprep.mubr.f32.mxu0 0.0
      %1563 = vmatmul.mubr.f32.gmra.mrb[0].mxu0 %v560
      %v1564 = vpop.f32.mrb[0].mxu0
      %v1565 = vadd.f32 %v1340, %v1564
      %v1566 = vpop.f32.mrb[0].mxu0
      %1567 = vmatprep.mubr.f32.mxu0 0.0
      %1568 = vmatmul.mubr.f32.gmra.mrb[0].mxu0 %v561
      %v1569 = vpop.f32.mrb[0].mxu0
      %v1570 = vadd.f32 %v1345, %v1569
      %v1571 = vpop.f32.mrb[0].mxu0
      %1572 = vmatprep.mubr.f32.mxu0 0.0
      %1573 = vmatmul.mubr.f32.gmra.mrb[0].mxu0 %v562
      %v1574 = vpop.f32.mrb[0].mxu0
      %v1575 = vadd.f32 %v1350, %v1574
      %v1576 = vpop.f32.mrb[0].mxu0
      %1577 = vmatprep.mubr.f32.mxu0 0.0
      %1578 = vmatmul.mubr.f32.gmra.mrb[0].mxu0 %v563
      %v1579 = vpop.f32.mrb[0].mxu0
      %v1580 = vadd.f32 %v1355, %v1579
      %v1581 = vpop.f32.mrb[0].mxu0
      %1582 = vmatprep.mubr.f32.mxu0 0.0
      %1583 = vmatmul.mubr.f32.gmra.mrb[0].mxu0 %v564
      %v1584 = vpop.f32.mrb[0].mxu0
      %v1585 = vadd.f32 %v1360, %v1584
      %v1586 = vpop.f32.mrb[0].mxu0
      %1587 = vmatprep.mubr.f32.mxu0 0.0
      %1588 = vmatmul.mubr.f32.gmra.mrb[0].mxu0 %v565
      %v1589 = vpop.f32.mrb[0].mxu0
      %v1590 = vadd.f32 %v1365, %v1589
      %v1591 = vpop.f32.mrb[0].mxu0
      %1592 = vmatprep.mubr.f32.mxu0 0.0
      %1593 = vmatmul.mubr.f32.gmra.mrb[0].mxu0 %v566
      %v1594 = vpop.f32.mrb[0].mxu0
      %v1595 = vadd.f32 %v1370, %v1594
      %v1596 = vpop.f32.mrb[0].mxu0
      %1597 = vmatprep.mubr.f32.mxu0 0.0
      %1598 = vmatmul.mubr.f32.gmra.mrb[0].mxu0 %v567
      %v1599 = vpop.f32.mrb[0].mxu0
      %v1600 = vadd.f32 %v1375, %v1599
      %v1601 = vpop.f32.mrb[0].mxu0
      %1602 = vmatprep.mubr.f32.mxu0 0.0
      %1603 = vmatmul.mubr.f32.gmra.mrb[0].mxu0 %v568
      %v1604 = vpop.f32.mrb[0].mxu0
      %v1605 = vadd.f32 %v1380, %v1604
      %v1606 = vpop.f32.mrb[0].mxu0
      %1607 = vmatprep.mubr.f32.mxu0 0.0
      %1608 = vmatmul.mubr.f32.gmra.mrb[0].mxu0 %v569
      %v1609 = vpop.f32.mrb[0].mxu0
      %v1610 = vadd.f32 %v1385, %v1609
      %v1611 = vpop.f32.mrb[0].mxu0
      %1612 = vmatprep.mubr.f32.mxu0 0.0
      %1613 = vmatmul.mubr.f32.gmra.mrb[0].mxu0 %v570
      %v1614 = vpop.f32.mrb[0].mxu0
      %v1615 = vadd.f32 %v1390, %v1614
      %v1616 = vpop.f32.mrb[0].mxu0
      %1617 = vmatprep.mubr.f32.mxu0 0.0
      %1618 = vmatmul.mubr.f32.gmra.mrb[0].mxu0 %v571
      %v1619 = vpop.f32.mrb[0].mxu0
      %v1620 = vadd.f32 %v1395, %v1619
      %v1621 = vpop.f32.mrb[0].mxu0
      %1622 = vmatprep.mubr.f32.mxu0 0.0
      %1623 = vmatmul.mubr.f32.gmra.mrb[0].mxu0 %v572
      %v1624 = vpop.f32.mrb[0].mxu0
      %v1625 = vadd.f32 %v1400, %v1624
      %v1626 = vpop.f32.mrb[0].mxu0
      %1627 = vmatprep.mubr.f32.mxu0 0.0
      %1628 = vmatmul.mubr.f32.gmra.mrb[0].mxu0 %v573
      %v1629 = vpop.f32.mrb[0].mxu0
      %v1630 = vadd.f32 %v1405, %v1629
      %v1631 = vpop.f32.mrb[0].mxu0
      %1632 = vmatprep.mubr.f32.mxu0 0.0
      %1633 = vmatmul.mubr.f32.gmra.mrb[0].mxu0 %v574
      %v1634 = vpop.f32.mrb[0].mxu0
      %v1635 = vadd.f32 %v1410, %v1634
      %v1636 = vpop.f32.mrb[0].mxu0
      %1637 = vmatprep.mubr.f32.mxu0 0.0
      %1638 = vmatmul.mubr.f32.gmra.mrb[0].mxu0 %v575
      %v1639 = vpop.f32.mrb[0].mxu0
      %v1640 = vadd.f32 %v1415, %v1639
      %v1641 = vpop.f32.mrb[0].mxu0
      %1642 = vmatprep.mubr.f32.mxu0 0.0
      %1643 = vmatmul.mubr.f32.gmra.mrb[0].mxu0 %v576
      %v1644 = vpop.f32.mrb[0].mxu0
      %v1645 = vadd.f32 %v1420, %v1644
      %v1646 = vpop.f32.mrb[0].mxu0
      %1647 = vmatprep.mubr.f32.mxu0 0.0
      %1648 = vmatmul.mubr.f32.gmra.mrb[0].mxu0 %v577
      %v1649 = vpop.f32.mrb[0].mxu0
      %v1650 = vadd.f32 %v1425, %v1649
      %v1651 = vpop.f32.mrb[0].mxu0
      %1652 = vmatprep.mubr.f32.mxu0 0.0
      %1653 = vmatmul.mubr.f32.gmra.mrb[0].mxu0 %v578
      %v1654 = vpop.f32.mrb[0].mxu0
      %v1655 = vadd.f32 %v1430, %v1654
      %v1656 = vpop.f32.mrb[0].mxu0
      %1657 = vmatprep.mubr.f32.mxu0 0.0
      %1658 = vmatmul.mubr.f32.gmra.mrb[0].mxu0 %v579
      %v1659 = vpop.f32.mrb[0].mxu0
      %v1660 = vadd.f32 %v1435, %v1659
      %v1661 = vpop.f32.mrb[0].mxu0
      %1662 = vmatprep.mubr.f32.mxu0 0.0
      %1663 = vmatmul.mubr.f32.gmra.mrb[0].mxu0 %v580
      %v1664 = vpop.f32.mrb[0].mxu0
      %v1665 = vadd.f32 %v1440, %v1664
      %v1666 = vpop.f32.mrb[0].mxu0
      %1667 = vmatprep.mubr.f32.mxu0 0.0
      %1668 = vmatmul.mubr.f32.gmra.mrb[0].mxu0 %v581
      %v1669 = vpop.f32.mrb[0].mxu0
      %v1670 = vadd.f32 %v1445, %v1669
      %v1671 = vpop.f32.mrb[0].mxu0
      %1672 = vmatprep.mubr.f32.mxu0 0.0
      %1673 = vmatmul.mubr.f32.gmra.mrb[0].mxu0 %v582
      %v1674 = vpop.f32.mrb[0].mxu0
      %v1675 = vadd.f32 %v1450, %v1674
      %v1676 = vpop.f32.mrb[0].mxu0
      %1677 = vmatprep.mubr.f32.mxu0 0.0
      %1678 = vmatmul.mubr.f32.gmra.mrb[0].mxu0 %v583
      %v1679 = vpop.f32.mrb[0].mxu0
      %v1680 = vadd.f32 %v1455, %v1679
      %v1681 = vpop.f32.mrb[0].mxu0
      %1682 = vmatprep.mubr.f32.mxu0 0.0
      %1683 = vmatmul.mubr.f32.gmra.mrb[0].mxu0 %v584
      %v1684 = vpop.f32.mrb[0].mxu0
      %v1685 = vadd.f32 %v1460, %v1684
      %v1686 = vpop.f32.mrb[0].mxu0
      %1687 = vmatprep.mubr.f32.mxu0 0.0
      %1688 = vmatmul.mubr.f32.gmra.mrb[0].mxu0 %v585
      %v1689 = vpop.f32.mrb[0].mxu0
      %v1690 = vadd.f32 %v1465, %v1689
      %v1691 = vpop.f32.mrb[0].mxu0
      %1692 = vmatprep.mubr.f32.mxu0 0.0
      %1693 = vmatmul.mubr.f32.gmra.mrb[0].mxu0 %v586
      %v1694 = vpop.f32.mrb[0].mxu0
      %v1695 = vadd.f32 %v1470, %v1694
      %v1696 = vpop.f32.mrb[0].mxu0
      %1697 = vmatprep.mubr.f32.mxu0 0.0
      %1698 = vmatmul.mubr.f32.gmra.mrb[0].mxu0 %v598
      %v1699 = vpop.f32.mrb[0].mxu0
      %v1700 = vadd.f32 %v1475, %v1699
      %v1701 = vpop.f32.mrb[0].mxu0
      %1702 = vmatprep.mubr.f32.mxu0 0.0
      %1703 = vmatmul.mubr.f32.gmra.mrb[0].mxu0 %v599
      %v1704 = vpop.f32.mrb[0].mxu0
      %v1705 = vadd.f32 %v1480, %v1704
      %v1706 = vpop.f32.mrb[0].mxu0
      %1707 = vdwg.mxu0
      %vm1740 = vcmask 1040384
      %v1741 = vrot.slane %v1068, 7
      %v1742 = vrot.slane %v1074, 7
      %v1743 = vsel %vm1740, %v1741, %v1742
      %v1744 = vrot.slane %v1080, 7
      %v1745 = vrot.slane %v1086, 7
      %v1746 = vsel %vm1740, %v1744, %v1745
      %v1747 = vrot.slane %v1092, 7
      %v1748 = vrot.slane %v1098, 7
      %v1749 = vsel %vm1740, %v1747, %v1748
      %v1750 = vrot.slane %v1104, 7
      %v1751 = vrot.slane %v1110, 7
      %v1752 = vsel %vm1740, %v1750, %v1751
      %v1753 = vrot.slane %v1116, 7
      %v1754 = vrot.slane %v1122, 7
      %v1755 = vsel %vm1740, %v1753, %v1754
      %v1756 = vrot.slane %v1128, 7
      %v1757 = vrot.slane %v1134, 7
      %v1758 = vsel %vm1740, %v1756, %v1757
      %v1759 = vrot.slane %v1140, 7
      %v1760 = vrot.slane %v1146, 7
      %v1761 = vsel %vm1740, %v1759, %v1760
      %v1762 = vrot.slane %v1152, 7
      %v1763 = vrot.slane %v1158, 7
      %v1764 = vsel %vm1740, %v1762, %v1763
      %v1765 = vrot.slane %v1164, 7
      %v1766 = vrot.slane %v1170, 7
      %v1767 = vsel %vm1740, %v1765, %v1766
      %v1768 = vrot.slane %v1176, 7
      %v1769 = vrot.slane %v1182, 7
      %v1770 = vsel %vm1740, %v1768, %v1769
      %v1771 = vrot.slane %v1188, 7
      %v1772 = vrot.slane %v1194, 7
      %v1773 = vsel %vm1740, %v1771, %v1772
      %v1774 = vrot.slane %v1200, 7
      %v1775 = vrot.slane %v1206, 7
      %v1776 = vsel %vm1740, %v1774, %v1775
      %v1777 = vrot.slane %v1212, 7
      %v1778 = vrot.slane %v1218, 7
      %v1779 = vsel %vm1740, %v1777, %v1778
      %v1780 = vrot.slane %v1224, 7
      %v1781 = vrot.slane %v1230, 7
      %v1782 = vsel %vm1740, %v1780, %v1781
      %v1783 = vrot.slane %v1236, 7
      %v1784 = vrot.slane %v1242, 7
      %v1785 = vsel %vm1740, %v1783, %v1784
      %v1786 = vrot.slane %v1248, 7
      %v1787 = vrot.slane %v1254, 7
      %v1788 = vsel %vm1740, %v1786, %v1787
      %v1821 = vsel %vm1740, 0.0, %v1741
      %v1822 = vsel %vm1740, 0.0, %v1744
      %v1823 = vsel %vm1740, 0.0, %v1747
      %v1824 = vsel %vm1740, 0.0, %v1750
      %v1825 = vsel %vm1740, 0.0, %v1753
      %v1826 = vsel %vm1740, 0.0, %v1756
      %v1827 = vsel %vm1740, 0.0, %v1759
      %v1828 = vsel %vm1740, 0.0, %v1762
      %v1829 = vsel %vm1740, 0.0, %v1765
      %v1830 = vsel %vm1740, 0.0, %v1768
      %v1831 = vsel %vm1740, 0.0, %v1771
      %v1832 = vsel %vm1740, 0.0, %v1774
      %v1833 = vsel %vm1740, 0.0, %v1777
      %v1834 = vsel %vm1740, 0.0, %v1780
      %v1835 = vsel %vm1740, 0.0, %v1783
      %v1836 = vsel %vm1740, 0.0, %v1786
      %v1837 = vadd.f32 %v1070, %v1821
      %v1838 = vadd.f32 %v1076, %v1743
      %v1839 = vadd.f32 %v1082, %v1822
      %v1840 = vadd.f32 %v1088, %v1746
      %v1841 = vadd.f32 %v1094, %v1823
      %v1842 = vadd.f32 %v1100, %v1749
      %v1843 = vadd.f32 %v1106, %v1824
      %v1844 = vadd.f32 %v1112, %v1752
      %v1845 = vadd.f32 %v1118, %v1825
      %v1846 = vadd.f32 %v1124, %v1755
      %v1847 = vadd.f32 %v1130, %v1826
      %v1848 = vadd.f32 %v1136, %v1758
      %v1849 = vadd.f32 %v1142, %v1827
      %v1850 = vadd.f32 %v1148, %v1761
      %v1851 = vadd.f32 %v1154, %v1828
      %v1852 = vadd.f32 %v1160, %v1764
      %v1853 = vadd.f32 %v1166, %v1829
      %v1854 = vadd.f32 %v1172, %v1767
      %v1855 = vadd.f32 %v1178, %v1830
      %v1856 = vadd.f32 %v1184, %v1770
      %v1857 = vadd.f32 %v1190, %v1831
      %v1858 = vadd.f32 %v1196, %v1773
      %v1859 = vadd.f32 %v1202, %v1832
      %v1860 = vadd.f32 %v1208, %v1776
      %v1861 = vadd.f32 %v1214, %v1833
      %v1862 = vadd.f32 %v1220, %v1779
      %v1863 = vadd.f32 %v1226, %v1834
      %v1864 = vadd.f32 %v1232, %v1782
      %v1865 = vadd.f32 %v1238, %v1835
      %v1866 = vadd.f32 %v1244, %v1785
      %v1867 = vadd.f32 %v1250, %v1836
      %v1868 = vadd.f32 %v1256, %v1788
      %vm1901 = vcmask 1046528
      %v1902 = vrot.slane %v1550, 1
      %v1903 = vrot.slane %v1555, 1
      %v1904 = vsel %vm1901, %v1902, %v1903
      %v1905 = vrot.slane %v1560, 1
      %v1906 = vrot.slane %v1565, 1
      %v1907 = vsel %vm1901, %v1905, %v1906
      %v1908 = vrot.slane %v1570, 1
      %v1909 = vrot.slane %v1575, 1
      %v1910 = vsel %vm1901, %v1908, %v1909
      %v1911 = vrot.slane %v1580, 1
      %v1912 = vrot.slane %v1585, 1
      %v1913 = vsel %vm1901, %v1911, %v1912
      %v1914 = vrot.slane %v1590, 1
      %v1915 = vrot.slane %v1595, 1
      %v1916 = vsel %vm1901, %v1914, %v1915
      %v1917 = vrot.slane %v1600, 1
      %v1918 = vrot.slane %v1605, 1
      %v1919 = vsel %vm1901, %v1917, %v1918
      %v1920 = vrot.slane %v1610, 1
      %v1921 = vrot.slane %v1615, 1
      %v1922 = vsel %vm1901, %v1920, %v1921
      %v1923 = vrot.slane %v1620, 1
      %v1924 = vrot.slane %v1625, 1
      %v1925 = vsel %vm1901, %v1923, %v1924
      %v1926 = vrot.slane %v1630, 1
      %v1927 = vrot.slane %v1635, 1
      %v1928 = vsel %vm1901, %v1926, %v1927
      %v1929 = vrot.slane %v1640, 1
      %v1930 = vrot.slane %v1645, 1
      %v1931 = vsel %vm1901, %v1929, %v1930
      %v1932 = vrot.slane %v1650, 1
      %v1933 = vrot.slane %v1655, 1
      %v1934 = vsel %vm1901, %v1932, %v1933
      %v1935 = vrot.slane %v1660, 1
      %v1936 = vrot.slane %v1665, 1
      %v1937 = vsel %vm1901, %v1935, %v1936
      %v1938 = vrot.slane %v1670, 1
      %v1939 = vrot.slane %v1675, 1
      %v1940 = vsel %vm1901, %v1938, %v1939
      %v1941 = vrot.slane %v1680, 1
      %v1942 = vrot.slane %v1685, 1
      %v1943 = vsel %vm1901, %v1941, %v1942
      %v1944 = vrot.slane %v1690, 1
      %v1945 = vrot.slane %v1695, 1
      %v1946 = vsel %vm1901, %v1944, %v1945
      %v1947 = vrot.slane %v1700, 1
      %v1948 = vrot.slane %v1705, 1
      %v1949 = vsel %vm1901, %v1947, %v1948
      %v1982 = vsel %vm1901, %v1903, 0.0
      %v1983 = vsel %vm1901, %v1906, 0.0
      %v1984 = vsel %vm1901, %v1909, 0.0
      %v1985 = vsel %vm1901, %v1912, 0.0
      %v1986 = vsel %vm1901, %v1915, 0.0
      %v1987 = vsel %vm1901, %v1918, 0.0
      %v1988 = vsel %vm1901, %v1921, 0.0
      %v1989 = vsel %vm1901, %v1924, 0.0
      %v1990 = vsel %vm1901, %v1927, 0.0
      %v1991 = vsel %vm1901, %v1930, 0.0
      %v1992 = vsel %vm1901, %v1933, 0.0
      %v1993 = vsel %vm1901, %v1936, 0.0
      %v1994 = vsel %vm1901, %v1939, 0.0
      %v1995 = vsel %vm1901, %v1942, 0.0
      %v1996 = vsel %vm1901, %v1945, 0.0
      %v1997 = vsel %vm1901, %v1948, 0.0
      %v1998 = vadd.f32 %v1837, %v1904
      %v1999 = vadd.f32 %v1838, %v1982
      %v2000 = vadd.f32 %v1839, %v1907
      %v2001 = vadd.f32 %v1840, %v1983
      %v2002 = vadd.f32 %v1841, %v1910
      %v2003 = vadd.f32 %v1842, %v1984
      %v2004 = vadd.f32 %v1843, %v1913
      %v2005 = vadd.f32 %v1844, %v1985
      %v2006 = vadd.f32 %v1845, %v1916
      %v2007 = vadd.f32 %v1846, %v1986
      %v2008 = vadd.f32 %v1847, %v1919
      %v2009 = vadd.f32 %v1848, %v1987
      %v2010 = vadd.f32 %v1849, %v1922
      %v2011 = vadd.f32 %v1850, %v1988
      %v2012 = vadd.f32 %v1851, %v1925
      %v2013 = vadd.f32 %v1852, %v1989
      %v2014 = vadd.f32 %v1853, %v1928
      %v2015 = vadd.f32 %v1854, %v1990
      %v2016 = vadd.f32 %v1855, %v1931
      %v2017 = vadd.f32 %v1856, %v1991
      %v2018 = vadd.f32 %v1857, %v1934
      %v2019 = vadd.f32 %v1858, %v1992
      %v2020 = vadd.f32 %v1859, %v1937
      %v2021 = vadd.f32 %v1860, %v1993
      %v2022 = vadd.f32 %v1861, %v1940
      %v2023 = vadd.f32 %v1862, %v1994
      %v2024 = vadd.f32 %v1863, %v1943
      %v2025 = vadd.f32 %v1864, %v1995
      %v2026 = vadd.f32 %v1865, %v1946
      %v2027 = vadd.f32 %v1866, %v1996
      %v2028 = vadd.f32 %v1867, %v1949
      %v2029 = vadd.f32 %v1868, %v1997
      %2030 = vst [vmem:[%s457] sm:$0xff] %v1998
      %2031 = vst [vmem:[%s457 + $0x8] sm:$0xff] %v1999
      %2032 = vst [vmem:[%s457 + $0x10] sm:$0xff] %v2000
      %2033 = vst [vmem:[%s457 + $0x18] sm:$0xff] %v2001
      %2034 = vst [vmem:[%s457 + $0x20] sm:$0xff] %v2002
      %2035 = vst [vmem:[%s457 + $0x28] sm:$0xff] %v2003
      %2036 = vst [vmem:[%s457 + $0x30] sm:$0xff] %v2004
      %2037 = vst [vmem:[%s457 + $0x38] sm:$0xff] %v2005
      %2038 = vst [vmem:[%s457 + $0x40] sm:$0xff] %v2006
      %2039 = vst [vmem:[%s457 + $0x48] sm:$0xff] %v2007
      %2040 = vst [vmem:[%s457 + $0x50] sm:$0xff] %v2008
      %2041 = vst [vmem:[%s457 + $0x58] sm:$0xff] %v2009
      %2042 = vst [vmem:[%s457 + $0x60] sm:$0xff] %v2010
      %2043 = vst [vmem:[%s457 + $0x68] sm:$0xff] %v2011
      %2044 = vst [vmem:[%s457 + $0x70] sm:$0xff] %v2012
      %2045 = vst [vmem:[%s457 + $0x78] sm:$0xff] %v2013
      %2046 = vst [vmem:[%s457 + $0x80] sm:$0xff] %v2014
      %2047 = vst [vmem:[%s457 + $0x88] sm:$0xff] %v2015
      %2048 = vst [vmem:[%s457 + $0x90] sm:$0xff] %v2016
      %2049 = vst [vmem:[%s457 + $0x98] sm:$0xff] %v2017
      %2050 = vst [vmem:[%s457 + $0xa0] sm:$0xff] %v2018
      %2051 = vst [vmem:[%s457 + $0xa8] sm:$0xff] %v2019
      %2052 = vst [vmem:[%s457 + $0xb0] sm:$0xff] %v2020
      %2053 = vst [vmem:[%s457 + $0xb8] sm:$0xff] %v2021
      %2054 = vst [vmem:[%s457 + $0xc0] sm:$0xff] %v2022
      %2055 = vst [vmem:[%s457 + $0xc8] sm:$0xff] %v2023
      %2056 = vst [vmem:[%s457 + $0xd0] sm:$0xff] %v2024
      %2057 = vst [vmem:[%s457 + $0xd8] sm:$0xff] %v2025
      %2058 = vst [vmem:[%s457 + $0xe0] sm:$0xff] %v2026
      %2059 = vst [vmem:[%s457 + $0xe8] sm:$0xff] %v2027
      %2060 = vst [vmem:[%s457 + $0xf0] sm:$0xff] %v2028
      %2061 = vst [vmem:[%s457 + $0xf8] sm:$0xff] %v2029
      %v2062 = vadd.f32 %v1998, %v1999
      %v2063 = vadd.f32 %v2062, %v2000
      %v2064 = vadd.f32 %v2063, %v2001
      %v2065 = vadd.f32 %v2064, %v2002
      %v2066 = vadd.f32 %v2065, %v2003
      %v2067 = vadd.f32 %v2066, %v2004
      %v2068 = vadd.f32 %v2067, %v2005
      %v2069 = vadd.f32 %v2068, %v2006
      %v2070 = vadd.f32 %v2069, %v2007
      %v2071 = vadd.f32 %v2070, %v2008
      %v2072 = vadd.f32 %v2071, %v2009
      %v2073 = vadd.f32 %v2072, %v2010
      %v2074 = vadd.f32 %v2073, %v2011
      %v2075 = vadd.f32 %v2074, %v2012
      %v2076 = vadd.f32 %v2075, %v2013
      %v2077 = vadd.f32 %v2076, %v2014
      %v2078 = vadd.f32 %v2077, %v2015
      %v2079 = vadd.f32 %v2078, %v2016
      %v2080 = vadd.f32 %v2079, %v2017
      %v2081 = vadd.f32 %v2080, %v2018
      %v2082 = vadd.f32 %v2081, %v2019
      %v2083 = vadd.f32 %v2082, %v2020
      %v2084 = vadd.f32 %v2083, %v2021
      %v2085 = vadd.f32 %v2084, %v2022
      %v2086 = vadd.f32 %v2085, %v2023
      %v2087 = vadd.f32 %v2086, %v2024
      %v2088 = vadd.f32 %v2087, %v2025
      %v2089 = vadd.f32 %v2088, %v2026
      %v2090 = vadd.f32 %v2089, %v2027
      %v2091 = vadd.f32 %v2090, %v2028
      %v2092 = vadd.f32 %v2091, %v2029
      %v2093 = vrot.slane %v2092, 4
      %v2094 = vadd.f32 %v2092, %v2093
      %v2095 = vrot.slane %v2094, 2
      %v2096 = vadd.f32 %v2094, %v2095
      %v2097 = vrot.slane %v2096, 1
      %v2098 = vadd.f32 %v2096, %v2097
      %v2099 = vmul.f32 %v1998, %v1998
      %v2100 = vmul.f32 %v1999, %v1999
      %v2101 = vmul.f32 %v2000, %v2000
      %v2102 = vmul.f32 %v2001, %v2001
      %v2103 = vmul.f32 %v2002, %v2002
      %v2104 = vmul.f32 %v2003, %v2003
      %v2105 = vmul.f32 %v2004, %v2004
      %v2106 = vmul.f32 %v2005, %v2005
      %v2107 = vmul.f32 %v2006, %v2006
      %v2108 = vmul.f32 %v2007, %v2007
      %v2109 = vmul.f32 %v2008, %v2008
      %v2110 = vmul.f32 %v2009, %v2009
      %v2111 = vmul.f32 %v2010, %v2010
      %v2112 = vmul.f32 %v2011, %v2011
      %v2113 = vmul.f32 %v2012, %v2012
      %v2114 = vmul.f32 %v2013, %v2013
      %v2115 = vmul.f32 %v2014, %v2014
      %v2116 = vmul.f32 %v2015, %v2015
      %v2117 = vmul.f32 %v2016, %v2016
      %v2118 = vmul.f32 %v2017, %v2017
      %v2119 = vmul.f32 %v2018, %v2018
      %v2120 = vmul.f32 %v2019, %v2019
      %v2121 = vmul.f32 %v2020, %v2020
      %v2122 = vmul.f32 %v2021, %v2021
      %v2123 = vmul.f32 %v2022, %v2022
      %v2124 = vmul.f32 %v2023, %v2023
      %v2125 = vmul.f32 %v2024, %v2024
      %v2126 = vmul.f32 %v2025, %v2025
      %v2127 = vmul.f32 %v2026, %v2026
      %v2128 = vmul.f32 %v2027, %v2027
      %v2129 = vmul.f32 %v2028, %v2028
      %v2130 = vmul.f32 %v2029, %v2029
      %v2131 = vadd.f32 %v2099, %v2100
      %v2132 = vadd.f32 %v2131, %v2101
      %v2133 = vadd.f32 %v2132, %v2102
      %v2134 = vadd.f32 %v2133, %v2103
      %v2135 = vadd.f32 %v2134, %v2104
      %v2136 = vadd.f32 %v2135, %v2105
      %v2137 = vadd.f32 %v2136, %v2106
      %v2138 = vadd.f32 %v2137, %v2107
      %v2139 = vadd.f32 %v2138, %v2108
      %v2140 = vadd.f32 %v2139, %v2109
      %v2141 = vadd.f32 %v2140, %v2110
      %v2142 = vadd.f32 %v2141, %v2111
      %v2143 = vadd.f32 %v2142, %v2112
      %v2144 = vadd.f32 %v2143, %v2113
      %v2145 = vadd.f32 %v2144, %v2114
      %v2146 = vadd.f32 %v2145, %v2115
      %v2147 = vadd.f32 %v2146, %v2116
      %v2148 = vadd.f32 %v2147, %v2117
      %v2149 = vadd.f32 %v2148, %v2118
      %v2150 = vadd.f32 %v2149, %v2119
      %v2151 = vadd.f32 %v2150, %v2120
      %v2152 = vadd.f32 %v2151, %v2121
      %v2153 = vadd.f32 %v2152, %v2122
      %v2154 = vadd.f32 %v2153, %v2123
      %v2155 = vadd.f32 %v2154, %v2124
      %v2156 = vadd.f32 %v2155, %v2125
      %v2157 = vadd.f32 %v2156, %v2126
      %v2158 = vadd.f32 %v2157, %v2127
      %v2159 = vadd.f32 %v2158, %v2128
      %v2160 = vadd.f32 %v2159, %v2129
      %v2161 = vadd.f32 %v2160, %v2130
      %v2162 = vrot.slane %v2161, 4
      %v2163 = vadd.f32 %v2161, %v2162
      %v2164 = vrot.slane %v2163, 2
      %v2165 = vadd.f32 %v2163, %v2164
      %v2166 = vrot.slane %v2165, 1
      %v2167 = vadd.f32 %v2165, %v2166
      %v2168 = vsel %vm1740, %v2098, %v2167
      %2169 = vst [vmem:[%s465] sm:$0x3] %v2168
      %s2170 = smul.u32 16, %s24
      %p2171 = scmp.lt.s32.totalorder %s23, 1
      %s2172 = scalar_select %p2171, %s23, 1
      %p2173 = scmp.lt.s32.totalorder %s2170, 15
      %s2174 = scalar_select %p2173, %s2170, 15
      %s2175 = smul.addr %s2174, 2
      %s2176 = smul.addr %s2172, 32
      %s2177 = sadd.s32 %s2175, %s2176
      %s2178 = smul.addr %s2177, 8
      %s2179 = scalar_lea.vmem %s6, %s2178
      %p2180 = scmp.lt.s32.totalorder %s23, 1
      %s2181 = scalar_select %p2180, %s23, 1
      %p2182 = scmp.lt.s32.totalorder %s24, 0
      %s2183 = scalar_select %p2182, %s24, 0
      %s2184 = sadd.s32 %s2183, %s2181
      %s2185 = smul.addr %s2184, 2
      %s2186 = scalar_lea.vmem %s7, %s2185
      // Predicated region
      $region45: #{double_conv_block.2} parent=43 // pred_check
        %p2187 = pneg %p214
      $region46: #{double_conv_block.2} parent=43 // pred_check_branch
        %2189 = sbr.rel (%p2187) target = $region48
      $region47: #{double_conv_block.2} parent=43 // pred_region
        %s2190 = smul.u32 16, %s24
      $region48: #{double_conv_block.2} parent=43 // pred_fallthru
        _
      // Predicated region
      $region49: #{double_conv_block.2} parent=43 // pred_check
        %p2191 = pneg %p242
      $region50: #{double_conv_block.2} parent=43 // pred_check_branch
        %2193 = sbr.rel (%p2191) target = $region52
      $region51: #{double_conv_block.2} parent=43 // pred_region
        _
      $region52: #{double_conv_block.2} parent=43 // pred_fallthru
        _
    $region44: #{double_conv_block.2} parent=5 // pred_fallthru
      _
    %p2194 = scmp.le.s32.totalorder 2, %s14
    // Predicated region
    $region53: #{double_conv_block.2} parent=5 // pred_check
      %p2195 = pneg %p2194
    $region54: #{double_conv_block.2} parent=5 // pred_check_branch
      %2197 = sbr.rel (%p2195) target = $region56
    $region55: #{double_conv_block.2} parent=5 // pred_region
      %s2198 = ssub.s32 %s14, 2
      // Predicated region
      $region57: #{double_conv_block.2} parent=55 // pred_check
        %p2199 = pneg %p220
      $region58: #{double_conv_block.2} parent=55 // pred_check_branch
        %2201 = sbr.rel (%p2199) target = $region60
      $region59: #{double_conv_block.2} parent=55 // pred_region
        %s2202 = smul.u32 16, %s26
        %p2203 = scmp.lt.s32.totalorder %s25, 1
        %s2204 = scalar_select %p2203, %s25, 1
        %p2205 = scmp.lt.s32.totalorder %s2202, 15
        %s2206 = scalar_select %p2205, %s2202, 15
        %s2207 = smul.addr %s2206, 2
        %s2208 = smul.addr %s2204, 32
        %s2209 = sadd.s32 %s2207, %s2208
        %s2210 = smul.addr %s2209, 8
        %s2211 = scalar_lea.vmem %s6, %s2210
      $region60: #{double_conv_block.2} parent=55 // pred_fallthru
        _
      // Predicated region
      $region61: #{double_conv_block.2} parent=55 // pred_check
        %p2212 = pneg %p248
      $region62: #{double_conv_block.2} parent=55 // pred_check_branch
        %2214 = sbr.rel (%p2212) target = $region64
      $region63: #{double_conv_block.2} parent=55 // pred_region
        %p2215 = scmp.lt.s32.totalorder %s25, 1
        %s2216 = scalar_select %p2215, %s25, 1
        %p2217 = scmp.lt.s32.totalorder %s26, 0
        %s2218 = scalar_select %p2217, %s26, 0
        %s2219 = sadd.s32 %s2218, %s2216
        %s2220 = smul.addr %s2219, 2
        %s2221 = scalar_lea.vmem %s7, %s2220
      $region64: #{double_conv_block.2} parent=55 // pred_fallthru
        _
    $region56: #{double_conv_block.2} parent=5 // pred_fallthru
      _
  $region6: #{double_conv_block.2} parent=0 // loop_footer
    %s18 = sadd.s32 1, %s14
  $region7: #{double_conv_block.2} parent=0 // loop_footer_branch
    %13 = sbr.rel target = $region3
  $region8: #{double_conv_block.2} parent=0 // loop_exit
    _

// kernel: double_conv_block.3
$region0: #{double_conv_block.3}
  #allocation0 [shape = 'u32[]', space=smem, size = 0x4, offset = 0x4, fixed_abs, tag = 'smem constant byte address 0x4 - core index']
  #allocation1 [shape = 'u32[144,128]{1,0:T(1,128)}', space=vmem, size = 0x12000, scoped, tag = 'internal scratch']
  %s0 = inlined_call_operand.vmem [shape: f32[2,16,16,128], index: 0, kind: input, shape index: {}, may-alias: {0,1,2}]
  %s1 = inlined_call_operand.vmem [shape: f32[2,16,16,128], index: 1, kind: input, shape index: {}, may-alias: {0,1,2}]
  %s2 = inlined_call_operand.vmem [shape: f32[2,16,16,128], index: 2, kind: input, shape index: {}, may-alias: {0,1,2}]
  %s3 = inlined_call_operand.vmem [shape: f32[384,384], index: 3, kind: input, shape index: {}]
  %s4 = inlined_call_operand.vmem [shape: f32[1,128], index: 4, kind: input, shape index: {}]
  %s5 = inlined_call_operand.vmem [shape: f32[1,128], index: 5, kind: input, shape index: {}]
  %s6 = inlined_call_operand.vmem [shape: f32[2,16,16,128], index: 6, kind: output, shape index: {0}]
  %s7 = inlined_call_operand.vmem [shape: f32[2,1,2,128], index: 7, kind: output, shape index: {1}]
  %8 = xla_tuple %s6, %s7
  %s9 = sld [smem:[#allocation0]]
  $region65: #{double_conv_block.3} parent=0
    _
  %s11 = ssub.s32 1, %s9
  %s12 = scalar_select 0, %s11, %s9
  loop: start=0, step=1, limit=4
  $region2: #{double_conv_block.3} parent=0 // loop_pre_header
    _
  $region3: #{double_conv_block.3} parent=0 // loop_header
    %s14 = sphi 0, %s18
    %p15 = scmp.ge.s32.totalorder %s14, 4
    %s21 = sphi 0, %s33
    %s22 = sphi 0, %s29
    %s23 = sphi 0, %s21
    %s24 = sphi 0, %s22
    %s25 = sphi 0, %s23
    %s26 = sphi 0, %s24
    %s46 = sphi 0, %s48
    %s49 = sphi 0, %s46
    %s50 = sphi 0, %s49
    %s66 = sphi 0, %s50
    %s74 = sphi 0, %s76
    %s77 = sphi 0, %s74
    %s78 = sphi 0, %s77
    %s94 = sphi 0, %s78
    %s110 = sphi 0, %s112
    %s113 = sphi 0, %s110
    %s114 = sphi 0, %s113
    %s130 = sphi 0, %s114
    %s134 = sphi 0, %s134
    %s136 = sphi 0, %s134
    %s137 = sphi 0, %s136
    %s151 = sphi 0, %s137
    %s155 = sphi 0, %s155
    %s157 = sphi 0, %s155
    %s158 = sphi 0, %s157
    %s172 = sphi 0, %s158
    %s176 = sphi 0, %s176
    %s178 = sphi 0, %s176
    %s179 = sphi 0, %s178
    %s193 = sphi 0, %s179
    %s201 = sphi 0, %s203
    %s204 = sphi 0, %s201
    %s205 = sphi 0, %s204
    %s221 = sphi 0, %s205
    %s229 = sphi 0, %s231
    %s232 = sphi 0, %s229
    %s233 = sphi 0, %s232
    %s249 = sphi 0, %s233
  $region4: #{double_conv_block.3} parent=0 // loop_header_branch
    %17 = sbr.rel (%p15) target = $region8
  $region5: #{double_conv_block.3} parent=0 // loop_body
    %s19 = ssub.s32 %s14, 1
    %s20 = ssub.s32 %s14, 2
    %s27 = sadd.s32 1, %s22
    %p28 = scmp.ge.s32.totalorder %s27, 1
    %s29 = scalar_select %p28, 0, %s27
    %s30 = sadd.s32 1, %s21
    %s31 = scalar_select %p28, %s30, %s21
    %p32 = scmp.ge.s32.totalorder %s31, 2
    %s33 = scalar_select %p32, 0, %s31
    %s34 = smul.u32 %s22, 16
    %s35 = ssub.s32 %s34, 1
    %p36 = scmp.gt.s32.totalorder %s35, 0
    %s37 = scalar_select %p36, %s35, 0
    %s38 = smul.u32 %s29, 16
    %s39 = ssub.s32 %s38, 1
    %p40 = scmp.gt.s32.totalorder %s39, 0
    %s41 = scalar_select %p40, %s39, 0
    %s42 = ssub.s32 %s21, %s33
    %s43 = ssub.s32 %s37, %s41
    %s44 = sor.u32 %s42, %s43
    %p45 = scmp.eq.s32.totalorder %s44, 0
    %s47 = sadd.s32 %s46, 1
    %s48 = scalar_select %p45, %s46, %s47
    %p51 = pneg %p45
    %p52 = scmp.eq.s32.totalorder %s14, 1
    %p53 = por %p51, %p52
    %p54 = scmp.ne.s32.totalorder %s46, %s49
    %p55 = scmp.eq.s32.totalorder %s14, 0
    %p56 = por %p54, %p55
    %p57 = scmp.ne.s32.totalorder %s46, %s49
    %p58 = scmp.eq.s32.totalorder %s19, 1
    %p59 = por %p57, %p58
    %p60 = scmp.ne.s32.totalorder %s49, %s50
    %p61 = scmp.eq.s32.totalorder %s19, 0
    %p62 = por %p60, %p61
    %p63 = scmp.ne.s32.totalorder %s49, %s50
    %p64 = scmp.eq.s32.totalorder %s20, 1
    %p65 = por %p63, %p64
    %p67 = scmp.ne.s32.totalorder %s50, %s66
    %p68 = scmp.eq.s32.totalorder %s20, 0
    %p69 = por %p67, %p68
    %s70 = ssub.s32 %s21, %s33
    %s71 = ssub.s32 %s22, %s29
    %s72 = sor.u32 %s70, %s71
    %p73 = scmp.eq.s32.totalorder %s72, 0
    %s75 = sadd.s32 %s74, 1
    %s76 = scalar_select %p73, %s74, %s75
    %p79 = pneg %p73
    %p80 = scmp.eq.s32.totalorder %s14, 1
    %p81 = por %p79, %p80
    %p82 = scmp.ne.s32.totalorder %s74, %s77
    %p83 = scmp.eq.s32.totalorder %s14, 0
    %p84 = por %p82, %p83
    %p85 = scmp.ne.s32.totalorder %s74, %s77
    %p86 = scmp.eq.s32.totalorder %s19, 1
    %p87 = por %p85, %p86
    %p88 = scmp.ne.s32.totalorder %s77, %s78
    %p89 = scmp.eq.s32.totalorder %s19, 0
    %p90 = por %p88, %p89
    %p91 = scmp.ne.s32.totalorder %s77, %s78
    %p92 = scmp.eq.s32.totalorder %s20, 1
    %p93 = por %p91, %p92
    %p95 = scmp.ne.s32.totalorder %s78, %s94
    %p96 = scmp.eq.s32.totalorder %s20, 0
    %p97 = por %p95, %p96
    %s98 = sadd.s32 %s22, 1
    %s99 = smul.u32 %s98, 16
    %p100 = scmp.lt.s32.totalorder %s99, 15
    %s101 = scalar_select %p100, %s99, 15
    %s102 = sadd.s32 %s29, 1
    %s103 = smul.u32 %s102, 16
    %p104 = scmp.lt.s32.totalorder %s103, 15
    %s105 = scalar_select %p104, %s103, 15
    %s106 = ssub.s32 %s21, %s33
    %s107 = ssub.s32 %s101, %s105
    %s108 = sor.u32 %s106, %s107
    %p109 = scmp.eq.s32.totalorder %s108, 0
    %s111 = sadd.s32 %s110, 1
    %s112 = scalar_select %p109, %s110, %s111
    %p115 = pneg %p109
    %p116 = scmp.eq.s32.totalorder %s14, 1
    %p117 = por %p115, %p116
    %p118 = scmp.ne.s32.totalorder %s110, %s113
    %p119 = scmp.eq.s32.totalorder %s14, 0
    %p120 = por %p118, %p119
    %p121 = scmp.ne.s32.totalorder %s110, %s113
    %p122 = scmp.eq.s32.totalorder %s19, 1
    %p123 = por %p121, %p122
    %p124 = scmp.ne.s32.totalorder %s113, %s114
    %p125 = scmp.eq.s32.totalorder %s19, 0
    %p126 = por %p124, %p125
    %p127 = scmp.ne.s32.totalorder %s113, %s114
    %p128 = scmp.eq.s32.totalorder %s20, 1
    %p129 = por %p127, %p128
    %p131 = scmp.ne.s32.totalorder %s114, %s130
    %p132 = scmp.eq.s32.totalorder %s20, 0
    %p133 = por %p131, %p132
    %s135 = sadd.s32 %s134, 1
    %p138 = scmp.eq.s32.totalorder %s14, 1
    %p139 = scmp.ne.s32.totalorder %s134, %s136
    %p140 = scmp.eq.s32.totalorder %s14, 0
    %p141 = por %p139, %p140
    %p142 = scmp.ne.s32.totalorder %s134, %s136
    %p143 = scmp.eq.s32.totalorder %s19, 1
    %p144 = por %p142, %p143
    %p145 = scmp.ne.s32.totalorder %s136, %s137
    %p146 = scmp.eq.s32.totalorder %s19, 0
    %p147 = por %p145, %p146
    %p148 = scmp.ne.s32.totalorder %s136, %s137
    %p149 = scmp.eq.s32.totalorder %s20, 1
    %p150 = por %p148, %p149
    %p152 = scmp.ne.s32.totalorder %s137, %s151
    %p153 = scmp.eq.s32.totalorder %s20, 0
    %p154 = por %p152, %p153
    %s156 = sadd.s32 %s155, 1
    %p159 = scmp.eq.s32.totalorder %s14, 1
    %p160 = scmp.ne.s32.totalorder %s155, %s157
    %p161 = scmp.eq.s32.totalorder %s14, 0
    %p162 = por %p160, %p161
    %p163 = scmp.ne.s32.totalorder %s155, %s157
    %p164 = scmp.eq.s32.totalorder %s19, 1
    %p165 = por %p163, %p164
    %p166 = scmp.ne.s32.totalorder %s157, %s158
    %p167 = scmp.eq.s32.totalorder %s19, 0
    %p168 = por %p166, %p167
    %p169 = scmp.ne.s32.totalorder %s157, %s158
    %p170 = scmp.eq.s32.totalorder %s20, 1
    %p171 = por %p169, %p170
    %p173 = scmp.ne.s32.totalorder %s158, %s172
    %p174 = scmp.eq.s32.totalorder %s20, 0
    %p175 = por %p173, %p174
    %s177 = sadd.s32 %s176, 1
    %p180 = scmp.eq.s32.totalorder %s14, 1
    %p181 = scmp.ne.s32.totalorder %s176, %s178
    %p182 = scmp.eq.s32.totalorder %s14, 0
    %p183 = por %p181, %p182
    %p184 = scmp.ne.s32.totalorder %s176, %s178
    %p185 = scmp.eq.s32.totalorder %s19, 1
    %p186 = por %p184, %p185
    %p187 = scmp.ne.s32.totalorder %s178, %s179
    %p188 = scmp.eq.s32.totalorder %s19, 0
    %p189 = por %p187, %p188
    %p190 = scmp.ne.s32.totalorder %s178, %s179
    %p191 = scmp.eq.s32.totalorder %s20, 1
    %p192 = por %p190, %p191
    %p194 = scmp.ne.s32.totalorder %s179, %s193
    %p195 = scmp.eq.s32.totalorder %s20, 0
    %p196 = por %p194, %p195
    %s197 = ssub.s32 %s21, %s33
    %s198 = ssub.s32 %s22, %s29
    %s199 = sor.u32 %s197, %s198
    %p200 = scmp.eq.s32.totalorder %s199, 0
    %s202 = sadd.s32 %s201, 1
    %s203 = scalar_select %p200, %s201, %s202
    %p206 = pneg %p200
    %p207 = scmp.eq.s32.totalorder %s14, 1
    %p208 = por %p206, %p207
    %p209 = scmp.ne.s32.totalorder %s201, %s204
    %p210 = scmp.eq.s32.totalorder %s14, 0
    %p211 = por %p209, %p210
    %p212 = scmp.ne.s32.totalorder %s201, %s204
    %p213 = scmp.eq.s32.totalorder %s19, 1
    %p214 = por %p212, %p213
    %p215 = scmp.ne.s32.totalorder %s204, %s205
    %p216 = scmp.eq.s32.totalorder %s19, 0
    %p217 = por %p215, %p216
    %p218 = scmp.ne.s32.totalorder %s204, %s205
    %p219 = scmp.eq.s32.totalorder %s20, 1
    %p220 = por %p218, %p219
    %p222 = scmp.ne.s32.totalorder %s205, %s221
    %p223 = scmp.eq.s32.totalorder %s20, 0
    %p224 = por %p222, %p223
    %s225 = ssub.s32 %s21, %s33
    %s226 = ssub.s32 %s22, %s29
    %s227 = sor.u32 %s225, %s226
    %p228 = scmp.eq.s32.totalorder %s227, 0
    %s230 = sadd.s32 %s229, 1
    %s231 = scalar_select %p228, %s229, %s230
    %p234 = pneg %p228
    %p235 = scmp.eq.s32.totalorder %s14, 1
    %p236 = por %p234, %p235
    %p237 = scmp.ne.s32.totalorder %s229, %s232
    %p238 = scmp.eq.s32.totalorder %s14, 0
    %p239 = por %p237, %p238
    %p240 = scmp.ne.s32.totalorder %s229, %s232
    %p241 = scmp.eq.s32.totalorder %s19, 1
    %p242 = por %p240, %p241
    %p243 = scmp.ne.s32.totalorder %s232, %s233
    %p244 = scmp.eq.s32.totalorder %s19, 0
    %p245 = por %p243, %p244
    %p246 = scmp.ne.s32.totalorder %s232, %s233
    %p247 = scmp.eq.s32.totalorder %s20, 1
    %p248 = por %p246, %p247
    %p250 = scmp.ne.s32.totalorder %s233, %s249
    %p251 = scmp.eq.s32.totalorder %s20, 0
    %p252 = por %p250, %p251
    %p253 = scmp.le.s32.totalorder 1, %s14
    %p254 = scmp.lt.s32.totalorder %s14, 3
    %p255 = pnand %p253, %p254
    %p256 = pneg %p255
    // Predicated region
    $region9: #{double_conv_block.3} parent=5 // pred_check
      _
    $region10: #{double_conv_block.3} parent=5 // pred_check_branch
      %258 = sbr.rel (%p255) target = $region12
    $region11: #{double_conv_block.3} parent=5 // pred_region
      %s259 = ssub.s32 %s14, 1
      // Predicated region
      $region13: #{double_conv_block.3} parent=11 // pred_check
        %p260 = pneg %p147
      $region14: #{double_conv_block.3} parent=11 // pred_check_branch
        %262 = sbr.rel (%p260) target = $region16
      $region15: #{double_conv_block.3} parent=11 // pred_region
        _
      $region16: #{double_conv_block.3} parent=11 // pred_fallthru
        _
      // Predicated region
      $region17: #{double_conv_block.3} parent=11 // pred_check
        %p263 = pneg %p168
      $region18: #{double_conv_block.3} parent=11 // pred_check_branch
        %265 = sbr.rel (%p263) target = $region20
      $region19: #{double_conv_block.3} parent=11 // pred_region
        _
      $region20: #{double_conv_block.3} parent=11 // pred_fallthru
        _
      // Predicated region
      $region21: #{double_conv_block.3} parent=11 // pred_check
        %p266 = pneg %p189
      $region22: #{double_conv_block.3} parent=11 // pred_check_branch
        %268 = sbr.rel (%p266) target = $region24
      $region23: #{double_conv_block.3} parent=11 // pred_region
        _
      $region24: #{double_conv_block.3} parent=11 // pred_fallthru
        _
    $region12: #{double_conv_block.3} parent=5 // pred_fallthru
      _
    %p269 = scmp.lt.s32.totalorder %s14, 2
    // Predicated region
    $region25: #{double_conv_block.3} parent=5 // pred_check
      %p270 = pneg %p269
    $region26: #{double_conv_block.3} parent=5 // pred_check_branch
      %272 = sbr.rel (%p270) target = $region28
    $region27: #{double_conv_block.3} parent=5 // pred_region
      // Predicated region
      $region29: #{double_conv_block.3} parent=27 // pred_check
        %p273 = pneg %p56
      $region30: #{double_conv_block.3} parent=27 // pred_check_branch
        %275 = sbr.rel (%p273) target = $region32
      $region31: #{double_conv_block.3} parent=27 // pred_region
        %s276 = smul.u32 %s22, 16
        %s277 = ssub.s32 %s276, 1
        %p278 = scmp.gt.s32.totalorder %s277, 0
        %s279 = scalar_select %p278, %s277, 0
        %p280 = scmp.lt.s32.totalorder %s21, 1
        %s281 = scalar_select %p280, %s21, 1
        %p282 = scmp.lt.s32.totalorder %s279, 15
        %s283 = scalar_select %p282, %s279, 15
        %s284 = smul.addr %s283, 2
        %s285 = smul.addr %s281, 32
        %s286 = sadd.s32 %s284, %s285
        %s287 = smul.addr %s286, 8
        %s288 = scalar_lea.vmem %s0, %s287
        %s289 = smul.u32 %s22, 16
        %s290 = ssub.s32 %s289, 1
        %p291 = scmp.gt.s32.totalorder %s290, 0
        %s292 = scalar_select %p291, %s290, 0
      $region32: #{double_conv_block.3} parent=27 // pred_fallthru
        _
      // Predicated region
      $region33: #{double_conv_block.3} parent=27 // pred_check
        %p293 = pneg %p84
      $region34: #{double_conv_block.3} parent=27 // pred_check_branch
        %295 = sbr.rel (%p293) target = $region36
      $region35: #{double_conv_block.3} parent=27 // pred_region
        %s296 = smul.u32 16, %s22
        %p297 = scmp.lt.s32.totalorder %s21, 1
        %s298 = scalar_select %p297, %s21, 1
        %p299 = scmp.lt.s32.totalorder %s296, 15
        %s300 = scalar_select %p299, %s296, 15
        %s301 = smul.addr %s300, 2
        %s302 = smul.addr %s298, 32
        %s303 = sadd.s32 %s301, %s302
        %s304 = smul.addr %s303, 8
        %s305 = scalar_lea.vmem %s1, %s304
        %s306 = smul.u32 16, %s22
      $region36: #{double_conv_block.3} parent=27 // pred_fallthru
        _
      // Predicated region
      $region37: #{double_conv_block.3} parent=27 // pred_check
        %p307 = pneg %p120
      $region38: #{double_conv_block.3} parent=27 // pred_check_branch
        %309 = sbr.rel (%p307) target = $region40
      $region39: #{double_conv_block.3} parent=27 // pred_region
        %s310 = sadd.s32 %s22, 1
        %s311 = smul.u32 %s310, 16
        %p312 = scmp.lt.s32.totalorder %s311, 15
        %s313 = scalar_select %p312, %s311, 15
        %p314 = scmp.lt.s32.totalorder %s21, 1
        %s315 = scalar_select %p314, %s21, 1
        %p316 = scmp.lt.s32.totalorder %s313, 15
        %s317 = scalar_select %p316, %s313, 15
        %s318 = smul.addr %s317, 2
        %s319 = smul.addr %s315, 32
        %s320 = sadd.s32 %s318, %s319
        %s321 = smul.addr %s320, 8
        %s322 = scalar_lea.vmem %s2, %s321
        %s323 = sadd.s32 %s22, 1
        %s324 = smul.u32 %s323, 16
        %p325 = scmp.lt.s32.totalorder %s324, 15
        %s326 = scalar_select %p325, %s324, 15
      $region40: #{double_conv_block.3} parent=27 // pred_fallthru
        _
    $region28: #{double_conv_block.3} parent=5 // pred_fallthru
      _
    %p327 = scmp.le.s32.totalorder 1, %s14
    %p328 = scmp.lt.s32.totalorder %s14, 3
    %p329 = pnand %p327, %p328
    %p330 = pneg %p329
    // Predicated region
    $region41: #{double_conv_block.3} parent=5 // pred_check
      _
    $region42: #{double_conv_block.3} parent=5 // pred_check_branch
      %332 = sbr.rel (%p329) target = $region44
    $region43: #{double_conv_block.3} parent=5 // pred_region
      %s333 = ssub.s32 %s14, 1
      %s334 = smul.u32 %s24, 16
      %s335 = ssub.s32 %s334, 1
      %p336 = scmp.gt.s32.totalorder %s335, 0
      %s337 = scalar_select %p336, %s335, 0
      %p338 = scmp.lt.s32.totalorder %s23, 1
      %s339 = scalar_select %p338, %s23, 1
      %p340 = scmp.lt.s32.totalorder %s337, 15
      %s341 = scalar_select %p340, %s337, 15
      %s342 = smul.addr %s341, 2
      %s343 = smul.addr %s339, 32
      %s344 = sadd.s32 %s342, %s343
      %s345 = smul.addr %s344, 8
      %s346 = scalar_lea.vmem %s0, %s345
      %p347 = pneg %p62
      %p348 = pneg %p59
      %s349 = smul.u32 16, %s24
      %p350 = scmp.lt.s32.totalorder %s23, 1
      %s351 = scalar_select %p350, %s23, 1
      %p352 = scmp.lt.s32.totalorder %s349, 15
      %s353 = scalar_select %p352, %s349, 15
      %s354 = smul.addr %s353, 2
      %s355 = smul.addr %s351, 32
      %s356 = sadd.s32 %s354, %s355
      %s357 = smul.addr %s356, 8
      %s358 = scalar_lea.vmem %s1, %s357
      %p359 = pneg %p90
      %p360 = pneg %p87
      %s361 = sadd.s32 %s24, 1
      %s362 = smul.u32 %s361, 16
      %p363 = scmp.lt.s32.totalorder %s362, 15
      %s364 = scalar_select %p363, %s362, 15
      %p365 = scmp.lt.s32.totalorder %s23, 1
      %s366 = scalar_select %p365, %s23, 1
      %p367 = scmp.lt.s32.totalorder %s364, 15
      %s368 = scalar_select %p367, %s364, 15
      %s369 = smul.addr %s368, 2
      %s370 = smul.addr %s366, 32
      %s371 = sadd.s32 %s369, %s370
      %s372 = smul.addr %s371, 8
      %s373 = scalar_lea.vmem %s2, %s372
      %p374 = pneg %p126
      %p375 = pneg %p123
      %p376 = pneg %p147
      %p377 = pneg %p144
      %p378 = pneg %p168
      %p379 = pneg %p165
      %p380 = pneg %p189
      %p381 = pneg %p186
      %p382 = pneg %p217
      %p383 = pneg %p214
      %s384 = smul.u32 16, %s24
      %p385 = scmp.lt.s32.totalorder %s23, 1
      %s386 = scalar_select %p385, %s23, 1
      %p387 = scmp.lt.s32.totalorder %s384, 15
      %s388 = scalar_select %p387, %s384, 15
      %s389 = smul.addr %s388, 2
      %s390 = smul.addr %s386, 32
      %s391 = sadd.s32 %s389, %s390
      %s392 = smul.addr %s391, 8
      %s393 = scalar_lea.vmem %s6, %s392
      %p394 = pneg %p245
      %p395 = pneg %p242
      %p396 = scmp.lt.s32.totalorder %s23, 1
      %s397 = scalar_select %p396, %s23, 1
      %p398 = scmp.lt.s32.totalorder %s24, 0
      %s399 = scalar_select %p398, %s24, 0
      %s400 = sadd.s32 %s399, %s397
      %s401 = smul.addr %s400, 2
      %s402 = scalar_lea.vmem %s7, %s401
      %s403 = smul.u32 %s24, 16
      %s404 = ssub.s32 %s403, 1
      %p405 = scmp.gt.s32.totalorder %s404, 0
      %s406 = scalar_select %p405, %s404, 0
      %p407 = scmp.lt.s32.totalorder %s23, 1
      %s408 = scalar_select %p407, %s23, 1
      %p409 = scmp.lt.s32.totalorder %s406, 15
      %s410 = scalar_select %p409, %s406, 15
      %s411 = smul.addr %s410, 2
      %s412 = smul.addr %s408, 32
      %s413 = sadd.s32 %s411, %s412
      %s414 = smul.addr %s413, 8
      %s415 = scalar_lea.vmem %s0, %s414
      %s416 = smul.u32 %s24, 16
      %s417 = ssub.s32 %s416, 1
      %p418 = scmp.gt.s32.totalorder %s417, 0
      %s419 = scalar_select %p418, %s417, 0
      %s420 = smul.u32 16, %s24
      %p421 = scmp.lt.s32.totalorder %s23, 1
      %s422 = scalar_select %p421, %s23, 1
      %p423 = scmp.lt.s32.totalorder %s420, 15
      %s424 = scalar_select %p423, %s420, 15
      %s425 = smul.addr %s424, 2
      %s426 = smul.addr %s422, 32
      %s427 = sadd.s32 %s425, %s426
      %s428 = smul.addr %s427, 8
      %s429 = scalar_lea.vmem %s1, %s428
      %s430 = smul.u32 16, %s24
      %s431 = sadd.s32 %s24, 1
      %s432 = smul.u32 %s431, 16
      %p433 = scmp.lt.s32.totalorder %s432, 15
      %s434 = scalar_select %p433, %s432, 15
      %p435 = scmp.lt.s32.totalorder %s23, 1
      %s436 = scalar_select %p435, %s23, 1
      %p437 = scmp.lt.s32.totalorder %s434, 15
      %s438 = scalar_select %p437, %s434, 15
      %s439 = smul.addr %s438, 2
      %s440 = smul.addr %s436, 32
      %s441 = sadd.s32 %s439, %s440
      %s442 = smul.addr %s441, 8
      %s443 = scalar_lea.vmem %s2, %s442
      %s444 = sadd.s32 %s24, 1
      %s445 = smul.u32 %s444, 16
      %p446 = scmp.lt.s32.totalorder %s445, 15
      %s447 = scalar_select %p446, %s445, 15
      %s448 = smul.u32 16, %s24
      %p449 = scmp.lt.s32.totalorder %s23, 1
      %s450 = scalar_select %p449, %s23, 1
      %p451 = scmp.lt.s32.totalorder %s448, 15
      %s452 = scalar_select %p451, %s448, 15
      %s453 = smul.addr %s452, 2
      %s454 = smul.addr %s450, 32
      %s455 = sadd.s32 %s453, %s454
      %s456 = smul.addr %s455, 8
      %s457 = scalar_lea.vmem %s6, %s456
      %s458 = smul.u32 16, %s24
      %p459 = scmp.lt.s32.totalorder %s23, 1
      %s460 = scalar_select %p459, %s23, 1
      %p461 = scmp.lt.s32.totalorder %s24, 0
      %s462 = scalar_select %p461, %s24, 0
      %s463 = sadd.s32 %s462, %s460
      %s464 = smul.addr %s463, 2
      %s465 = scalar_lea.vmem %s7, %s464
      %v466 = vld [vmem:[%s415] sm:$0xff]
      %v467 = vld [vmem:[%s415 + $0x8] sm:$0xff]
      %v468 = vld [vmem:[%s4] sm:$0x1]
      %v470 = vlaneseq
      %v471 = vshrl.u32 %v470, 7
      %v472 = vsub.s32 0, %v471
      %v473 = vrot.slane %v468, %v472
      %v475 = vmul.f32 %v466, %v473
      %v476 = vmul.f32 %v467, %v473
      %v477 = vld [vmem:[%s5] sm:$0x1]
      %v479 = vlaneseq
      %v480 = vshrl.u32 %v479, 7
      %v481 = vsub.s32 0, %v480
      %v482 = vrot.slane %v477, %v481
      %v484 = vadd.f32 %v475, %v482
      %v485 = vadd.f32 %v476, %v482
      %v486 = vmax.f32 %v484, 0.0
      %v487 = vmax.f32 %v485, 0.0
      %p488 = scmp.eq.s32.totalorder %s24, 0
      %s489 = scalar_select %p488, 0.0, 1.0
      %v490 = vstv %s489
      %v491 = vmul.f32 %v486, %v490
      %v492 = vmul.f32 %v487, %v490
      %v493 = vld [vmem:[%s429] sm:$0xff]
      %v494 = vld [vmem:[%s429 + $0x8] sm:$0xff]
      %v495 = vld [vmem:[%s429 + $0x10] sm:$0xff]
      %v496 = vld [vmem:[%s429 + $0x18] sm:$0xff]
      %v497 = vld [vmem:[%s429 + $0x20] sm:$0xff]
      %v498 = vld [vmem:[%s429 + $0x28] sm:$0xff]
      %v499 = vld [vmem:[%s429 + $0x30] sm:$0xff]
      %v500 = vld [vmem:[%s429 + $0x38] sm:$0xff]
      %v501 = vld [vmem:[%s429 + $0x40] sm:$0xff]
      %v502 = vld [vmem:[%s429 + $0x48] sm:$0xff]
      %v503 = vld [vmem:[%s429 + $0x50] sm:$0xff]
      %v504 = vld [vmem:[%s429 + $0x58] sm:$0xff]
      %v505 = vld [vmem:[%s429 + $0x60] sm:$0xff]
      %v506 = vld [vmem:[%s429 + $0x68] sm:$0xff]
      %v507 = vld [vmem:[%s429 + $0x70] sm:$0xff]
      %v508 = vld [vmem:[%s429 + $0x78] sm:$0xff]
      %v509 = vld [vmem:[%s429 + $0x80] sm:$0xff]
      %v510 = vld [vmem:[%s429 + $0x88] sm:$0xff]
      %v511 = vld [vmem:[%s429 + $0x90] sm:$0xff]
      %v512 = vld [vmem:[%s429 + $0x98] sm:$0xff]
      %v513 = vld [vmem:[%s429 + $0xa0] sm:$0xff]
      %v514 = vld [vmem:[%s429 + $0xa8] sm:$0xff]
      %v515 = vld [vmem:[%s429 + $0xb0] sm:$0xff]
      %v516 = vld [vmem:[%s429 + $0xb8] sm:$0xff]
      %v517 = vld [vmem:[%s429 + $0xc0] sm:$0xff]
      %v518 = vld [vmem:[%s429 + $0xc8] sm:$0xff]
      %v519 = vld [vmem:[%s429 + $0xd0] sm:$0xff]
      %v520 = vld [vmem:[%s429 + $0xd8] sm:$0xff]
      %v521 = vld [vmem:[%s429 + $0xe0] sm:$0xff]
      %v522 = vld [vmem:[%s429 + $0xe8] sm:$0xff]
      %v523 = vld [vmem:[%s429 + $0xf0] sm:$0xff]
      %v524 = vld [vmem:[%s429 + $0xf8] sm:$0xff]
      %v525 = vmul.f32 %v493, %v473
      %v526 = vmul.f32 %v494, %v473
      %v527 = vmul.f32 %v495, %v473
      %v528 = vmul.f32 %v496, %v473
      %v529 = vmul.f32 %v497, %v473
      %v530 = vmul.f32 %v498, %v473
      %v531 = vmul.f32 %v499, %v473
      %v532 = vmul.f32 %v500, %v473
      %v533 = vmul.f32 %v501, %v473
      %v534 = vmul.f32 %v502, %v473
      %v535 = vmul.f32 %v503, %v473
      %v536 = vmul.f32 %v504, %v473
      %v537 = vmul.f32 %v505, %v473
      %v538 = vmul.f32 %v506, %v473
      %v539 = vmul.f32 %v507, %v473
      %v540 = vmul.f32 %v508, %v473
      %v541 = vmul.f32 %v509, %v473
      %v542 = vmul.f32 %v510, %v473
      %v543 = vmul.f32 %v511, %v473
      %v544 = vmul.f32 %v512, %v473
      %v545 = vmul.f32 %v513, %v473
      %v546 = vmul.f32 %v514, %v473
      %v547 = vmul.f32 %v515, %v473
      %v548 = vmul.f32 %v516, %v473
      %v549 = vmul.f32 %v517, %v473
      %v550 = vmul.f32 %v518, %v473
      %v551 = vmul.f32 %v519, %v473
      %v552 = vmul.f32 %v520, %v473
      %v553 = vmul.f32 %v521, %v473
      %v554 = vmul.f32 %v522, %v473
      %v555 = vmul.f32 %v523, %v473
      %v556 = vmul.f32 %v524, %v473
      %v557 = vadd.f32 %v525, %v482
      %v558 = vadd.f32 %v526, %v482
      %v559 = vadd.f32 %v527, %v482
      %v560 = vadd.f32 %v528, %v482
      %v561 = vadd.f32 %v529, %v482
      %v562 = vadd.f32 %v530, %v482
      %v563 = vadd.f32 %v531, %v482
      %v564 = vadd.f32 %v532, %v482
      %v565 = vadd.f32 %v533, %v482
      %v566 = vadd.f32 %v534, %v482
      %v567 = vadd.f32 %v535, %v482
      %v568 = vadd.f32 %v536, %v482
      %v569 = vadd.f32 %v537, %v482
      %v570 = vadd.f32 %v538, %v482
      %v571 = vadd.f32 %v539, %v482
      %v572 = vadd.f32 %v540, %v482
      %v573 = vadd.f32 %v541, %v482
      %v574 = vadd.f32 %v542, %v482
      %v575 = vadd.f32 %v543, %v482
      %v576 = vadd.f32 %v544, %v482
      %v577 = vadd.f32 %v545, %v482
      %v578 = vadd.f32 %v546, %v482
      %v579 = vadd.f32 %v547, %v482
      %v580 = vadd.f32 %v548, %v482
      %v581 = vadd.f32 %v549, %v482
      %v582 = vadd.f32 %v550, %v482
      %v583 = vadd.f32 %v551, %v482
      %v584 = vadd.f32 %v552, %v482
      %v585 = vadd.f32 %v553, %v482
      %v586 = vadd.f32 %v554, %v482
      %v587 = vadd.f32 %v555, %v482
      %v588 = vadd.f32 %v556, %v482
      %v589 = vmax.f32 %v557, 0.0
      %v590 = vmax.f32 %v558, 0.0
      %v591 = vmax.f32 %v559, 0.0
      %v592 = vmax.f32 %v560, 0.0
      %v593 = vmax.f32 %v561, 0.0
      %v594 = vmax.f32 %v562, 0.0
      %v595 = vmax.f32 %v563, 0.0
      %v596 = vmax.f32 %v564, 0.0
      %v597 = vmax.f32 %v565, 0.0
      %v598 = vmax.f32 %v566, 0.0
      %v599 = vmax.f32 %v567, 0.0
      %v600 = vmax.f32 %v568, 0.0
      %v601 = vmax.f32 %v569, 0.0
      %v602 = vmax.f32 %v570, 0.0
      %v603 = vmax.f32 %v571, 0.0
      %v604 = vmax.f32 %v572, 0.0
      %v605 = vmax.f32 %v573, 0.0
      %v606 = vmax.f32 %v574, 0.0
      %v607 = vmax.f32 %v575, 0.0
      %v608 = vmax.f32 %v576, 0.0
      %v609 = vmax.f32 %v577, 0.0
      %v610 = vmax.f32 %v578, 0.0
      %v611 = vmax.f32 %v579, 0.0
      %v612 = vmax.f32 %v580, 0.0
      %v613 = vmax.f32 %v581, 0.0
      %v614 = vmax.f32 %v582, 0.0
      %v615 = vmax.f32 %v583, 0.0
      %v616 = vmax.f32 %v584, 0.0
      %v617 = vmax.f32 %v585, 0.0
      %v618 = vmax.f32 %v586, 0.0
      %v619 = vmax.f32 %v587, 0.0
      %v620 = vmax.f32 %v588, 0.0
      %v621 = vld [vmem:[%s443] sm:$0xff]
      %v622 = vld [vmem:[%s443 + $0x8] sm:$0xff]
      %v623 = vmul.f32 %v621, %v473
      %v624 = vmul.f32 %v622, %v473
      %v625 = vadd.f32 %v623, %v482
      %v626 = vadd.f32 %v624, %v482
      %v627 = vmax.f32 %v625, 0.0
      %v628 = vmax.f32 %v626, 0.0
      %s629 = sadd.s32 %s24, 1
      %s630 = smul.u32 %s629, 16
      %p631 = scmp.ge.s32.totalorder %s630, 16
      %s632 = scalar_select %p631, 0.0, 1.0
      %v633 = vstv %s632
      %v634 = vmul.f32 %v627, %v633
      %v635 = vmul.f32 %v628, %v633
      %v636 = vld [vmem:[%s3] sm:$0xff]
      %v637 = vld [vmem:[%s3 + $0x8] sm:$0xff]
      %v638 = vld [vmem:[%s3 + $0x10] sm:$0xff]
      %v639 = vld [vmem:[%s3 + $0x18] sm:$0xff]
      %v640 = vld [vmem:[%s3 + $0x20] sm:$0xff]
      %v641 = vld [vmem:[%s3 + $0x28] sm:$0xff]
      %v642 = vld [vmem:[%s3 + $0x30] sm:$0xff]
      %v643 = vld [vmem:[%s3 + $0x38] sm:$0xff]
      %v644 = vld [vmem:[%s3 + $0x40] sm:$0xff]
      %v645 = vld [vmem:[%s3 + $0x48] sm:$0xff]
      %v646 = vld [vmem:[%s3 + $0x50] sm:$0xff]
      %v647 = vld [vmem:[%s3 + $0x58] sm:$0xff]
      %v648 = vld [vmem:[%s3 + $0x60] sm:$0xff]
      %v649 = vld [vmem:[%s3 + $0x68] sm:$0xff]
      %v650 = vld [vmem:[%s3 + $0x70] sm:$0xff]
      %v651 = vld [vmem:[%s3 + $0x78] sm:$0xff]
      %v652 = vld [vmem:[%s3 + $0x80] sm:$0xff]
      %v653 = vld [vmem:[%s3 + $0x88] sm:$0xff]
      %v654 = vld [vmem:[%s3 + $0x90] sm:$0xff]
      %v655 = vld [vmem:[%s3 + $0x98] sm:$0xff]
      %v656 = vld [vmem:[%s3 + $0xa0] sm:$0xff]
      %v657 = vld [vmem:[%s3 + $0xa8] sm:$0xff]
      %v658 = vld [vmem:[%s3 + $0xb0] sm:$0xff]
      %v659 = vld [vmem:[%s3 + $0xb8] sm:$0xff]
      %v660 = vld [vmem:[%s3 + $0xc0] sm:$0xff]
      %v661 = vld [vmem:[%s3 + $0xc8] sm:$0xff]
      %v662 = vld [vmem:[%s3 + $0xd0] sm:$0xff]
      %v663 = vld [vmem:[%s3 + $0xd8] sm:$0xff]
      %v664 = vld [vmem:[%s3 + $0xe0] sm:$0xff]
      %v665 = vld [vmem:[%s3 + $0xe8] sm:$0xff]
      %v666 = vld [vmem:[%s3 + $0xf0] sm:$0xff]
      %v667 = vld [vmem:[%s3 + $0xf8] sm:$0xff]
      %v668 = vld [vmem:[%s3 + $0x100] sm:$0xff]
      %v669 = vld [vmem:[%s3 + $0x108] sm:$0xff]
      %v670 = vld [vmem:[%s3 + $0x110] sm:$0xff]
      %v671 = vld [vmem:[%s3 + $0x118] sm:$0xff]
      %v672 = vld [vmem:[%s3 + $0x120] sm:$0xff]
      %v673 = vld [vmem:[%s3 + $0x128] sm:$0xff]
      %v674 = vld [vmem:[%s3 + $0x130] sm:$0xff]
      %v675 = vld [vmem:[%s3 + $0x138] sm:$0xff]
      %v676 = vld [vmem:[%s3 + $0x140] sm:$0xff]
      %v677 = vld [vmem:[%s3 + $0x148] sm:$0xff]
      %v678 = vld [vmem:[%s3 + $0x150] sm:$0xff]
      %v679 = vld [vmem:[%s3 + $0x158] sm:$0xff]
      %v680 = vld [vmem:[%s3 + $0x160] sm:$0xff]
      %v681 = vld [vmem:[%s3 + $0x168] sm:$0xff]
      %v682 = vld [vmem:[%s3 + $0x170] sm:$0xff]
      %v683 = vld [vmem:[%s3 + $0x178] sm:$0xff]
      %v684 = vld [vmem:[%s3 + $0x180] sm:$0xff]
      %v685 = vld [vmem:[%s3 + $0x188] sm:$0xff]
      %v686 = vld [vmem:[%s3 + $0x190] sm:$0xff]
      %v687 = vld [vmem:[%s3 + $0x198] sm:$0xff]
      %v688 = vld [vmem:[%s3 + $0x1a0] sm:$0xff]
      %v689 = vld [vmem:[%s3 + $0x1a8] sm:$0xff]
      %v690 = vld [vmem:[%s3 + $0x1b0] sm:$0xff]
      %v691 = vld [vmem:[%s3 + $0x1b8] sm:$0xff]
      %v692 = vld [vmem:[%s3 + $0x1c0] sm:$0xff]
      %v693 = vld [vmem:[%s3 + $0x1c8] sm:$0xff]
      %v694 = vld [vmem:[%s3 + $0x1d0] sm:$0xff]
      %v695 = vld [vmem:[%s3 + $0x1d8] sm:$0xff]
      %v696 = vld [vmem:[%s3 + $0x1e0] sm:$0xff]
      %v697 = vld [vmem:[%s3 + $0x1e8] sm:$0xff]
      %v698 = vld [vmem:[%s3 + $0x1f0] sm:$0xff]
      %v699 = vld [vmem:[%s3 + $0x1f8] sm:$0xff]
      %v700 = vld [vmem:[%s3 + $0x200] sm:$0xff]
      %v701 = vld [vmem:[%s3 + $0x208] sm:$0xff]
      %v702 = vld [vmem:[%s3 + $0x210] sm:$0xff]
      %v703 = vld [vmem:[%s3 + $0x218] sm:$0xff]
      %v704 = vld [vmem:[%s3 + $0x220] sm:$0xff]
      %v705 = vld [vmem:[%s3 + $0x228] sm:$0xff]
      %v706 = vld [vmem:[%s3 + $0x230] sm:$0xff]
      %v707 = vld [vmem:[%s3 + $0x238] sm:$0xff]
      %v708 = vld [vmem:[%s3 + $0x240] sm:$0xff]
      %v709 = vld [vmem:[%s3 + $0x248] sm:$0xff]
      %v710 = vld [vmem:[%s3 + $0x250] sm:$0xff]
      %v711 = vld [vmem:[%s3 + $0x258] sm:$0xff]
      %v712 = vld [vmem:[%s3 + $0x260] sm:$0xff]
      %v713 = vld [vmem:[%s3 + $0x268] sm:$0xff]
      %v714 = vld [vmem:[%s3 + $0x270] sm:$0xff]
      %v715 = vld [vmem:[%s3 + $0x278] sm:$0xff]
      %v716 = vld [vmem:[%s3 + $0x280] sm:$0xff]
      %v717 = vld [vmem:[%s3 + $0x288] sm:$0xff]
      %v718 = vld [vmem:[%s3 + $0x290] sm:$0xff]
      %v719 = vld [vmem:[%s3 + $0x298] sm:$0xff]
      %v720 = vld [vmem:[%s3 + $0x2a0] sm:$0xff]
      %v721 = vld [vmem:[%s3 + $0x2a8] sm:$0xff]
      %v722 = vld [vmem:[%s3 + $0x2b0] sm:$0xff]
      %v723 = vld [vmem:[%s3 + $0x2b8] sm:$0xff]
      %v724 = vld [vmem:[%s3 + $0x2c0] sm:$0xff]
      %v725 = vld [vmem:[%s3 + $0x2c8] sm:$0xff]
      %v726 = vld [vmem:[%s3 + $0x2d0] sm:$0xff]
      %v727 = vld [vmem:[%s3 + $0x2d8] sm:$0xff]
      %v728 = vld [vmem:[%s3 + $0x2e0] sm:$0xff]
      %v729 = vld [vmem:[%s3 + $0x2e8] sm:$0xff]
      %v730 = vld [vmem:[%s3 + $0x2f0] sm:$0xff]
      %v731 = vld [vmem:[%s3 + $0x2f8] sm:$0xff]
      %v732 = vld [vmem:[%s3 + $0x300] sm:$0xff]
      %v733 = vld [vmem:[%s3 + $0x308] sm:$0xff]
      %v734 = vld [vmem:[%s3 + $0x310] sm:$0xff]
      %v735 = vld [vmem:[%s3 + $0x318] sm:$0xff]
      %v736 = vld [vmem:[%s3 + $0x320] sm:$0xff]
      %v737 = vld [vmem:[%s3 + $0x328] sm:$0xff]
      %v738 = vld [vmem:[%s3 + $0x330] sm:$0xff]
      %v739 = vld [vmem:[%s3 + $0x338] sm:$0xff]
      %v740 = vld [vmem:[%s3 + $0x340] sm:$0xff]
      %v741 = vld [vmem:[%s3 + $0x348] sm:$0xff]
      %v742 = vld [vmem:[%s3 + $0x350] sm:$0xff]
      %v743 = vld [vmem:[%s3 + $0x358] sm:$0xff]
      %v744 = vld [vmem:[%s3 + $0x360] sm:$0xff]
      %v745 = vld [vmem:[%s3 + $0x368] sm:$0xff]
      %v746 = vld [vmem:[%s3 + $0x370] sm:$0xff]
      %v747 = vld [vmem:[%s3 + $0x378] sm:$0xff]
      %v748 = vld [vmem:[%s3 + $0x380] sm:$0xff]
      %v749 = vld [vmem:[%s3 + $0x388] sm:$0xff]
      %v750 = vld [vmem:[%s3 + $0x390] sm:$0xff]
      %v751 = vld [vmem:[%s3 + $0x398] sm:$0xff]
      %v752 = vld [vmem:[%s3 + $0x3a0] sm:$0xff]
      %v753 = vld [vmem:[%s3 + $0x3a8] sm:$0xff]
      %v754 = vld [vmem:[%s3 + $0x3b0] sm:$0xff]
      %v755 = vld [vmem:[%s3 + $0x3b8] sm:$0xff]
      %v756 = vld [vmem:[%s3 + $0x3c0] sm:$0xff]
      %v757 = vld [vmem:[%s3 + $0x3c8] sm:$0xff]
      %v758 = vld [vmem:[%s3 + $0x3d0] sm:$0xff]
      %v759 = vld [vmem:[%s3 + $0x3d8] sm:$0xff]
      %v760 = vld [vmem:[%s3 + $0x3e0] sm:$0xff]
      %v761 = vld [vmem:[%s3 + $0x3e8] sm:$0xff]
      %v762 = vld [vmem:[%s3 + $0x3f0] sm:$0xff]
      %v763 = vld [vmem:[%s3 + $0x3f8] sm:$0xff]
      %v764 = vld [vmem:[%s3 + $0x400] sm:$0xff]
      %v765 = vld [vmem:[%s3 + $0x408] sm:$0xff]
      %v766 = vld [vmem:[%s3 + $0x410] sm:$0xff]
      %v767 = vld [vmem:[%s3 + $0x418] sm:$0xff]
      %v768 = vld [vmem:[%s3 + $0x420] sm:$0xff]
      %v769 = vld [vmem:[%s3 + $0x428] sm:$0xff]
      %v770 = vld [vmem:[%s3 + $0x430] sm:$0xff]
      %v771 = vld [vmem:[%s3 + $0x438] sm:$0xff]
      %v772 = vld [vmem:[%s3 + $0x440] sm:$0xff]
      %v773 = vld [vmem:[%s3 + $0x448] sm:$0xff]
      %v774 = vld [vmem:[%s3 + $0x450] sm:$0xff]
      %v775 = vld [vmem:[%s3 + $0x458] sm:$0xff]
      %v776 = vld [vmem:[%s3 + $0x460] sm:$0xff]
      %v777 = vld [vmem:[%s3 + $0x468] sm:$0xff]
      %v778 = vld [vmem:[%s3 + $0x470] sm:$0xff]
      %v779 = vld [vmem:[%s3 + $0x478] sm:$0xff]
      %780 = vmatprep.subr.mxu0 %v637
      %781 = vmatpush1.msra.mxu0 %v636
      %782 = vmatprep.subr.mxu0 %v640
      %783 = vmatpush1.msra.mxu0 %v639
      %784 = vmatprep.subr.mxu0 %v643
      %785 = vmatpush1.msra.mxu0 %v642
      %786 = vmatprep.subr.mxu0 %v646
      %787 = vmatpush1.msra.mxu0 %v645
      %788 = vmatprep.subr.mxu0 %v649
      %789 = vmatpush1.msra.mxu0 %v648
      %790 = vmatprep.subr.mxu0 %v652
      %791 = vmatpush1.msra.mxu0 %v651
      %792 = vmatprep.subr.mxu0 %v655
      %793 = vmatpush1.msra.mxu0 %v654
      %794 = vmatprep.subr.mxu0 %v658
      %795 = vmatpush1.msra.mxu0 %v657
      %796 = vmatprep.subr.mxu0 %v661
      %797 = vmatpush1.msra.mxu0 %v660
      %798 = vmatprep.subr.mxu0 %v664
      %799 = vmatpush1.msra.mxu0 %v663
      %800 = vmatprep.subr.mxu0 %v667
      %801 = vmatpush1.msra.mxu0 %v666
      %802 = vmatprep.subr.mxu0 %v670
      %803 = vmatpush1.msra.mxu0 %v669
      %804 = vmatprep.subr.mxu0 %v673
      %805 = vmatpush1.msra.mxu0 %v672
      %806 = vmatprep.subr.mxu0 %v676
      %807 = vmatpush1.msra.mxu0 %v675
      %808 = vmatprep.subr.mxu0 %v679
      %809 = vmatpush1.msra.mxu0 %v678
      %810 = vmatprep.subr.mxu0 %v682
      %811 = vmatpush1.msra.mxu0 %v681
      %812 = vmatprep.subr.mxu0 %v685
      %813 = vmatpush1.msra.mxu0 %v684
      %814 = vmatprep.subr.mxu0 %v688
      %815 = vmatpush1.msra.mxu0 %v687
      %816 = vmatprep.subr.mxu0 %v691
      %817 = vmatpush1.msra.mxu0 %v690
      %818 = vmatprep.subr.mxu0 %v694
      %819 = vmatpush1.msra.mxu0 %v693
      %820 = vmatprep.subr.mxu0 %v697
      %821 = vmatpush1.msra.mxu0 %v696
      %822 = vmatprep.subr.mxu0 %v700
      %823 = vmatpush1.msra.mxu0 %v699
      %824 = vmatprep.subr.mxu0 %v703
      %825 = vmatpush1.msra.mxu0 %v702
      %826 = vmatprep.subr.mxu0 %v706
      %827 = vmatpush1.msra.mxu0 %v705
      %828 = vmatprep.subr.mxu0 %v709
      %829 = vmatpush1.msra.mxu0 %v708
      %830 = vmatprep.subr.mxu0 %v712
      %831 = vmatpush1.msra.mxu0 %v711
      %832 = vmatprep.subr.mxu0 %v715
      %833 = vmatpush1.msra.mxu0 %v714
      %834 = vmatprep.subr.mxu0 %v718
      %835 = vmatpush1.msra.mxu0 %v717
      %836 = vmatprep.subr.mxu0 %v721
      %837 = vmatpush1.msra.mxu0 %v720
      %838 = vmatprep.subr.mxu0 %v724
      %839 = vmatpush1.msra.mxu0 %v723
      %840 = vmatprep.subr.mxu0 %v727
      %841 = vmatpush1.msra.mxu0 %v726
      %842 = vmatprep.subr.mxu0 %v730
      %843 = vmatpush1.msra.mxu0 %v729
      %844 = vmatprep.mubr.f32.mxu0 %v589
      %845 = vmatmul.mubr.f32.gmra.mrb[0].mxu0 %v491
      %v846 = vpop.f32.mrb[0].mxu0
      %v847 = vadd.f32 0.0, %v846
      %v848 = vpop.f32.mrb[0].mxu0
      %v849 = vadd.f32 0.0, %v848
      %850 = vmatprep.mubr.f32.mxu0 %v590
      %851 = vmatmul.mubr.f32.gmra.mrb[0].mxu0 %v492
      %v852 = vpop.f32.mrb[0].mxu0
      %v853 = vadd.f32 0.0, %v852
      %v854 = vpop.f32.mrb[0].mxu0
      %v855 = vadd.f32 0.0, %v854
      %856 = vmatprep.mubr.f32.mxu0 %v591
      %857 = vmatmul.mubr.f32.gmra.mrb[0].mxu0 %v589
      %v858 = vpop.f32.mrb[0].mxu0
      %v859 = vadd.f32 0.0, %v858
      %v860 = vpop.f32.mrb[0].mxu0
      %v861 = vadd.f32 0.0, %v860
      %862 = vmatprep.mubr.f32.mxu0 %v592
      %863 = vmatmul.mubr.f32.gmra.mrb[0].mxu0 %v590
      %v864 = vpop.f32.mrb[0].mxu0
      %v865 = vadd.f32 0.0, %v864
      %v866 = vpop.f32.mrb[0].mxu0
      %v867 = vadd.f32 0.0, %v866
      %868 = vmatprep.mubr.f32.mxu0 %v593
      %869 = vmatmul.mubr.f32.gmra.mrb[0].mxu0 %v591
      %v870 = vpop.f32.mrb[0].mxu0
      %v871 = vadd.f32 0.0, %v870
      %v872 = vpop.f32.mrb[0].mxu0
      %v873 = vadd.f32 0.0, %v872
      %874 = vmatprep.mubr.f32.mxu0 %v594
      %875 = vmatmul.mubr.f32.gmra.mrb[0].mxu0 %v592
      %v876 = vpop.f32.mrb[0].mxu0
      %v877 = vadd.f32 0.0, %v876
      %v878 = vpop.f32.mrb[0].mxu0
      %v879 = vadd.f32 0.0, %v878
      %880 = vmatprep.mubr.f32.mxu0 %v595
      %881 = vmatmul.mubr.f32.gmra.mrb[0].mxu0 %v593
      %v882 = vpop.f32.mrb[0].mxu0
      %v883 = vadd.f32 0.0, %v882
      %v884 = vpop.f32.mrb[0].mxu0
      %v885 = vadd.f32 0.0, %v884
      %886 = vmatprep.mubr.f32.mxu0 %v596
      %887 = vmatmul.mubr.f32.gmra.mrb[0].mxu0 %v594
      %v888 = vpop.f32.mrb[0].mxu0
      %v889 = vadd.f32 0.0, %v888
      %v890 = vpop.f32.mrb[0].mxu0
      %v891 = vadd.f32 0.0, %v890
      %892 = vmatprep.mubr.f32.mxu0 %v597
      %893 = vmatmul.mubr.f32.gmra.mrb[0].mxu0 %v595
      %v894 = vpop.f32.mrb[0].mxu0
      %v895 = vadd.f32 0.0, %v894
      %v896 = vpop.f32.mrb[0].mxu0
      %v897 = vadd.f32 0.0, %v896
      %898 = vmatprep.mubr.f32.mxu0 %v598
      %899 = vmatmul.mubr.f32.gmra.mrb[0].mxu0 %v596
      %v900 = vpop.f32.mrb[0].mxu0
      %v901 = vadd.f32 0.0, %v900
      %v902 = vpop.f32.mrb[0].mxu0
      %v903 = vadd.f32 0.0, %v902
      %904 = vmatprep.mubr.f32.mxu0 %v599
      %905 = vmatmul.mubr.f32.gmra.mrb[0].mxu0 %v597
      %v906 = vpop.f32.mrb[0].mxu0
      %v907 = vadd.f32 0.0, %v906
      %v908 = vpop.f32.mrb[0].mxu0
      %v909 = vadd.f32 0.0, %v908
      %910 = vmatprep.mubr.f32.mxu0 %v600
      %911 = vmatmul.mubr.f32.gmra.mrb[0].mxu0 %v598
      %v912 = vpop.f32.mrb[0].mxu0
      %v913 = vadd.f32 0.0, %v912
      %v914 = vpop.f32.mrb[0].mxu0
      %v915 = vadd.f32 0.0, %v914
      %916 = vmatprep.mubr.f32.mxu0 %v601
      %917 = vmatmul.mubr.f32.gmra.mrb[0].mxu0 %v599
      %v918 = vpop.f32.mrb[0].mxu0
      %v919 = vadd.f32 0.0, %v918
      %v920 = vpop.f32.mrb[0].mxu0
      %v921 = vadd.f32 0.0, %v920
      %922 = vmatprep.mubr.f32.mxu0 %v602
      %923 = vmatmul.mubr.f32.gmra.mrb[0].mxu0 %v600
      %v924 = vpop.f32.mrb[0].mxu0
      %v925 = vadd.f32 0.0, %v924
      %v926 = vpop.f32.mrb[0].mxu0
      %v927 = vadd.f32 0.0, %v926
      %928 = vmatprep.mubr.f32.mxu0 %v603
      %929 = vmatmul.mubr.f32.gmra.mrb[0].mxu0 %v601
      %v930 = vpop.f32.mrb[0].mxu0
      %v931 = vadd.f32 0.0, %v930
      %v932 = vpop.f32.mrb[0].mxu0
      %v933 = vadd.f32 0.0, %v932
      %934 = vmatprep.mubr.f32.mxu0 %v604
      %935 = vmatmul.mubr.f32.gmra.mrb[0].mxu0 %v602
      %v936 = vpop.f32.mrb[0].mxu0
      %v937 = vadd.f32 0.0, %v936
      %v938 = vpop.f32.mrb[0].mxu0
      %v939 = vadd.f32 0.0, %v938
      %940 = vmatprep.mubr.f32.mxu0 %v605
      %941 = vmatmul.mubr.f32.gmra.mrb[0].mxu0 %v603
      %v942 = vpop.f32.mrb[0].mxu0
      %v943 = vadd.f32 0.0, %v942
      %v944 = vpop.f32.mrb[0].mxu0
      %v945 = vadd.f32 0.0, %v944
      %946 = vmatprep.mubr.f32.mxu0 %v606
      %947 = vmatmul.mubr.f32.gmra.mrb[0].mxu0 %v604
      %v948 = vpop.f32.mrb[0].mxu0
      %v949 = vadd.f32 0.0, %v948
      %v950 = vpop.f32.mrb[0].mxu0
      %v951 = vadd.f32 0.0, %v950
      %952 = vmatprep.mubr.f32.mxu0 %v607
      %953 = vmatmul.mubr.f32.gmra.mrb[0].mxu0 %v605
      %v954 = vpop.f32.mrb[0].mxu0
      %v955 = vadd.f32 0.0, %v954
      %v956 = vpop.f32.mrb[0].mxu0
      %v957 = vadd.f32 0.0, %v956
      %958 = vmatprep.mubr.f32.mxu0 %v608
      %959 = vmatmul.mubr.f32.gmra.mrb[0].mxu0 %v606
      %v960 = vpop.f32.mrb[0].mxu0
      %v961 = vadd.f32 0.0, %v960
      %v962 = vpop.f32.mrb[0].mxu0
      %v963 = vadd.f32 0.0, %v962
      %964 = vmatprep.mubr.f32.mxu0 %v609
      %965 = vmatmul.mubr.f32.gmra.mrb[0].mxu0 %v607
      %v966 = vpop.f32.mrb[0].mxu0
      %v967 = vadd.f32 0.0, %v966
      %v968 = vpop.f32.mrb[0].mxu0
      %v969 = vadd.f32 0.0, %v968
      %970 = vmatprep.mubr.f32.mxu0 %v610
      %971 = vmatmul.mubr.f32.gmra.mrb[0].mxu0 %v608
      %v972 = vpop.f32.mrb[0].mxu0
      %v973 = vadd.f32 0.0, %v972
      %v974 = vpop.f32.mrb[0].mxu0
      %v975 = vadd.f32 0.0, %v974
      %976 = vmatprep.mubr.f32.mxu0 %v611
      %977 = vmatmul.mubr.f32.gmra.mrb[0].mxu0 %v609
      %v978 = vpop.f32.mrb[0].mxu0
      %v979 = vadd.f32 0.0, %v978
      %v980 = vpop.f32.mrb[0].mxu0
      %v981 = vadd.f32 0.0, %v980
      %982 = vmatprep.mubr.f32.mxu0 %v612
      %983 = vmatmul.mubr.f32.gmra.mrb[0].mxu0 %v610
      %v984 = vpop.f32.mrb[0].mxu0
      %v985 = vadd.f32 0.0, %v984
      %v986 = vpop.f32.mrb[0].mxu0
      %v987 = vadd.f32 0.0, %v986
      %988 = vmatprep.mubr.f32.mxu0 %v613
      %989 = vmatmul.mubr.f32.gmra.mrb[0].mxu0 %v611
      %v990 = vpop.f32.mrb[0].mxu0
      %v991 = vadd.f32 0.0, %v990
      %v992 = vpop.f32.mrb[0].mxu0
      %v993 = vadd.f32 0.0, %v992
      %994 = vmatprep.mubr.f32.mxu0 %v614
      %995 = vmatmul.mubr.f32.gmra.mrb[0].mxu0 %v612
      %v996 = vpop.f32.mrb[0].mxu0
      %v997 = vadd.f32 0.0, %v996
      %v998 = vpop.f32.mrb[0].mxu0
      %v999 = vadd.f32 0.0, %v998
      %1000 = vmatprep.mubr.f32.mxu0 %v615
      %1001 = vmatmul.mubr.f32.gmra.mrb[0].mxu0 %v613
      %v1002 = vpop.f32.mrb[0].mxu0
      %v1003 = vadd.f32 0.0, %v1002
      %v1004 = vpop.f32.mrb[0].mxu0
      %v1005 = vadd.f32 0.0, %v1004
      %1006 = vmatprep.mubr.f32.mxu0 %v616
      %1007 = vmatmul.mubr.f32.gmra.mrb[0].mxu0 %v614
      %v1008 = vpop.f32.mrb[0].mxu0
      %v1009 = vadd.f32 0.0, %v1008
      %v1010 = vpop.f32.mrb[0].mxu0
      %v1011 = vadd.f32 0.0, %v1010
      %1012 = vmatprep.mubr.f32.mxu0 %v617
      %1013 = vmatmul.mubr.f32.gmra.mrb[0].mxu0 %v615
      %v1014 = vpop.f32.mrb[0].mxu0
      %v1015 = vadd.f32 0.0, %v1014
      %v1016 = vpop.f32.mrb[0].mxu0
      %v1017 = vadd.f32 0.0, %v1016
      %1018 = vmatprep.mubr.f32.mxu0 %v618
      %1019 = vmatmul.mubr.f32.gmra.mrb[0].mxu0 %v616
      %v1020 = vpop.f32.mrb[0].mxu0
      %v1021 = vadd.f32 0.0, %v1020
      %v1022 = vpop.f32.mrb[0].mxu0
      %v1023 = vadd.f32 0.0, %v1022
      %1024 = vmatprep.mubr.f32.mxu0 %v619
      %1025 = vmatmul.mubr.f32.gmra.mrb[0].mxu0 %v617
      %v1026 = vpop.f32.mrb[0].mxu0
      %v1027 = vadd.f32 0.0, %v1026
      %v1028 = vpop.f32.mrb[0].mxu0
      %v1029 = vadd.f32 0.0, %v1028
      %1030 = vmatprep.mubr.f32.mxu0 %v620
      %1031 = vmatmul.mubr.f32.gmra.mrb[0].mxu0 %v618
      %v1032 = vpop.f32.mrb[0].mxu0
      %v1033 = vadd.f32 0.0, %v1032
      %v1034 = vpop.f32.mrb[0].mxu0
      %v1035 = vadd.f32 0.0, %v1034
      %1036 = vdwg.mxu0
      %1037 = vmatprep.subr.mxu0 %v733
      %1038 = vmatpush1.msra.mxu0 %v732
      %1039 = vmatprep.subr.mxu0 %v736
      %1040 = vmatpush1.msra.mxu0 %v735
      %1041 = vmatprep.subr.mxu0 %v739
      %1042 = vmatpush1.msra.mxu0 %v738
      %1043 = vmatprep.subr.mxu0 %v742
      %1044 = vmatpush1.msra.mxu0 %v741
      %1045 = vmatprep.subr.mxu0 %v745
      %1046 = vmatpush1.msra.mxu0 %v744
      %1047 = vmatprep.subr.mxu0 %v748
      %1048 = vmatpush1.msra.mxu0 %v747
      %1049 = vmatprep.subr.mxu0 %v751
      %1050 = vmatpush1.msra.mxu0 %v750
      %1051 = vmatprep.subr.mxu0 %v754
      %1052 = vmatpush1.msra.mxu0 %v753
      %1053 = vmatprep.subr.mxu0 %v757
      %1054 = vmatpush1.msra.mxu0 %v756
      %1055 = vmatprep.subr.mxu0 %v760
      %1056 = vmatpush1.msra.mxu0 %v759
      %1057 = vmatprep.subr.mxu0 %v763
      %1058 = vmatpush1.msra.mxu0 %v762
      %1059 = vmatprep.subr.mxu0 %v766
      %1060 = vmatpush1.msra.mxu0 %v765
      %1061 = vmatprep.subr.mxu0 %v769
      %1062 = vmatpush1.msra.mxu0 %v768
      %1063 = vmatprep.subr.mxu0 %v772
      %1064 = vmatpush1.msra.mxu0 %v771
      %1065 = vmatprep.subr.mxu0 %v775
      %1066 = vmatpush1.msra.mxu0 %v774
      %1067 = vmatprep.subr.mxu0 %v778
      %1068 = vmatpush1.msra.mxu0 %v777
      %1069 = vmatprep.subr.mxu0 0.0
      %1070 = vmatpush1.msra.mxu0 0.0
      %1071 = vmatprep.subr.mxu0 0.0
      %1072 = vmatpush1.msra.mxu0 0.0
      %1073 = vmatprep.subr.mxu0 0.0
      %1074 = vmatpush1.msra.mxu0 0.0
      %1075 = vmatprep.subr.mxu0 0.0
      %1076 = vmatpush1.msra.mxu0 0.0
      %1077 = vmatprep.subr.mxu0 0.0
      %1078 = vmatpush1.msra.mxu0 0.0
      %1079 = vmatprep.subr.mxu0 0.0
      %1080 = vmatpush1.msra.mxu0 0.0
      %1081 = vmatprep.subr.mxu0 0.0
      %1082 = vmatpush1.msra.mxu0 0.0
      %1083 = vmatprep.subr.mxu0 0.0
      %1084 = vmatpush1.msra.mxu0 0.0
      %1085 = vmatprep.subr.mxu0 0.0
      %1086 = vmatpush1.msra.mxu0 0.0
      %1087 = vmatprep.subr.mxu0 0.0
      %1088 = vmatpush1.msra.mxu0 0.0
      %1089 = vmatprep.subr.mxu0 0.0
      %1090 = vmatpush1.msra.mxu0 0.0
      %1091 = vmatprep.subr.mxu0 0.0
      %1092 = vmatpush1.msra.mxu0 0.0
      %1093 = vmatprep.subr.mxu0 0.0
      %1094 = vmatpush1.msra.mxu0 0.0
      %1095 = vmatprep.subr.mxu0 0.0
      %1096 = vmatpush1.msra.mxu0 0.0
      %1097 = vmatprep.subr.mxu0 0.0
      %1098 = vmatpush1.msra.mxu0 0.0
      %1099 = vmatprep.subr.mxu0 0.0
      %1100 = vmatpush1.msra.mxu0 0.0
      %1101 = vmatprep.mubr.f32.mxu0 0.0
      %1102 = vmatmul.mubr.f32.gmra.mrb[0].mxu0 %v591
      %v1103 = vpop.f32.mrb[0].mxu0
      %v1104 = vadd.f32 %v847, %v1103
      %v1105 = vpop.f32.mrb[0].mxu0
      %v1106 = vadd.f32 %v849, %v1105
      %1107 = vmatprep.mubr.f32.mxu0 0.0
      %1108 = vmatmul.mubr.f32.gmra.mrb[0].mxu0 %v592
      %v1109 = vpop.f32.mrb[0].mxu0
      %v1110 = vadd.f32 %v853, %v1109
      %v1111 = vpop.f32.mrb[0].mxu0
      %v1112 = vadd.f32 %v855, %v1111
      %1113 = vmatprep.mubr.f32.mxu0 0.0
      %1114 = vmatmul.mubr.f32.gmra.mrb[0].mxu0 %v593
      %v1115 = vpop.f32.mrb[0].mxu0
      %v1116 = vadd.f32 %v859, %v1115
      %v1117 = vpop.f32.mrb[0].mxu0
      %v1118 = vadd.f32 %v861, %v1117
      %1119 = vmatprep.mubr.f32.mxu0 0.0
      %1120 = vmatmul.mubr.f32.gmra.mrb[0].mxu0 %v594
      %v1121 = vpop.f32.mrb[0].mxu0
      %v1122 = vadd.f32 %v865, %v1121
      %v1123 = vpop.f32.mrb[0].mxu0
      %v1124 = vadd.f32 %v867, %v1123
      %1125 = vmatprep.mubr.f32.mxu0 0.0
      %1126 = vmatmul.mubr.f32.gmra.mrb[0].mxu0 %v595
      %v1127 = vpop.f32.mrb[0].mxu0
      %v1128 = vadd.f32 %v871, %v1127
      %v1129 = vpop.f32.mrb[0].mxu0
      %v1130 = vadd.f32 %v873, %v1129
      %1131 = vmatprep.mubr.f32.mxu0 0.0
      %1132 = vmatmul.mubr.f32.gmra.mrb[0].mxu0 %v596
      %v1133 = vpop.f32.mrb[0].mxu0
      %v1134 = vadd.f32 %v877, %v1133
      %v1135 = vpop.f32.mrb[0].mxu0
      %v1136 = vadd.f32 %v879, %v1135
      %1137 = vmatprep.mubr.f32.mxu0 0.0
      %1138 = vmatmul.mubr.f32.gmra.mrb[0].mxu0 %v597
      %v1139 = vpop.f32.mrb[0].mxu0
      %v1140 = vadd.f32 %v883, %v1139
      %v1141 = vpop.f32.mrb[0].mxu0
      %v1142 = vadd.f32 %v885, %v1141
      %1143 = vmatprep.mubr.f32.mxu0 0.0
      %1144 = vmatmul.mubr.f32.gmra.mrb[0].mxu0 %v598
      %v1145 = vpop.f32.mrb[0].mxu0
      %v1146 = vadd.f32 %v889, %v1145
      %v1147 = vpop.f32.mrb[0].mxu0
      %v1148 = vadd.f32 %v891, %v1147
      %1149 = vmatprep.mubr.f32.mxu0 0.0
      %1150 = vmatmul.mubr.f32.gmra.mrb[0].mxu0 %v599
      %v1151 = vpop.f32.mrb[0].mxu0
      %v1152 = vadd.f32 %v895, %v1151
      %v1153 = vpop.f32.mrb[0].mxu0
      %v1154 = vadd.f32 %v897, %v1153
      %1155 = vmatprep.mubr.f32.mxu0 0.0
      %1156 = vmatmul.mubr.f32.gmra.mrb[0].mxu0 %v600
      %v1157 = vpop.f32.mrb[0].mxu0
      %v1158 = vadd.f32 %v901, %v1157
      %v1159 = vpop.f32.mrb[0].mxu0
      %v1160 = vadd.f32 %v903, %v1159
      %1161 = vmatprep.mubr.f32.mxu0 0.0
      %1162 = vmatmul.mubr.f32.gmra.mrb[0].mxu0 %v601
      %v1163 = vpop.f32.mrb[0].mxu0
      %v1164 = vadd.f32 %v907, %v1163
      %v1165 = vpop.f32.mrb[0].mxu0
      %v1166 = vadd.f32 %v909, %v1165
      %1167 = vmatprep.mubr.f32.mxu0 0.0
      %1168 = vmatmul.mubr.f32.gmra.mrb[0].mxu0 %v602
      %v1169 = vpop.f32.mrb[0].mxu0
      %v1170 = vadd.f32 %v913, %v1169
      %v1171 = vpop.f32.mrb[0].mxu0
      %v1172 = vadd.f32 %v915, %v1171
      %1173 = vmatprep.mubr.f32.mxu0 0.0
      %1174 = vmatmul.mubr.f32.gmra.mrb[0].mxu0 %v603
      %v1175 = vpop.f32.mrb[0].mxu0
      %v1176 = vadd.f32 %v919, %v1175
      %v1177 = vpop.f32.mrb[0].mxu0
      %v1178 = vadd.f32 %v921, %v1177
      %1179 = vmatprep.mubr.f32.mxu0 0.0
      %1180 = vmatmul.mubr.f32.gmra.mrb[0].mxu0 %v604
      %v1181 = vpop.f32.mrb[0].mxu0
      %v1182 = vadd.f32 %v925, %v1181
      %v1183 = vpop.f32.mrb[0].mxu0
      %v1184 = vadd.f32 %v927, %v1183
      %1185 = vmatprep.mubr.f32.mxu0 0.0
      %1186 = vmatmul.mubr.f32.gmra.mrb[0].mxu0 %v605
      %v1187 = vpop.f32.mrb[0].mxu0
      %v1188 = vadd.f32 %v931, %v1187
      %v1189 = vpop.f32.mrb[0].mxu0
      %v1190 = vadd.f32 %v933, %v1189
      %1191 = vmatprep.mubr.f32.mxu0 0.0
      %1192 = vmatmul.mubr.f32.gmra.mrb[0].mxu0 %v606
      %v1193 = vpop.f32.mrb[0].mxu0
      %v1194 = vadd.f32 %v937, %v1193
      %v1195 = vpop.f32.mrb[0].mxu0
      %v1196 = vadd.f32 %v939, %v1195
      %1197 = vmatprep.mubr.f32.mxu0 0.0
      %1198 = vmatmul.mubr.f32.gmra.mrb[0].mxu0 %v607
      %v1199 = vpop.f32.mrb[0].mxu0
      %v1200 = vadd.f32 %v943, %v1199
      %v1201 = vpop.f32.mrb[0].mxu0
      %v1202 = vadd.f32 %v945, %v1201
      %1203 = vmatprep.mubr.f32.mxu0 0.0
      %1204 = vmatmul.mubr.f32.gmra.mrb[0].mxu0 %v608
      %v1205 = vpop.f32.mrb[0].mxu0
      %v1206 = vadd.f32 %v949, %v1205
      %v1207 = vpop.f32.mrb[0].mxu0
      %v1208 = vadd.f32 %v951, %v1207
      %1209 = vmatprep.mubr.f32.mxu0 0.0
      %1210 = vmatmul.mubr.f32.gmra.mrb[0].mxu0 %v609
      %v1211 = vpop.f32.mrb[0].mxu0
      %v1212 = vadd.f32 %v955, %v1211
      %v1213 = vpop.f32.mrb[0].mxu0
      %v1214 = vadd.f32 %v957, %v1213
      %1215 = vmatprep.mubr.f32.mxu0 0.0
      %1216 = vmatmul.mubr.f32.gmra.mrb[0].mxu0 %v610
      %v1217 = vpop.f32.mrb[0].mxu0
      %v1218 = vadd.f32 %v961, %v1217
      %v1219 = vpop.f32.mrb[0].mxu0
      %v1220 = vadd.f32 %v963, %v1219
      %1221 = vmatprep.mubr.f32.mxu0 0.0
      %1222 = vmatmul.mubr.f32.gmra.mrb[0].mxu0 %v611
      %v1223 = vpop.f32.mrb[0].mxu0
      %v1224 = vadd.f32 %v967, %v1223
      %v1225 = vpop.f32.mrb[0].mxu0
      %v1226 = vadd.f32 %v969, %v1225
      %1227 = vmatprep.mubr.f32.mxu0 0.0
      %1228 = vmatmul.mubr.f32.gmra.mrb[0].mxu0 %v612
      %v1229 = vpop.f32.mrb[0].mxu0
      %v1230 = vadd.f32 %v973, %v1229
      %v1231 = vpop.f32.mrb[0].mxu0
      %v1232 = vadd.f32 %v975, %v1231
      %1233 = vmatprep.mubr.f32.mxu0 0.0
      %1234 = vmatmul.mubr.f32.gmra.mrb[0].mxu0 %v613
      %v1235 = vpop.f32.mrb[0].mxu0
      %v1236 = vadd.f32 %v979, %v1235
      %v1237 = vpop.f32.mrb[0].mxu0
      %v1238 = vadd.f32 %v981, %v1237
      %1239 = vmatprep.mubr.f32.mxu0 0.0
      %1240 = vmatmul.mubr.f32.gmra.mrb[0].mxu0 %v614
      %v1241 = vpop.f32.mrb[0].mxu0
      %v1242 = vadd.f32 %v985, %v1241
      %v1243 = vpop.f32.mrb[0].mxu0
      %v1244 = vadd.f32 %v987, %v1243
      %1245 = vmatprep.mubr.f32.mxu0 0.0
      %1246 = vmatmul.mubr.f32.gmra.mrb[0].mxu0 %v615
      %v1247 = vpop.f32.mrb[0].mxu0
      %v1248 = vadd.f32 %v991, %v1247
      %v1249 = vpop.f32.mrb[0].mxu0
      %v1250 = vadd.f32 %v993, %v1249
      %1251 = vmatprep.mubr.f32.mxu0 0.0
      %1252 = vmatmul.mubr.f32.gmra.mrb[0].mxu0 %v616
      %v1253 = vpop.f32.mrb[0].mxu0
      %v1254 = vadd.f32 %v997, %v1253
      %v1255 = vpop.f32.mrb[0].mxu0
      %v1256 = vadd.f32 %v999, %v1255
      %1257 = vmatprep.mubr.f32.mxu0 0.0
      %1258 = vmatmul.mubr.f32.gmra.mrb[0].mxu0 %v617
      %v1259 = vpop.f32.mrb[0].mxu0
      %v1260 = vadd.f32 %v1003, %v1259
      %v1261 = vpop.f32.mrb[0].mxu0
      %v1262 = vadd.f32 %v1005, %v1261
      %1263 = vmatprep.mubr.f32.mxu0 0.0
      %1264 = vmatmul.mubr.f32.gmra.mrb[0].mxu0 %v618
      %v1265 = vpop.f32.mrb[0].mxu0
      %v1266 = vadd.f32 %v1009, %v1265
      %v1267 = vpop.f32.mrb[0].mxu0
      %v1268 = vadd.f32 %v1011, %v1267
      %1269 = vmatprep.mubr.f32.mxu0 0.0
      %1270 = vmatmul.mubr.f32.gmra.mrb[0].mxu0 %v619
      %v1271 = vpop.f32.mrb[0].mxu0
      %v1272 = vadd.f32 %v1015, %v1271
      %v1273 = vpop.f32.mrb[0].mxu0
      %v1274 = vadd.f32 %v1017, %v1273
      %1275 = vmatprep.mubr.f32.mxu0 0.0
      %1276 = vmatmul.mubr.f32.gmra.mrb[0].mxu0 %v620
      %v1277 = vpop.f32.mrb[0].mxu0
      %v1278 = vadd.f32 %v1021, %v1277
      %v1279 = vpop.f32.mrb[0].mxu0
      %v1280 = vadd.f32 %v1023, %v1279
      %1281 = vmatprep.mubr.f32.mxu0 0.0
      %1282 = vmatmul.mubr.f32.gmra.mrb[0].mxu0 %v634
      %v1283 = vpop.f32.mrb[0].mxu0
      %v1284 = vadd.f32 %v1027, %v1283
      %v1285 = vpop.f32.mrb[0].mxu0
      %v1286 = vadd.f32 %v1029, %v1285
      %1287 = vmatprep.mubr.f32.mxu0 0.0
      %1288 = vmatmul.mubr.f32.gmra.mrb[0].mxu0 %v635
      %v1289 = vpop.f32.mrb[0].mxu0
      %v1290 = vadd.f32 %v1033, %v1289
      %v1291 = vpop.f32.mrb[0].mxu0
      %v1292 = vadd.f32 %v1035, %v1291
      %1293 = vdwg.mxu0
      %1294 = vmatprep.subr.mxu0 0.0
      %1295 = vmatpush1.msra.mxu0 %v638
      %1296 = vmatprep.subr.mxu0 0.0
      %1297 = vmatpush1.msra.mxu0 %v641
      %1298 = vmatprep.subr.mxu0 0.0
      %1299 = vmatpush1.msra.mxu0 %v644
      %1300 = vmatprep.subr.mxu0 0.0
      %1301 = vmatpush1.msra.mxu0 %v647
      %1302 = vmatprep.subr.mxu0 0.0
      %1303 = vmatpush1.msra.mxu0 %v650
      %1304 = vmatprep.subr.mxu0 0.0
      %1305 = vmatpush1.msra.mxu0 %v653
      %1306 = vmatprep.subr.mxu0 0.0
      %1307 = vmatpush1.msra.mxu0 %v656
      %1308 = vmatprep.subr.mxu0 0.0
      %1309 = vmatpush1.msra.mxu0 %v659
      %1310 = vmatprep.subr.mxu0 0.0
      %1311 = vmatpush1.msra.mxu0 %v662
      %1312 = vmatprep.subr.mxu0 0.0
      %1313 = vmatpush1.msra.mxu0 %v665
      %1314 = vmatprep.subr.mxu0 0.0
      %1315 = vmatpush1.msra.mxu0 %v668
      %1316 = vmatprep.subr.mxu0 0.0
      %1317 = vmatpush1.msra.mxu0 %v671
      %1318 = vmatprep.subr.mxu0 0.0
      %1319 = vmatpush1.msra.mxu0 %v674
      %1320 = vmatprep.subr.mxu0 0.0
      %1321 = vmatpush1.msra.mxu0 %v677
      %1322 = vmatprep.subr.mxu0 0.0
      %1323 = vmatpush1.msra.mxu0 %v680
      %1324 = vmatprep.subr.mxu0 0.0
      %1325 = vmatpush1.msra.mxu0 %v683
      %1326 = vmatprep.subr.mxu0 0.0
      %1327 = vmatpush1.msra.mxu0 %v686
      %1328 = vmatprep.subr.mxu0 0.0
      %1329 = vmatpush1.msra.mxu0 %v689
      %1330 = vmatprep.subr.mxu0 0.0
      %1331 = vmatpush1.msra.mxu0 %v692
      %1332 = vmatprep.subr.mxu0 0.0
      %1333 = vmatpush1.msra.mxu0 %v695
      %1334 = vmatprep.subr.mxu0 0.0
      %1335 = vmatpush1.msra.mxu0 %v698
      %1336 = vmatprep.subr.mxu0 0.0
      %1337 = vmatpush1.msra.mxu0 %v701
      %1338 = vmatprep.subr.mxu0 0.0
      %1339 = vmatpush1.msra.mxu0 %v704
      %1340 = vmatprep.subr.mxu0 0.0
      %1341 = vmatpush1.msra.mxu0 %v707
      %1342 = vmatprep.subr.mxu0 0.0
      %1343 = vmatpush1.msra.mxu0 %v710
      %1344 = vmatprep.subr.mxu0 0.0
      %1345 = vmatpush1.msra.mxu0 %v713
      %1346 = vmatprep.subr.mxu0 0.0
      %1347 = vmatpush1.msra.mxu0 %v716
      %1348 = vmatprep.subr.mxu0 0.0
      %1349 = vmatpush1.msra.mxu0 %v719
      %1350 = vmatprep.subr.mxu0 0.0
      %1351 = vmatpush1.msra.mxu0 %v722
      %1352 = vmatprep.subr.mxu0 0.0
      %1353 = vmatpush1.msra.mxu0 %v725
      %1354 = vmatprep.subr.mxu0 0.0
      %1355 = vmatpush1.msra.mxu0 %v728
      %1356 = vmatprep.subr.mxu0 0.0
      %1357 = vmatpush1.msra.mxu0 %v731
      %1358 = vmatprep.mubr.f32.mxu0 %v589
      %1359 = vmatmul.mubr.f32.gmra.mrb[0].mxu0 %v491
      %v1360 = vpop.f32.mrb[0].mxu0
      %v1361 = vadd.f32 0.0, %v1360
      %v1362 = vpop.f32.mrb[0].mxu0
      %1363 = vmatprep.mubr.f32.mxu0 %v590
      %1364 = vmatmul.mubr.f32.gmra.mrb[0].mxu0 %v492
      %v1365 = vpop.f32.mrb[0].mxu0
      %v1366 = vadd.f32 0.0, %v1365
      %v1367 = vpop.f32.mrb[0].mxu0
      %1368 = vmatprep.mubr.f32.mxu0 %v591
      %1369 = vmatmul.mubr.f32.gmra.mrb[0].mxu0 %v589
      %v1370 = vpop.f32.mrb[0].mxu0
      %v1371 = vadd.f32 0.0, %v1370
      %v1372 = vpop.f32.mrb[0].mxu0
      %1373 = vmatprep.mubr.f32.mxu0 %v592
      %1374 = vmatmul.mubr.f32.gmra.mrb[0].mxu0 %v590
      %v1375 = vpop.f32.mrb[0].mxu0
      %v1376 = vadd.f32 0.0, %v1375
      %v1377 = vpop.f32.mrb[0].mxu0
      %1378 = vmatprep.mubr.f32.mxu0 %v593
      %1379 = vmatmul.mubr.f32.gmra.mrb[0].mxu0 %v591
      %v1380 = vpop.f32.mrb[0].mxu0
      %v1381 = vadd.f32 0.0, %v1380
      %v1382 = vpop.f32.mrb[0].mxu0
      %1383 = vmatprep.mubr.f32.mxu0 %v594
      %1384 = vmatmul.mubr.f32.gmra.mrb[0].mxu0 %v592
      %v1385 = vpop.f32.mrb[0].mxu0
      %v1386 = vadd.f32 0.0, %v1385
      %v1387 = vpop.f32.mrb[0].mxu0
      %1388 = vmatprep.mubr.f32.mxu0 %v595
      %1389 = vmatmul.mubr.f32.gmra.mrb[0].mxu0 %v593
      %v1390 = vpop.f32.mrb[0].mxu0
      %v1391 = vadd.f32 0.0, %v1390
      %v1392 = vpop.f32.mrb[0].mxu0
      %1393 = vmatprep.mubr.f32.mxu0 %v596
      %1394 = vmatmul.mubr.f32.gmra.mrb[0].mxu0 %v594
      %v1395 = vpop.f32.mrb[0].mxu0
      %v1396 = vadd.f32 0.0, %v1395
      %v1397 = vpop.f32.mrb[0].mxu0
      %1398 = vmatprep.mubr.f32.mxu0 %v597
      %1399 = vmatmul.mubr.f32.gmra.mrb[0].mxu0 %v595
      %v1400 = vpop.f32.mrb[0].mxu0
      %v1401 = vadd.f32 0.0, %v1400
      %v1402 = vpop.f32.mrb[0].mxu0
      %1403 = vmatprep.mubr.f32.mxu0 %v598
      %1404 = vmatmul.mubr.f32.gmra.mrb[0].mxu0 %v596
      %v1405 = vpop.f32.mrb[0].mxu0
      %v1406 = vadd.f32 0.0, %v1405
      %v1407 = vpop.f32.mrb[0].mxu0
      %1408 = vmatprep.mubr.f32.mxu0 %v599
      %1409 = vmatmul.mubr.f32.gmra.mrb[0].mxu0 %v597
      %v1410 = vpop.f32.mrb[0].mxu0
      %v1411 = vadd.f32 0.0, %v1410
      %v1412 = vpop.f32.mrb[0].mxu0
      %1413 = vmatprep.mubr.f32.mxu0 %v600
      %1414 = vmatmul.mubr.f32.gmra.mrb[0].mxu0 %v598
      %v1415 = vpop.f32.mrb[0].mxu0
      %v1416 = vadd.f32 0.0, %v1415
      %v1417 = vpop.f32.mrb[0].mxu0
      %1418 = vmatprep.mubr.f32.mxu0 %v601
      %1419 = vmatmul.mubr.f32.gmra.mrb[0].mxu0 %v599
      %v1420 = vpop.f32.mrb[0].mxu0
      %v1421 = vadd.f32 0.0, %v1420
      %v1422 = vpop.f32.mrb[0].mxu0
      %1423 = vmatprep.mubr.f32.mxu0 %v602
      %1424 = vmatmul.mubr.f32.gmra.mrb[0].mxu0 %v600
      %v1425 = vpop.f32.mrb[0].mxu0
      %v1426 = vadd.f32 0.0, %v1425
      %v1427 = vpop.f32.mrb[0].mxu0
      %1428 = vmatprep.mubr.f32.mxu0 %v603
      %1429 = vmatmul.mubr.f32.gmra.mrb[0].mxu0 %v601
      %v1430 = vpop.f32.mrb[0].mxu0
      %v1431 = vadd.f32 0.0, %v1430
      %v1432 = vpop.f32.mrb[0].mxu0
      %1433 = vmatprep.mubr.f32.mxu0 %v604
      %1434 = vmatmul.mubr.f32.gmra.mrb[0].mxu0 %v602
      %v1435 = vpop.f32.mrb[0].mxu0
      %v1436 = vadd.f32 0.0, %v1435
      %v1437 = vpop.f32.mrb[0].mxu0
      %1438 = vmatprep.mubr.f32.mxu0 %v605
      %1439 = vmatmul.mubr.f32.gmra.mrb[0].mxu0 %v603
      %v1440 = vpop.f32.mrb[0].mxu0
      %v1441 = vadd.f32 0.0, %v1440
      %v1442 = vpop.f32.mrb[0].mxu0
      %1443 = vmatprep.mubr.f32.mxu0 %v606
      %1444 = vmatmul.mubr.f32.gmra.mrb[0].mxu0 %v604
      %v1445 = vpop.f32.mrb[0].mxu0
      %v1446 = vadd.f32 0.0, %v1445
      %v1447 = vpop.f32.mrb[0].mxu0
      %1448 = vmatprep.mubr.f32.mxu0 %v607
      %1449 = vmatmul.mubr.f32.gmra.mrb[0].mxu0 %v605
      %v1450 = vpop.f32.mrb[0].mxu0
      %v1451 = vadd.f32 0.0, %v1450
      %v1452 = vpop.f32.mrb[0].mxu0
      %1453 = vmatprep.mubr.f32.mxu0 %v608
      %1454 = vmatmul.mubr.f32.gmra.mrb[0].mxu0 %v606
      %v1455 = vpop.f32.mrb[0].mxu0
      %v1456 = vadd.f32 0.0, %v1455
      %v1457 = vpop.f32.mrb[0].mxu0
      %1458 = vmatprep.mubr.f32.mxu0 %v609
      %1459 = vmatmul.mubr.f32.gmra.mrb[0].mxu0 %v607
      %v1460 = vpop.f32.mrb[0].mxu0
      %v1461 = vadd.f32 0.0, %v1460
      %v1462 = vpop.f32.mrb[0].mxu0
      %1463 = vmatprep.mubr.f32.mxu0 %v610
      %1464 = vmatmul.mubr.f32.gmra.mrb[0].mxu0 %v608
      %v1465 = vpop.f32.mrb[0].mxu0
      %v1466 = vadd.f32 0.0, %v1465
      %v1467 = vpop.f32.mrb[0].mxu0
      %1468 = vmatprep.mubr.f32.mxu0 %v611
      %1469 = vmatmul.mubr.f32.gmra.mrb[0].mxu0 %v609
      %v1470 = vpop.f32.mrb[0].mxu0
      %v1471 = vadd.f32 0.0, %v1470
      %v1472 = vpop.f32.mrb[0].mxu0
      %1473 = vmatprep.mubr.f32.mxu0 %v612
      %1474 = vmatmul.mubr.f32.gmra.mrb[0].mxu0 %v610
      %v1475 = vpop.f32.mrb[0].mxu0
      %v1476 = vadd.f32 0.0, %v1475
      %v1477 = vpop.f32.mrb[0].mxu0
      %1478 = vmatprep.mubr.f32.mxu0 %v613
      %1479 = vmatmul.mubr.f32.gmra.mrb[0].mxu0 %v611
      %v1480 = vpop.f32.mrb[0].mxu0
      %v1481 = vadd.f32 0.0, %v1480
      %v1482 = vpop.f32.mrb[0].mxu0
      %1483 = vmatprep.mubr.f32.mxu0 %v614
      %1484 = vmatmul.mubr.f32.gmra.mrb[0].mxu0 %v612
      %v1485 = vpop.f32.mrb[0].mxu0
      %v1486 = vadd.f32 0.0, %v1485
      %v1487 = vpop.f32.mrb[0].mxu0
      %1488 = vmatprep.mubr.f32.mxu0 %v615
      %1489 = vmatmul.mubr.f32.gmra.mrb[0].mxu0 %v613
      %v1490 = vpop.f32.mrb[0].mxu0
      %v1491 = vadd.f32 0.0, %v1490
      %v1492 = vpop.f32.mrb[0].mxu0
      %1493 = vmatprep.mubr.f32.mxu0 %v616
      %1494 = vmatmul.mubr.f32.gmra.mrb[0].mxu0 %v614
      %v1495 = vpop.f32.mrb[0].mxu0
      %v1496 = vadd.f32 0.0, %v1495
      %v1497 = vpop.f32.mrb[0].mxu0
      %1498 = vmatprep.mubr.f32.mxu0 %v617
      %1499 = vmatmul.mubr.f32.gmra.mrb[0].mxu0 %v615
      %v1500 = vpop.f32.mrb[0].mxu0
      %v1501 = vadd.f32 0.0, %v1500
      %v1502 = vpop.f32.mrb[0].mxu0
      %1503 = vmatprep.mubr.f32.mxu0 %v618
      %1504 = vmatmul.mubr.f32.gmra.mrb[0].mxu0 %v616
      %v1505 = vpop.f32.mrb[0].mxu0
      %v1506 = vadd.f32 0.0, %v1505
      %v1507 = vpop.f32.mrb[0].mxu0
      %1508 = vmatprep.mubr.f32.mxu0 %v619
      %1509 = vmatmul.mubr.f32.gmra.mrb[0].mxu0 %v617
      %v1510 = vpop.f32.mrb[0].mxu0
      %v1511 = vadd.f32 0.0, %v1510
      %v1512 = vpop.f32.mrb[0].mxu0
      %1513 = vmatprep.mubr.f32.mxu0 %v620
      %1514 = vmatmul.mubr.f32.gmra.mrb[0].mxu0 %v618
      %v1515 = vpop.f32.mrb[0].mxu0
      %v1516 = vadd.f32 0.0, %v1515
      %v1517 = vpop.f32.mrb[0].mxu0
      %1518 = vdwg.mxu0
      %1519 = vmatprep.subr.mxu0 0.0
      %1520 = vmatpush1.msra.mxu0 %v734
      %1521 = vmatprep.subr.mxu0 0.0
      %1522 = vmatpush1.msra.mxu0 %v737
      %1523 = vmatprep.subr.mxu0 0.0
      %1524 = vmatpush1.msra.mxu0 %v740
      %1525 = vmatprep.subr.mxu0 0.0
      %1526 = vmatpush1.msra.mxu0 %v743
      %1527 = vmatprep.subr.mxu0 0.0
      %1528 = vmatpush1.msra.mxu0 %v746
      %1529 = vmatprep.subr.mxu0 0.0
      %1530 = vmatpush1.msra.mxu0 %v749
      %1531 = vmatprep.subr.mxu0 0.0
      %1532 = vmatpush1.msra.mxu0 %v752
      %1533 = vmatprep.subr.mxu0 0.0
      %1534 = vmatpush1.msra.mxu0 %v755
      %1535 = vmatprep.subr.mxu0 0.0
      %1536 = vmatpush1.msra.mxu0 %v758
      %1537 = vmatprep.subr.mxu0 0.0
      %1538 = vmatpush1.msra.mxu0 %v761
      %1539 = vmatprep.subr.mxu0 0.0
      %1540 = vmatpush1.msra.mxu0 %v764
      %1541 = vmatprep.subr.mxu0 0.0
      %1542 = vmatpush1.msra.mxu0 %v767
      %1543 = vmatprep.subr.mxu0 0.0
      %1544 = vmatpush1.msra.mxu0 %v770
      %1545 = vmatprep.subr.mxu0 0.0
      %1546 = vmatpush1.msra.mxu0 %v773
      %1547 = vmatprep.subr.mxu0 0.0
      %1548 = vmatpush1.msra.mxu0 %v776
      %1549 = vmatprep.subr.mxu0 0.0
      %1550 = vmatpush1.msra.mxu0 %v779
      %1551 = vmatprep.subr.mxu0 0.0
      %1552 = vmatpush1.msra.mxu0 0.0
      %1553 = vmatprep.subr.mxu0 0.0
      %1554 = vmatpush1.msra.mxu0 0.0
      %1555 = vmatprep.subr.mxu0 0.0
      %1556 = vmatpush1.msra.mxu0 0.0
      %1557 = vmatprep.subr.mxu0 0.0
      %1558 = vmatpush1.msra.mxu0 0.0
      %1559 = vmatprep.subr.mxu0 0.0
      %1560 = vmatpush1.msra.mxu0 0.0
      %1561 = vmatprep.subr.mxu0 0.0
      %1562 = vmatpush1.msra.mxu0 0.0
      %1563 = vmatprep.subr.mxu0 0.0
      %1564 = vmatpush1.msra.mxu0 0.0
      %1565 = vmatprep.subr.mxu0 0.0
      %1566 = vmatpush1.msra.mxu0 0.0
      %1567 = vmatprep.subr.mxu0 0.0
      %1568 = vmatpush1.msra.mxu0 0.0
      %1569 = vmatprep.subr.mxu0 0.0
      %1570 = vmatpush1.msra.mxu0 0.0
      %1571 = vmatprep.subr.mxu0 0.0
      %1572 = vmatpush1.msra.mxu0 0.0
      %1573 = vmatprep.subr.mxu0 0.0
      %1574 = vmatpush1.msra.mxu0 0.0
      %1575 = vmatprep.subr.mxu0 0.0
      %1576 = vmatpush1.msra.mxu0 0.0
      %1577 = vmatprep.subr.mxu0 0.0
      %1578 = vmatpush1.msra.mxu0 0.0
      %1579 = vmatprep.subr.mxu0 0.0
      %1580 = vmatpush1.msra.mxu0 0.0
      %1581 = vmatprep.subr.mxu0 0.0
      %1582 = vmatpush1.msra.mxu0 0.0
      %1583 = vmatprep.mubr.f32.mxu0 0.0
      %1584 = vmatmul.mubr.f32.gmra.mrb[0].mxu0 %v591
      %v1585 = vpop.f32.mrb[0].mxu0
      %v1586 = vadd.f32 %v1361, %v1585
      %v1587 = vpop.f32.mrb[0].mxu0
      %1588 = vmatprep.mubr.f32.mxu0 0.0
      %1589 = vmatmul.mubr.f32.gmra.mrb[0].mxu0 %v592
      %v1590 = vpop.f32.mrb[0].mxu0
      %v1591 = vadd.f32 %v1366, %v1590
      %v1592 = vpop.f32.mrb[0].mxu0
      %1593 = vmatprep.mubr.f32.mxu0 0.0
      %1594 = vmatmul.mubr.f32.gmra.mrb[0].mxu0 %v593
      %v1595 = vpop.f32.mrb[0].mxu0
      %v1596 = vadd.f32 %v1371, %v1595
      %v1597 = vpop.f32.mrb[0].mxu0
      %1598 = vmatprep.mubr.f32.mxu0 0.0
      %1599 = vmatmul.mubr.f32.gmra.mrb[0].mxu0 %v594
      %v1600 = vpop.f32.mrb[0].mxu0
      %v1601 = vadd.f32 %v1376, %v1600
      %v1602 = vpop.f32.mrb[0].mxu0
      %1603 = vmatprep.mubr.f32.mxu0 0.0
      %1604 = vmatmul.mubr.f32.gmra.mrb[0].mxu0 %v595
      %v1605 = vpop.f32.mrb[0].mxu0
      %v1606 = vadd.f32 %v1381, %v1605
      %v1607 = vpop.f32.mrb[0].mxu0
      %1608 = vmatprep.mubr.f32.mxu0 0.0
      %1609 = vmatmul.mubr.f32.gmra.mrb[0].mxu0 %v596
      %v1610 = vpop.f32.mrb[0].mxu0
      %v1611 = vadd.f32 %v1386, %v1610
      %v1612 = vpop.f32.mrb[0].mxu0
      %1613 = vmatprep.mubr.f32.mxu0 0.0
      %1614 = vmatmul.mubr.f32.gmra.mrb[0].mxu0 %v597
      %v1615 = vpop.f32.mrb[0].mxu0
      %v1616 = vadd.f32 %v1391, %v1615
      %v1617 = vpop.f32.mrb[0].mxu0
      %1618 = vmatprep.mubr.f32.mxu0 0.0
      %1619 = vmatmul.mubr.f32.gmra.mrb[0].mxu0 %v598
      %v1620 = vpop.f32.mrb[0].mxu0
      %v1621 = vadd.f32 %v1396, %v1620
      %v1622 = vpop.f32.mrb[0].mxu0
      %1623 = vmatprep.mubr.f32.mxu0 0.0
      %1624 = vmatmul.mubr.f32.gmra.mrb[0].mxu0 %v599
      %v1625 = vpop.f32.mrb[0].mxu0
      %v1626 = vadd.f32 %v1401, %v1625
      %v1627 = vpop.f32.mrb[0].mxu0
      %1628 = vmatprep.mubr.f32.mxu0 0.0
      %1629 = vmatmul.mubr.f32.gmra.mrb[0].mxu0 %v600
      %v1630 = vpop.f32.mrb[0].mxu0
      %v1631 = vadd.f32 %v1406, %v1630
      %v1632 = vpop.f32.mrb[0].mxu0
      %1633 = vmatprep.mubr.f32.mxu0 0.0
      %1634 = vmatmul.mubr.f32.gmra.mrb[0].mxu0 %v601
      %v1635 = vpop.f32.mrb[0].mxu0
      %v1636 = vadd.f32 %v1411, %v1635
      %v1637 = vpop.f32.mrb[0].mxu0
      %1638 = vmatprep.mubr.f32.mxu0 0.0
      %1639 = vmatmul.mubr.f32.gmra.mrb[0].mxu0 %v602
      %v1640 = vpop.f32.mrb[0].mxu0
      %v1641 = vadd.f32 %v1416, %v1640
      %v1642 = vpop.f32.mrb[0].mxu0
      %1643 = vmatprep.mubr.f32.mxu0 0.0
      %1644 = vmatmul.mubr.f32.gmra.mrb[0].mxu0 %v603
      %v1645 = vpop.f32.mrb[0].mxu0
      %v1646 = vadd.f32 %v1421, %v1645
      %v1647 = vpop.f32.mrb[0].mxu0
      %1648 = vmatprep.mubr.f32.mxu0 0.0
      %1649 = vmatmul.mubr.f32.gmra.mrb[0].mxu0 %v604
      %v1650 = vpop.f32.mrb[0].mxu0
      %v1651 = vadd.f32 %v1426, %v1650
      %v1652 = vpop.f32.mrb[0].mxu0
      %1653 = vmatprep.mubr.f32.mxu0 0.0
      %1654 = vmatmul.mubr.f32.gmra.mrb[0].mxu0 %v605
      %v1655 = vpop.f32.mrb[0].mxu0
      %v1656 = vadd.f32 %v1431, %v1655
      %v1657 = vpop.f32.mrb[0].mxu0
      %1658 = vmatprep.mubr.f32.mxu0 0.0
      %1659 = vmatmul.mubr.f32.gmra.mrb[0].mxu0 %v606
      %v1660 = vpop.f32.mrb[0].mxu0
      %v1661 = vadd.f32 %v1436, %v1660
      %v1662 = vpop.f32.mrb[0].mxu0
      %1663 = vmatprep.mubr.f32.mxu0 0.0
      %1664 = vmatmul.mubr.f32.gmra.mrb[0].mxu0 %v607
      %v1665 = vpop.f32.mrb[0].mxu0
      %v1666 = vadd.f32 %v1441, %v1665
      %v1667 = vpop.f32.mrb[0].mxu0
      %1668 = vmatprep.mubr.f32.mxu0 0.0
      %1669 = vmatmul.mubr.f32.gmra.mrb[0].mxu0 %v608
      %v1670 = vpop.f32.mrb[0].mxu0
      %v1671 = vadd.f32 %v1446, %v1670
      %v1672 = vpop.f32.mrb[0].mxu0
      %1673 = vmatprep.mubr.f32.mxu0 0.0
      %1674 = vmatmul.mubr.f32.gmra.mrb[0].mxu0 %v609
      %v1675 = vpop.f32.mrb[0].mxu0
      %v1676 = vadd.f32 %v1451, %v1675
      %v1677 = vpop.f32.mrb[0].mxu0
      %1678 = vmatprep.mubr.f32.mxu0 0.0
      %1679 = vmatmul.mubr.f32.gmra.mrb[0].mxu0 %v610
      %v1680 = vpop.f32.mrb[0].mxu0
      %v1681 = vadd.f32 %v1456, %v1680
      %v1682 = vpop.f32.mrb[0].mxu0
      %1683 = vmatprep.mubr.f32.mxu0 0.0
      %1684 = vmatmul.mubr.f32.gmra.mrb[0].mxu0 %v611
      %v1685 = vpop.f32.mrb[0].mxu0
      %v1686 = vadd.f32 %v1461, %v1685
      %v1687 = vpop.f32.mrb[0].mxu0
      %1688 = vmatprep.mubr.f32.mxu0 0.0
      %1689 = vmatmul.mubr.f32.gmra.mrb[0].mxu0 %v612
      %v1690 = vpop.f32.mrb[0].mxu0
      %v1691 = vadd.f32 %v1466, %v1690
      %v1692 = vpop.f32.mrb[0].mxu0
      %1693 = vmatprep.mubr.f32.mxu0 0.0
      %1694 = vmatmul.mubr.f32.gmra.mrb[0].mxu0 %v613
      %v1695 = vpop.f32.mrb[0].mxu0
      %v1696 = vadd.f32 %v1471, %v1695
      %v1697 = vpop.f32.mrb[0].mxu0
      %1698 = vmatprep.mubr.f32.mxu0 0.0
      %1699 = vmatmul.mubr.f32.gmra.mrb[0].mxu0 %v614
      %v1700 = vpop.f32.mrb[0].mxu0
      %v1701 = vadd.f32 %v1476, %v1700
      %v1702 = vpop.f32.mrb[0].mxu0
      %1703 = vmatprep.mubr.f32.mxu0 0.0
      %1704 = vmatmul.mubr.f32.gmra.mrb[0].mxu0 %v615
      %v1705 = vpop.f32.mrb[0].mxu0
      %v1706 = vadd.f32 %v1481, %v1705
      %v1707 = vpop.f32.mrb[0].mxu0
      %1708 = vmatprep.mubr.f32.mxu0 0.0
      %1709 = vmatmul.mubr.f32.gmra.mrb[0].mxu0 %v616
      %v1710 = vpop.f32.mrb[0].mxu0
      %v1711 = vadd.f32 %v1486, %v1710
      %v1712 = vpop.f32.mrb[0].mxu0
      %1713 = vmatprep.mubr.f32.mxu0 0.0
      %1714 = vmatmul.mubr.f32.gmra.mrb[0].mxu0 %v617
      %v1715 = vpop.f32.mrb[0].mxu0
      %v1716 = vadd.f32 %v1491, %v1715
      %v1717 = vpop.f32.mrb[0].mxu0
      %1718 = vmatprep.mubr.f32.mxu0 0.0
      %1719 = vmatmul.mubr.f32.gmra.mrb[0].mxu0 %v618
      %v1720 = vpop.f32.mrb[0].mxu0
      %v1721 = vadd.f32 %v1496, %v1720
      %v1722 = vpop.f32.mrb[0].mxu0
      %1723 = vmatprep.mubr.f32.mxu0 0.0
      %1724 = vmatmul.mubr.f32.gmra.mrb[0].mxu0 %v619
      %v1725 = vpop.f32.mrb[0].mxu0
      %v1726 = vadd.f32 %v1501, %v1725
      %v1727 = vpop.f32.mrb[0].mxu0
      %1728 = vmatprep.mubr.f32.mxu0 0.0
      %1729 = vmatmul.mubr.f32.gmra.mrb[0].mxu0 %v620
      %v1730 = vpop.f32.mrb[0].mxu0
      %v1731 = vadd.f32 %v1506, %v1730
      %v1732 = vpop.f32.mrb[0].mxu0
      %1733 = vmatprep.mubr.f32.mxu0 0.0
      %1734 = vmatmul.mubr.f32.gmra.mrb[0].mxu0 %v634
      %v1735 = vpop.f32.mrb[0].mxu0
      %v1736 = vadd.f32 %v1511, %v1735
      %v1737 = vpop.f32.mrb[0].mxu0
      %1738 = vmatprep.mubr.f32.mxu0 0.0
      %1739 = vmatmul.mubr.f32.gmra.mrb[0].mxu0 %v635
      %v1740 = vpop.f32.mrb[0].mxu0
      %v1741 = vadd.f32 %v1516, %v1740
      %v1742 = vpop.f32.mrb[0].mxu0
      %1743 = vdwg.mxu0
      %vm1776 = vcmask 1040384
      %v1777 = vrot.slane %v1104, 7
      %v1778 = vrot.slane %v1110, 7
      %v1779 = vsel %vm1776, %v1777, %v1778
      %v1780 = vrot.slane %v1116, 7
      %v1781 = vrot.slane %v1122, 7
      %v1782 = vsel %vm1776, %v1780, %v1781
      %v1783 = vrot.slane %v1128, 7
      %v1784 = vrot.slane %v1134, 7
      %v1785 = vsel %vm1776, %v1783, %v1784
      %v1786 = vrot.slane %v1140, 7
      %v1787 = vrot.slane %v1146, 7
      %v1788 = vsel %vm1776, %v1786, %v1787
      %v1789 = vrot.slane %v1152, 7
      %v1790 = vrot.slane %v1158, 7
      %v1791 = vsel %vm1776, %v1789, %v1790
      %v1792 = vrot.slane %v1164, 7
      %v1793 = vrot.slane %v1170, 7
      %v1794 = vsel %vm1776, %v1792, %v1793
      %v1795 = vrot.slane %v1176, 7
      %v1796 = vrot.slane %v1182, 7
      %v1797 = vsel %vm1776, %v1795, %v1796
      %v1798 = vrot.slane %v1188, 7
      %v1799 = vrot.slane %v1194, 7
      %v1800 = vsel %vm1776, %v1798, %v1799
      %v1801 = vrot.slane %v1200, 7
      %v1802 = vrot.slane %v1206, 7
      %v1803 = vsel %vm1776, %v1801, %v1802
      %v1804 = vrot.slane %v1212, 7
      %v1805 = vrot.slane %v1218, 7
      %v1806 = vsel %vm1776, %v1804, %v1805
      %v1807 = vrot.slane %v1224, 7
      %v1808 = vrot.slane %v1230, 7
      %v1809 = vsel %vm1776, %v1807, %v1808
      %v1810 = vrot.slane %v1236, 7
      %v1811 = vrot.slane %v1242, 7
      %v1812 = vsel %vm1776, %v1810, %v1811
      %v1813 = vrot.slane %v1248, 7
      %v1814 = vrot.slane %v1254, 7
      %v1815 = vsel %vm1776, %v1813, %v1814
      %v1816 = vrot.slane %v1260, 7
      %v1817 = vrot.slane %v1266, 7
      %v1818 = vsel %vm1776, %v1816, %v1817
      %v1819 = vrot.slane %v1272, 7
      %v1820 = vrot.slane %v1278, 7
      %v1821 = vsel %vm1776, %v1819, %v1820
      %v1822 = vrot.slane %v1284, 7
      %v1823 = vrot.slane %v1290, 7
      %v1824 = vsel %vm1776, %v1822, %v1823
      %v1857 = vsel %vm1776, 0.0, %v1777
      %v1858 = vsel %vm1776, 0.0, %v1780
      %v1859 = vsel %vm1776, 0.0, %v1783
      %v1860 = vsel %vm1776, 0.0, %v1786
      %v1861 = vsel %vm1776, 0.0, %v1789
      %v1862 = vsel %vm1776, 0.0, %v1792
      %v1863 = vsel %vm1776, 0.0, %v1795
      %v1864 = vsel %vm1776, 0.0, %v1798
      %v1865 = vsel %vm1776, 0.0, %v1801
      %v1866 = vsel %vm1776, 0.0, %v1804
      %v1867 = vsel %vm1776, 0.0, %v1807
      %v1868 = vsel %vm1776, 0.0, %v1810
      %v1869 = vsel %vm1776, 0.0, %v1813
      %v1870 = vsel %vm1776, 0.0, %v1816
      %v1871 = vsel %vm1776, 0.0, %v1819
      %v1872 = vsel %vm1776, 0.0, %v1822
      %v1873 = vadd.f32 %v1106, %v1857
      %v1874 = vadd.f32 %v1112, %v1779
      %v1875 = vadd.f32 %v1118, %v1858
      %v1876 = vadd.f32 %v1124, %v1782
      %v1877 = vadd.f32 %v1130, %v1859
      %v1878 = vadd.f32 %v1136, %v1785
      %v1879 = vadd.f32 %v1142, %v1860
      %v1880 = vadd.f32 %v1148, %v1788
      %v1881 = vadd.f32 %v1154, %v1861
      %v1882 = vadd.f32 %v1160, %v1791
      %v1883 = vadd.f32 %v1166, %v1862
      %v1884 = vadd.f32 %v1172, %v1794
      %v1885 = vadd.f32 %v1178, %v1863
      %v1886 = vadd.f32 %v1184, %v1797
      %v1887 = vadd.f32 %v1190, %v1864
      %v1888 = vadd.f32 %v1196, %v1800
      %v1889 = vadd.f32 %v1202, %v1865
      %v1890 = vadd.f32 %v1208, %v1803
      %v1891 = vadd.f32 %v1214, %v1866
      %v1892 = vadd.f32 %v1220, %v1806
      %v1893 = vadd.f32 %v1226, %v1867
      %v1894 = vadd.f32 %v1232, %v1809
      %v1895 = vadd.f32 %v1238, %v1868
      %v1896 = vadd.f32 %v1244, %v1812
      %v1897 = vadd.f32 %v1250, %v1869
      %v1898 = vadd.f32 %v1256, %v1815
      %v1899 = vadd.f32 %v1262, %v1870
      %v1900 = vadd.f32 %v1268, %v1818
      %v1901 = vadd.f32 %v1274, %v1871
      %v1902 = vadd.f32 %v1280, %v1821
      %v1903 = vadd.f32 %v1286, %v1872
      %v1904 = vadd.f32 %v1292, %v1824
      %vm1937 = vcmask 1046528
      %v1938 = vrot.slane %v1586, 1
      %v1939 = vrot.slane %v1591, 1
      %v1940 = vsel %vm1937, %v1938, %v1939
      %v1941 = vrot.slane %v1596, 1
      %v1942 = vrot.slane %v1601, 1
      %v1943 = vsel %vm1937, %v1941, %v1942
      %v1944 = vrot.slane %v1606, 1
      %v1945 = vrot.slane %v1611, 1
      %v1946 = vsel %vm1937, %v1944, %v1945
      %v1947 = vrot.slane %v1616, 1
      %v1948 = vrot.slane %v1621, 1
      %v1949 = vsel %vm1937, %v1947, %v1948
      %v1950 = vrot.slane %v1626, 1
      %v1951 = vrot.slane %v1631, 1
      %v1952 = vsel %vm1937, %v1950, %v1951
      %v1953 = vrot.slane %v1636, 1
      %v1954 = vrot.slane %v1641, 1
      %v1955 = vsel %vm1937, %v1953, %v1954
      %v1956 = vrot.slane %v1646, 1
      %v1957 = vrot.slane %v1651, 1
      %v1958 = vsel %vm1937, %v1956, %v1957
      %v1959 = vrot.slane %v1656, 1
      %v1960 = vrot.slane %v1661, 1
      %v1961 = vsel %vm1937, %v1959, %v1960
      %v1962 = vrot.slane %v1666, 1
      %v1963 = vrot.slane %v1671, 1
      %v1964 = vsel %vm1937, %v1962, %v1963
      %v1965 = vrot.slane %v1676, 1
      %v1966 = vrot.slane %v1681, 1
      %v1967 = vsel %vm1937, %v1965, %v1966
      %v1968 = vrot.slane %v1686, 1
      %v1969 = vrot.slane %v1691, 1
      %v1970 = vsel %vm1937, %v1968, %v1969
      %v1971 = vrot.slane %v1696, 1
      %v1972 = vrot.slane %v1701, 1
      %v1973 = vsel %vm1937, %v1971, %v1972
      %v1974 = vrot.slane %v1706, 1
      %v1975 = vrot.slane %v1711, 1
      %v1976 = vsel %vm1937, %v1974, %v1975
      %v1977 = vrot.slane %v1716, 1
      %v1978 = vrot.slane %v1721, 1
      %v1979 = vsel %vm1937, %v1977, %v1978
      %v1980 = vrot.slane %v1726, 1
      %v1981 = vrot.slane %v1731, 1
      %v1982 = vsel %vm1937, %v1980, %v1981
      %v1983 = vrot.slane %v1736, 1
      %v1984 = vrot.slane %v1741, 1
      %v1985 = vsel %vm1937, %v1983, %v1984
      %v2018 = vsel %vm1937, %v1939, 0.0
      %v2019 = vsel %vm1937, %v1942, 0.0
      %v2020 = vsel %vm1937, %v1945, 0.0
      %v2021 = vsel %vm1937, %v1948, 0.0
      %v2022 = vsel %vm1937, %v1951, 0.0
      %v2023 = vsel %vm1937, %v1954, 0.0
      %v2024 = vsel %vm1937, %v1957, 0.0
      %v2025 = vsel %vm1937, %v1960, 0.0
      %v2026 = vsel %vm1937, %v1963, 0.0
      %v2027 = vsel %vm1937, %v1966, 0.0
      %v2028 = vsel %vm1937, %v1969, 0.0
      %v2029 = vsel %vm1937, %v1972, 0.0
      %v2030 = vsel %vm1937, %v1975, 0.0
      %v2031 = vsel %vm1937, %v1978, 0.0
      %v2032 = vsel %vm1937, %v1981, 0.0
      %v2033 = vsel %vm1937, %v1984, 0.0
      %v2034 = vadd.f32 %v1873, %v1940
      %v2035 = vadd.f32 %v1874, %v2018
      %v2036 = vadd.f32 %v1875, %v1943
      %v2037 = vadd.f32 %v1876, %v2019
      %v2038 = vadd.f32 %v1877, %v1946
      %v2039 = vadd.f32 %v1878, %v2020
      %v2040 = vadd.f32 %v1879, %v1949
      %v2041 = vadd.f32 %v1880, %v2021
      %v2042 = vadd.f32 %v1881, %v1952
      %v2043 = vadd.f32 %v1882, %v2022
      %v2044 = vadd.f32 %v1883, %v1955
      %v2045 = vadd.f32 %v1884, %v2023
      %v2046 = vadd.f32 %v1885, %v1958
      %v2047 = vadd.f32 %v1886, %v2024
      %v2048 = vadd.f32 %v1887, %v1961
      %v2049 = vadd.f32 %v1888, %v2025
      %v2050 = vadd.f32 %v1889, %v1964
      %v2051 = vadd.f32 %v1890, %v2026
      %v2052 = vadd.f32 %v1891, %v1967
      %v2053 = vadd.f32 %v1892, %v2027
      %v2054 = vadd.f32 %v1893, %v1970
      %v2055 = vadd.f32 %v1894, %v2028
      %v2056 = vadd.f32 %v1895, %v1973
      %v2057 = vadd.f32 %v1896, %v2029
      %v2058 = vadd.f32 %v1897, %v1976
      %v2059 = vadd.f32 %v1898, %v2030
      %v2060 = vadd.f32 %v1899, %v1979
      %v2061 = vadd.f32 %v1900, %v2031
      %v2062 = vadd.f32 %v1901, %v1982
      %v2063 = vadd.f32 %v1902, %v2032
      %v2064 = vadd.f32 %v1903, %v1985
      %v2065 = vadd.f32 %v1904, %v2033
      %2066 = vst [vmem:[%s457] sm:$0xff] %v2034
      %2067 = vst [vmem:[%s457 + $0x8] sm:$0xff] %v2035
      %2068 = vst [vmem:[%s457 + $0x10] sm:$0xff] %v2036
      %2069 = vst [vmem:[%s457 + $0x18] sm:$0xff] %v2037
      %2070 = vst [vmem:[%s457 + $0x20] sm:$0xff] %v2038
      %2071 = vst [vmem:[%s457 + $0x28] sm:$0xff] %v2039
      %2072 = vst [vmem:[%s457 + $0x30] sm:$0xff] %v2040
      %2073 = vst [vmem:[%s457 + $0x38] sm:$0xff] %v2041
      %2074 = vst [vmem:[%s457 + $0x40] sm:$0xff] %v2042
      %2075 = vst [vmem:[%s457 + $0x48] sm:$0xff] %v2043
      %2076 = vst [vmem:[%s457 + $0x50] sm:$0xff] %v2044
      %2077 = vst [vmem:[%s457 + $0x58] sm:$0xff] %v2045
      %2078 = vst [vmem:[%s457 + $0x60] sm:$0xff] %v2046
      %2079 = vst [vmem:[%s457 + $0x68] sm:$0xff] %v2047
      %2080 = vst [vmem:[%s457 + $0x70] sm:$0xff] %v2048
      %2081 = vst [vmem:[%s457 + $0x78] sm:$0xff] %v2049
      %2082 = vst [vmem:[%s457 + $0x80] sm:$0xff] %v2050
      %2083 = vst [vmem:[%s457 + $0x88] sm:$0xff] %v2051
      %2084 = vst [vmem:[%s457 + $0x90] sm:$0xff] %v2052
      %2085 = vst [vmem:[%s457 + $0x98] sm:$0xff] %v2053
      %2086 = vst [vmem:[%s457 + $0xa0] sm:$0xff] %v2054
      %2087 = vst [vmem:[%s457 + $0xa8] sm:$0xff] %v2055
      %2088 = vst [vmem:[%s457 + $0xb0] sm:$0xff] %v2056
      %2089 = vst [vmem:[%s457 + $0xb8] sm:$0xff] %v2057
      %2090 = vst [vmem:[%s457 + $0xc0] sm:$0xff] %v2058
      %2091 = vst [vmem:[%s457 + $0xc8] sm:$0xff] %v2059
      %2092 = vst [vmem:[%s457 + $0xd0] sm:$0xff] %v2060
      %2093 = vst [vmem:[%s457 + $0xd8] sm:$0xff] %v2061
      %2094 = vst [vmem:[%s457 + $0xe0] sm:$0xff] %v2062
      %2095 = vst [vmem:[%s457 + $0xe8] sm:$0xff] %v2063
      %2096 = vst [vmem:[%s457 + $0xf0] sm:$0xff] %v2064
      %2097 = vst [vmem:[%s457 + $0xf8] sm:$0xff] %v2065
      %v2098 = vadd.f32 %v2034, %v2035
      %v2099 = vadd.f32 %v2098, %v2036
      %v2100 = vadd.f32 %v2099, %v2037
      %v2101 = vadd.f32 %v2100, %v2038
      %v2102 = vadd.f32 %v2101, %v2039
      %v2103 = vadd.f32 %v2102, %v2040
      %v2104 = vadd.f32 %v2103, %v2041
      %v2105 = vadd.f32 %v2104, %v2042
      %v2106 = vadd.f32 %v2105, %v2043
      %v2107 = vadd.f32 %v2106, %v2044
      %v2108 = vadd.f32 %v2107, %v2045
      %v2109 = vadd.f32 %v2108, %v2046
      %v2110 = vadd.f32 %v2109, %v2047
      %v2111 = vadd.f32 %v2110, %v2048
      %v2112 = vadd.f32 %v2111, %v2049
      %v2113 = vadd.f32 %v2112, %v2050
      %v2114 = vadd.f32 %v2113, %v2051
      %v2115 = vadd.f32 %v2114, %v2052
      %v2116 = vadd.f32 %v2115, %v2053
      %v2117 = vadd.f32 %v2116, %v2054
      %v2118 = vadd.f32 %v2117, %v2055
      %v2119 = vadd.f32 %v2118, %v2056
      %v2120 = vadd.f32 %v2119, %v2057
      %v2121 = vadd.f32 %v2120, %v2058
      %v2122 = vadd.f32 %v2121, %v2059
      %v2123 = vadd.f32 %v2122, %v2060
      %v2124 = vadd.f32 %v2123, %v2061
      %v2125 = vadd.f32 %v2124, %v2062
      %v2126 = vadd.f32 %v2125, %v2063
      %v2127 = vadd.f32 %v2126, %v2064
      %v2128 = vadd.f32 %v2127, %v2065
      %v2129 = vrot.slane %v2128, 4
      %v2130 = vadd.f32 %v2128, %v2129
      %v2131 = vrot.slane %v2130, 2
      %v2132 = vadd.f32 %v2130, %v2131
      %v2133 = vrot.slane %v2132, 1
      %v2134 = vadd.f32 %v2132, %v2133
      %v2135 = vmul.f32 %v2034, %v2034
      %v2136 = vmul.f32 %v2035, %v2035
      %v2137 = vmul.f32 %v2036, %v2036
      %v2138 = vmul.f32 %v2037, %v2037
      %v2139 = vmul.f32 %v2038, %v2038
      %v2140 = vmul.f32 %v2039, %v2039
      %v2141 = vmul.f32 %v2040, %v2040
      %v2142 = vmul.f32 %v2041, %v2041
      %v2143 = vmul.f32 %v2042, %v2042
      %v2144 = vmul.f32 %v2043, %v2043
      %v2145 = vmul.f32 %v2044, %v2044
      %v2146 = vmul.f32 %v2045, %v2045
      %v2147 = vmul.f32 %v2046, %v2046
      %v2148 = vmul.f32 %v2047, %v2047
      %v2149 = vmul.f32 %v2048, %v2048
      %v2150 = vmul.f32 %v2049, %v2049
      %v2151 = vmul.f32 %v2050, %v2050
      %v2152 = vmul.f32 %v2051, %v2051
      %v2153 = vmul.f32 %v2052, %v2052
      %v2154 = vmul.f32 %v2053, %v2053
      %v2155 = vmul.f32 %v2054, %v2054
      %v2156 = vmul.f32 %v2055, %v2055
      %v2157 = vmul.f32 %v2056, %v2056
      %v2158 = vmul.f32 %v2057, %v2057
      %v2159 = vmul.f32 %v2058, %v2058
      %v2160 = vmul.f32 %v2059, %v2059
      %v2161 = vmul.f32 %v2060, %v2060
      %v2162 = vmul.f32 %v2061, %v2061
      %v2163 = vmul.f32 %v2062, %v2062
      %v2164 = vmul.f32 %v2063, %v2063
      %v2165 = vmul.f32 %v2064, %v2064
      %v2166 = vmul.f32 %v2065, %v2065
      %v2167 = vadd.f32 %v2135, %v2136
      %v2168 = vadd.f32 %v2167, %v2137
      %v2169 = vadd.f32 %v2168, %v2138
      %v2170 = vadd.f32 %v2169, %v2139
      %v2171 = vadd.f32 %v2170, %v2140
      %v2172 = vadd.f32 %v2171, %v2141
      %v2173 = vadd.f32 %v2172, %v2142
      %v2174 = vadd.f32 %v2173, %v2143
      %v2175 = vadd.f32 %v2174, %v2144
      %v2176 = vadd.f32 %v2175, %v2145
      %v2177 = vadd.f32 %v2176, %v2146
      %v2178 = vadd.f32 %v2177, %v2147
      %v2179 = vadd.f32 %v2178, %v2148
      %v2180 = vadd.f32 %v2179, %v2149
      %v2181 = vadd.f32 %v2180, %v2150
      %v2182 = vadd.f32 %v2181, %v2151
      %v2183 = vadd.f32 %v2182, %v2152
      %v2184 = vadd.f32 %v2183, %v2153
      %v2185 = vadd.f32 %v2184, %v2154
      %v2186 = vadd.f32 %v2185, %v2155
      %v2187 = vadd.f32 %v2186, %v2156
      %v2188 = vadd.f32 %v2187, %v2157
      %v2189 = vadd.f32 %v2188, %v2158
      %v2190 = vadd.f32 %v2189, %v2159
      %v2191 = vadd.f32 %v2190, %v2160
      %v2192 = vadd.f32 %v2191, %v2161
      %v2193 = vadd.f32 %v2192, %v2162
      %v2194 = vadd.f32 %v2193, %v2163
      %v2195 = vadd.f32 %v2194, %v2164
      %v2196 = vadd.f32 %v2195, %v2165
      %v2197 = vadd.f32 %v2196, %v2166
      %v2198 = vrot.slane %v2197, 4
      %v2199 = vadd.f32 %v2197, %v2198
      %v2200 = vrot.slane %v2199, 2
      %v2201 = vadd.f32 %v2199, %v2200
      %v2202 = vrot.slane %v2201, 1
      %v2203 = vadd.f32 %v2201, %v2202
      %v2204 = vsel %vm1776, %v2134, %v2203
      %2205 = vst [vmem:[%s465] sm:$0x3] %v2204
      %s2206 = smul.u32 16, %s24
      %p2207 = scmp.lt.s32.totalorder %s23, 1
      %s2208 = scalar_select %p2207, %s23, 1
      %p2209 = scmp.lt.s32.totalorder %s2206, 15
      %s2210 = scalar_select %p2209, %s2206, 15
      %s2211 = smul.addr %s2210, 2
      %s2212 = smul.addr %s2208, 32
      %s2213 = sadd.s32 %s2211, %s2212
      %s2214 = smul.addr %s2213, 8
      %s2215 = scalar_lea.vmem %s6, %s2214
      %p2216 = scmp.lt.s32.totalorder %s23, 1
      %s2217 = scalar_select %p2216, %s23, 1
      %p2218 = scmp.lt.s32.totalorder %s24, 0
      %s2219 = scalar_select %p2218, %s24, 0
      %s2220 = sadd.s32 %s2219, %s2217
      %s2221 = smul.addr %s2220, 2
      %s2222 = scalar_lea.vmem %s7, %s2221
      // Predicated region
      $region45: #{double_conv_block.3} parent=43 // pred_check
        %p2223 = pneg %p214
      $region46: #{double_conv_block.3} parent=43 // pred_check_branch
        %2225 = sbr.rel (%p2223) target = $region48
      $region47: #{double_conv_block.3} parent=43 // pred_region
        %s2226 = smul.u32 16, %s24
      $region48: #{double_conv_block.3} parent=43 // pred_fallthru
        _
      // Predicated region
      $region49: #{double_conv_block.3} parent=43 // pred_check
        %p2227 = pneg %p242
      $region50: #{double_conv_block.3} parent=43 // pred_check_branch
        %2229 = sbr.rel (%p2227) target = $region52
      $region51: #{double_conv_block.3} parent=43 // pred_region
        _
      $region52: #{double_conv_block.3} parent=43 // pred_fallthru
        _
    $region44: #{double_conv_block.3} parent=5 // pred_fallthru
      _
    %p2230 = scmp.le.s32.totalorder 2, %s14
    // Predicated region
    $region53: #{double_conv_block.3} parent=5 // pred_check
      %p2231 = pneg %p2230
    $region54: #{double_conv_block.3} parent=5 // pred_check_branch
      %2233 = sbr.rel (%p2231) target = $region56
    $region55: #{double_conv_block.3} parent=5 // pred_region
      %s2234 = ssub.s32 %s14, 2
      // Predicated region
      $region57: #{double_conv_block.3} parent=55 // pred_check
        %p2235 = pneg %p220
      $region58: #{double_conv_block.3} parent=55 // pred_check_branch
        %2237 = sbr.rel (%p2235) target = $region60
      $region59: #{double_conv_block.3} parent=55 // pred_region
        %s2238 = smul.u32 16, %s26
        %p2239 = scmp.lt.s32.totalorder %s25, 1
        %s2240 = scalar_select %p2239, %s25, 1
        %p2241 = scmp.lt.s32.totalorder %s2238, 15
        %s2242 = scalar_select %p2241, %s2238, 15
        %s2243 = smul.addr %s2242, 2
        %s2244 = smul.addr %s2240, 32
        %s2245 = sadd.s32 %s2243, %s2244
        %s2246 = smul.addr %s2245, 8
        %s2247 = scalar_lea.vmem %s6, %s2246
      $region60: #{double_conv_block.3} parent=55 // pred_fallthru
        _
      // Predicated region
      $region61: #{double_conv_block.3} parent=55 // pred_check
        %p2248 = pneg %p248
      $region62: #{double_conv_block.3} parent=55 // pred_check_branch
        %2250 = sbr.rel (%p2248) target = $region64
      $region63: #{double_conv_block.3} parent=55 // pred_region
        %p2251 = scmp.lt.s32.totalorder %s25, 1
        %s2252 = scalar_select %p2251, %s25, 1
        %p2253 = scmp.lt.s32.totalorder %s26, 0
        %s2254 = scalar_select %p2253, %s26, 0
        %s2255 = sadd.s32 %s2254, %s2252
        %s2256 = smul.addr %s2255, 2
        %s2257 = scalar_lea.vmem %s7, %s2256
      $region64: #{double_conv_block.3} parent=55 // pred_fallthru
        _
    $region56: #{double_conv_block.3} parent=5 // pred_fallthru
      _
  $region6: #{double_conv_block.3} parent=0 // loop_footer
    %s18 = sadd.s32 1, %s14
  $region7: #{double_conv_block.3} parent=0 // loop_footer_branch
    %13 = sbr.rel target = $region3
  $region8: #{double_conv_block.3} parent=0 // loop_exit
    _

</llo_original>
